<compile_context>
chip_gen: v6e
topology: v6e:2x2x1
jax: 0.10.0
libtpu: 0.0.40
codegen_flags: <defaults>
</compile_context>

<pallas_src>
import functools

import jax
import jax.numpy as jnp
from jax.experimental import pallas as pl
from jax.experimental.pallas import tpu as pltpu

F32 = jnp.float32
BF16 = jnp.bfloat16
_NEG = -1e30  # finite "-inf": avoids 0*inf / inf-inf NaNs in the online-softmax recurrence


def _round_up(x, m):
    return (x + m - 1) // m * m


def _gelu_tanh(x):
    # TODO(synk): PyTorch nn.GELU() defaults to the exact erf form; erf has no guaranteed
    # Mosaic lowering, so the tanh approximation (EUP tanh) is used (<~3e-3 abs difference).
    c = 0.7978845608028654  # sqrt(2/pi)
    return 0.5 * x * (1.0 + jnp.tanh(c * (x + 0.044715 * (x * x * x))))


# --------------------------------------------------------------------------------------
# Pass 1: edge-only precompute (runs once per edge, independent of node tiles)
#   x = h_E @ [wb1e | wv1] + [bb1 | bv1]      (single fused 2H-wide MXU matmul)
#   pre1e = x[:, :H]                          (Bias layer-1, h_E half, pre-activation)
#   V     = Wv3( gelu( Wv2( gelu(x[:, H:]) ) ) )
# --------------------------------------------------------------------------------------
def edge_precompute_kernel(he_ref, wl1_ref, bl1_ref, wv2_ref, bv2_ref, wv3_ref, bv3_ref,
                           pre1e_ref, v_ref, *, hidden):
    he = he_ref[...]                                                   # [TE, Cin] bf16
    x = jnp.dot(he, wl1_ref[...], preferred_element_type=F32) + bl1_ref[...]   # [TE, 2H]
    pre1e_ref[...] = x[:, :hidden].astype(BF16)
    v1 = _gelu_tanh(x[:, hidden:])
    v2 = _gelu_tanh(jnp.dot(v1.astype(BF16), wv2_ref[...],
                            preferred_element_type=F32) + bv2_ref[...])
    vv = jnp.dot(v2.astype(BF16), wv3_ref[...],
                 preferred_element_type=F32) + bv3_ref[...]
    v_ref[...] = vv.astype(BF16)


def _edge_precompute(he, params, TE, hidden, cin):
    epad = he.shape[0]
    weights = (params["w_l1"], params["b_l1"], params["wv2"], params["bv2"],
               params["wv3"], params["bv3"])
    kernel = functools.partial(edge_precompute_kernel, hidden=hidden)
    return pl.pallas_call(
        kernel,
        out_shape=(jax.ShapeDtypeStruct((epad, hidden), BF16),
                   jax.ShapeDtypeStruct((epad, hidden), BF16)),
        grid_spec=pltpu.PrefetchScalarGridSpec(
            num_scalar_prefetch=0,
            grid=(epad // TE,),
            in_specs=[pl.BlockSpec((TE, cin), lambda i: (i, 0))]
                     + [pl.BlockSpec(w.shape, lambda i: (0, 0)) for w in weights],
            out_specs=[pl.BlockSpec((TE, hidden), lambda i: (i, 0)),
                       pl.BlockSpec((TE, hidden), lambda i: (i, 0))]),
        compiler_params=pltpu.CompilerParams(
            dimension_semantics=("parallel",),
            vmem_limit_bytes=48 * 1024 * 1024),
    )(he, *weights)


# --------------------------------------------------------------------------------------
# Pass 2: gather-dependent Bias layers + online (flash-style) segment softmax + scatter
# Grid: (node tiles "parallel", edge tiles "arbitrary").
# --------------------------------------------------------------------------------------
def neighbor_attention_kernel(
    center_ref, pre1e_ref, v_ref, hvpre_ref,
    wb2_ref, bb2_ref, wb3_ref, bb3_ref, wo_ref,
    out_ref,
    m_scr, l_scr, acc_scr,
    *, num_heads):
    j = pl.program_id(0)                 # node tile  ("parallel")
    k = pl.program_id(1)                 # edge tile  ("arbitrary": online-softmax reduction)
    nk = pl.num_programs(1)

    TN, H = hvpre_ref.shape
    TE = pre1e_ref.shape[0]
    head_dim = H // num_heads
    neg = F32(_NEG)
    inv_sqrt_d = F32(1.0 / (head_dim ** 0.5))

    @pl.when(k == 0)
    def _init():
        m_scr[...] = jnp.full_like(m_scr, neg)
        l_scr[...] = jnp.zeros_like(l_scr)
        acc_scr[...] = jnp.zeros_like(acc_scr)

    # ----- one-hot membership, TRANSPOSED: nodes on sublanes, edges on lanes -----
    ids = center_ref[...]                               # [1, TE] int32; padded edges hold -1
    local_ids = ids - j * TN                            # ids relative to this node tile
    node_iota = jax.lax.broadcasted_iota(jnp.int32, (TN, TE), 0)
    member = node_iota == local_ids                     # [TN, TE]; padded/out-of-tile -> 0 col
    onehot_b = member.astype(BF16)                      # 0/1 exact in bf16 -> MXU gather/scatter

    # ----- Bias MLP (gather-dependent part only) -> per-edge/per-head logits [heads, TE] --
    g = jax.lax.dot_general(onehot_b, hvpre_ref[...],
                            (((0,), (0,)), ((), ())),
                            preferred_element_type=F32)                    # [TE, H]
    b1 = jnp.maximum(g + pre1e_ref[...].astype(F32), 0.0)
    b2 = jnp.maximum(jnp.dot(b1.astype(BF16), wb2_ref[...],
                             preferred_element_type=F32) + bb2_ref[...], 0.0)
    logits_t = jax.lax.dot_general(wb3_ref[...], b2.astype(BF16),
                                   (((1,), (1,)), ((), ())),
                                   preferred_element_type=F32)             # [heads, TE]
    logits_t = (logits_t + bb3_ref[...]) * inv_sqrt_d

    # ----- online segment softmax with relaxed per-head tile-max shift -----
    # Exact recurrence (beta rescale compensates the node-independent shift); no
    # [heads,TN,TE] tensor, no per-edge max gather; exp args always <= 0.
    m_tile = jnp.max(logits_t, axis=1, keepdims=True)                      # [heads, 1]
    m_old = m_scr[...]
    m_new = jnp.maximum(m_old, m_tile)                                     # [heads, TN]
    alpha_b = jnp.exp(m_old - m_new).astype(BF16)                          # rescale old stats
    beta_b = jnp.exp(m_tile - m_new).astype(BF16)                          # rescale new tile
    p_b = jnp.exp(logits_t - m_tile).astype(BF16)                          # [heads, TE], <= 1

    # head selector (exact 0/1 in bf16) to expand [heads, *] -> [*, H]
    sel_r = jax.lax.broadcasted_iota(jnp.int32, (num_heads, H), 0)
    sel_c = jax.lax.broadcasted_iota(jnp.int32, (num_heads, H), 1)
    sel_b = (sel_r == sel_c // head_dim).astype(BF16)                      # [heads, H]

    p_full = jax.lax.dot_general(p_b, sel_b, (((0,), (0,)), ((), ())),
                                 preferred_element_type=F32)               # [TE, H]
    weighted = (p_full * v_ref[...].astype(F32)).astype(BF16)              # [TE, H]

    # scatter exp-weighted values + denominators to nodes (normalise once at finalize)
    acc_tile = jnp.dot(onehot_b, weighted, preferred_element_type=F32)     # [TN, H]
    l_tile = jax.lax.dot_general(p_b, onehot_b, (((1,), (1,)), ((), ())),
                                 preferred_element_type=F32)               # [heads, TN]

    alpha_full = jax.lax.dot_general(alpha_b, sel_b, (((0,), (0,)), ((), ())),
                                     preferred_element_type=F32)           # [TN, H]
    beta_full = jax.lax.dot_general(beta_b, sel_b, (((0,), (0,)), ((), ())),
                                    preferred_element_type=F32)            # [TN, H]

    l_scr[...] = alpha_b.astype(F32) * l_scr[...] + beta_b.astype(F32) * l_tile
    acc_scr[...] = alpha_full * acc_scr[...] + beta_full * acc_tile
    m_scr[...] = m_new

    # ----- finalize: per-node normalisation + output projection -----
    @pl.when(k == nk - 1)
    def _finalize():
        l = l_scr[...]                                                     # [heads, TN]
        inv = pl.reciprocal(jnp.where(l > 0.0, l, 1.0), approx=True)       # isolated node -> 0
        inv_full = jax.lax.dot_general(inv.astype(BF16), sel_b,
                                       (((0,), (0,)), ((), ())),
                                       preferred_element_type=F32)         # [TN, H]
        agg = acc_scr[...] * inv_full
        out_ref[...] = jnp.dot(agg.astype(BF16), wo_ref[...],
                               preferred_element_type=F32)


def prepare_params(W1, b1, W2, b2, W3, b3, Wv1, bv1, Wv2, bv2, Wv3, bv3, Wo,
                   num_heads=4, output_mlp=True):
    """One-time weight prep (PyTorch [out,in] -> kernel [in,out], bf16 cast, layer-1 fusion),
    hoisted out of the per-call forward path."""
    H = W1.shape[0]
    wo = Wo.T if output_mlp else jnp.eye(H, dtype=F32)
    # Fused edge layer-1: [Cin, 2H] = [ Bias layer-1 (h_E half) | W_V layer-1 ]
    w_l1 = jnp.concatenate([jnp.asarray(W1[:, H:].T, BF16),
                            jnp.asarray(Wv1.T, BF16)], axis=1)
    b_l1 = jnp.concatenate([jnp.asarray(b1, F32),
                            jnp.asarray(bv1, F32)]).reshape(1, -1)
    return dict(
        wb1v=jnp.asarray(W1[:, :H].T, BF16),       # h_V[center] half of Bias layer 1
        w_l1=w_l1,
        b_l1=b_l1,
        wb2=jnp.asarray(W2.T, BF16),
        bb2=jnp.asarray(b2, F32).reshape(1, -1),
        wb3=jnp.asarray(W3, BF16),                 # kept [heads, H]; kernel contracts dim 1
        bb3=jnp.asarray(b3, F32).reshape(num_heads, 1),
        wv2=jnp.asarray(Wv2.T, BF16),
        bv2=jnp.asarray(bv2, F32).reshape(1, -1),
        wv3=jnp.asarray(Wv3.T, BF16),
        bv3=jnp.asarray(bv3, F32).reshape(1, -1),
        wo=jnp.asarray(wo, BF16),
    )


def neighbor_attention_forward(h_V, h_E, center_id, batch_id, dst_idx, params,
                               num_heads=4, edge_tile=512):
    # batch_id / dst_idx (and edge_drop) are unused by the module's forward().
    del batch_id, dst_idx
    N, H = h_V.shape
    E, Cin = h_E.shape

    # Edge tile: lane-dense, default 512 (amortizes per-grid-step overhead and fills MXU M).
    TE = min(edge_tile, _round_up(max(E, 1), 128))
    # Node tile: keep >=2 node tiles for small N so v7x's second TensorCore gets work.
    if N <= 256:
        TN = max(8, _round_up(-(-N // 2), 8))
    else:
        TN = 128
    Npad = _round_up(N, TN)
    Epad = _round_up(max(E, 1), TE)

    hv = jnp.pad(h_V.astype(BF16), ((0, Npad - N), (0, 0)))
    he = jnp.pad(h_E.astype(BF16), ((0, Epad - E), (0, 0)))
    center = jnp.pad(center_id.astype(jnp.int32), (0, Epad - E),
                     constant_values=-1).reshape(1, Epad)  # -1 => padded edge (zero onehot col)

    p = params

    # Pass 1: edge-only MLP work, once per edge (not per node tile).
    pre1e, vvals = _edge_precompute(he, p, TE, H, Cin)

    # Node-side half of Bias layer 1 (N rows only; tiny plain-XLA matmul).
    hvpre = jnp.dot(hv, p["wb1v"], preferred_element_type=F32).astype(BF16)

    weights = (p["wb2"], p["bb2"], p["wb3"], p["bb3"], p["wo"])
    grid = (Npad // TN, Epad // TE)
    in_specs = [
        pl.BlockSpec((1, TE), lambda j, k: (0, k)),      # center ids      (edge tile)
        pl.BlockSpec((TE, H), lambda j, k: (k, 0)),      # pre1e           (edge tile)
        pl.BlockSpec((TE, H), lambda j, k: (k, 0)),      # V = W_V(h_E)    (edge tile)
        pl.BlockSpec((TN, H), lambda j, k: (j, 0)),      # hvpre           (node tile, resident)
    ] + [pl.BlockSpec(w.shape, lambda j, k: (0, 0)) for w in weights]

    kernel = functools.partial(neighbor_attention_kernel, num_heads=num_heads)

    out = pl.pallas_call(
        kernel,
        out_shape=jax.ShapeDtypeStruct((Npad, H), F32),
        grid_spec=pltpu.PrefetchScalarGridSpec(
            num_scalar_prefetch=0,
            grid=grid,
            in_specs=in_specs,
            out_specs=pl.BlockSpec((TN, H), lambda j, k: (j, 0)),
            scratch_shapes=[
                pltpu.VMEM((num_heads, TN), F32),    # running segment max
                pltpu.VMEM((num_heads, TN), F32),    # running softmax denominator
                pltpu.VMEM((TN, H), F32),            # running exp-weighted value accumulator
            ]),
        compiler_params=pltpu.CompilerParams(
            dimension_semantics=("parallel", "arbitrary"),  # node tiles split across TCs (v7x)
            vmem_limit_bytes=48 * 1024 * 1024),
    )(center, pre1e, vvals, hvpre, *weights)

    return out[:N]


def neighbor_attention_reference(h_V, h_E, center_id, bias_mlp, wv_mlp, Wo, num_heads=4):
    """Pure-JAX/f32 mirror of the PyTorch forward (exact erf GELU, exact segment softmax)."""
    W1, b1, W2, b2, W3, b3 = bias_mlp
    Wv1, bv1, Wv2, bv2, Wv3, bv3 = wv_mlp
    N, H = h_V.shape
    E = h_E.shape[0]
    d = H // num_heads
    x = jnp.concatenate([h_V[center_id], h_E], axis=-1)
    x = jax.nn.relu(x @ W1.T + b1)
    x = jax.nn.relu(x @ W2.T + b2)
    logits = (x @ W3.T + b3) / jnp.sqrt(jnp.float32(d))                 # [E, heads]
    v = jax.nn.gelu(h_E @ Wv1.T + bv1, approximate=False)
    v = jax.nn.gelu(v @ Wv2.T + bv2, approximate=False)
    v = (v @ Wv3.T + bv3).reshape(E, num_heads, d)
    seg_max = jax.ops.segment_max(logits, center_id, num_segments=N)
    exp_l = jnp.exp(logits - seg_max[center_id])
    denom = jax.ops.segment_sum(exp_l, center_id, num_segments=N)
    attend = exp_l / denom[center_id]
    agg = jax.ops.segment_sum(attend[:, :, None] * v, center_id,
                              num_segments=N).reshape(N, H)
    return agg @ Wo.T


if __name__ == "__main__":
    key = jax.random.PRNGKey(0)
    num_hidden, num_heads = 128, 4
    num_in = 2 * num_hidden       # Bias MLP consumes cat([h_V[center], h_E]) = 3*num_hidden
    N, E = 64, 512                # nodes, edges

    ks = jax.random.split(key, 16)
    h_V = jax.random.normal(ks[0], (N, num_hidden), F32)
    h_E = jax.random.normal(ks[1], (E, num_in), F32)
    center_id = jax.random.randint(ks[2], (E,), 0, N, dtype=jnp.int32)
    batch_id = jnp.zeros((N,), jnp.int32)        # unused by forward()
    dst_idx = jnp.arange(E, dtype=jnp.int32)     # unused by forward()

    def _w(k, o, i):   # nn.Linear weight convention: [out_features, in_features]
        return 0.1 * jax.random.normal(k, (o, i), F32)

    def _b(k, o):
        return 0.1 * jax.random.normal(k, (o,), F32)

    H, C = num_hidden, num_in
    W1, b1 = _w(ks[3], H, 3 * H), _b(ks[4], H)             # Bias MLP
    W2, b2 = _w(ks[5], H, H), _b(ks[6], H)
    W3, b3 = _w(ks[7], num_heads, H), _b(ks[8], num_heads)
    Wv1, bv1 = _w(ks[9], H, C), _b(ks[10], H)              # W_V MLP
    Wv2, bv2 = _w(ks[11], H, H), _b(ks[12], H)
    Wv3, bv3 = _w(ks[13], H, H), _b(ks[14], H)
    Wo = _w(ks[15], H, H)                                  # W_O (bias=False)

    params = prepare_params(W1, b1, W2, b2, W3, b3,
                            Wv1, bv1, Wv2, bv2, Wv3, bv3, Wo, num_heads=num_heads)

    out = neighbor_attention_forward(h_V, h_E, center_id, batch_id, dst_idx,
                                     params, num_heads=num_heads)
    out = jax.block_until_ready(out)

    ref = neighbor_attention_reference(h_V, h_E, center_id,
                                       (W1, b1, W2, b2, W3, b3),
                                       (Wv1, bv1, Wv2, bv2, Wv3, bv3),
                                       Wo, num_heads=num_heads)

    assert out.shape == (N, num_hidden)
    assert bool(jnp.isfinite(out).all()), "non-finite values in kernel output"
    rel_err = float(jnp.linalg.norm(out - ref) / jnp.linalg.norm(ref))
    # bf16 gather/scatter, bf16 edge-stream intermediates (f32 accumulation), approx
    # reciprocal and the tanh-GELU give ~1-2e-2 relative deviation vs the exact-f32 ref.
    assert rel_err < 3e-2, f"mismatch vs reference: rel_err={rel_err}"
    print("KERNEL_OK")
</pallas_src>

<mosaic_0001>
module attributes {stable_mosaic.version = 11 : i64} {
  func.func @edge_precompute_kernel(%arg0: i32, %arg1: memref<512x256xbf16, #tpu.memory_space<vmem>>, %arg2: memref<256x256xbf16, #tpu.memory_space<vmem>>, %arg3: memref<1x256xf32, #tpu.memory_space<vmem>>, %arg4: memref<128x128xbf16, #tpu.memory_space<vmem>>, %arg5: memref<1x128xf32, #tpu.memory_space<vmem>>, %arg6: memref<128x128xbf16, #tpu.memory_space<vmem>>, %arg7: memref<1x128xf32, #tpu.memory_space<vmem>>, %arg8: memref<512x128xbf16, #tpu.memory_space<vmem>>, %arg9: memref<512x128xbf16, #tpu.memory_space<vmem>>) attributes {dimension_semantics = [#tpu.dimension_semantics<parallel>], iteration_bounds = array<i64: 1>, scalar_prefetch = 0 : i64, scratch_operands = 0 : i64, tpu.core_type = #tpu.core_type<tc>, window_params = [{transform_indices = @transform_0, window_bounds = array<i64: 512, 256>}, {pipeline_mode = #tpu.pipeline_mode<synchronous>, transform_indices = @transform_1, window_bounds = array<i64: 256, 256>}, {pipeline_mode = #tpu.pipeline_mode<synchronous>, transform_indices = @transform_2, window_bounds = array<i64: 1, 256>}, {pipeline_mode = #tpu.pipeline_mode<synchronous>, transform_indices = @transform_3, window_bounds = array<i64: 128, 128>}, {pipeline_mode = #tpu.pipeline_mode<synchronous>, transform_indices = @transform_4, window_bounds = array<i64: 1, 128>}, {pipeline_mode = #tpu.pipeline_mode<synchronous>, transform_indices = @transform_5, window_bounds = array<i64: 128, 128>}, {pipeline_mode = #tpu.pipeline_mode<synchronous>, transform_indices = @transform_6, window_bounds = array<i64: 1, 128>}, {transform_indices = @transform_7, window_bounds = array<i64: 512, 128>}, {transform_indices = @transform_8, window_bounds = array<i64: 512, 128>}]} {
    %c0 = arith.constant 0 : index
    %c0_0 = arith.constant 0 : index
    %0 = vector.load %arg1[%c0, %c0_0] : memref<512x256xbf16, #tpu.memory_space<vmem>>, vector<512x256xbf16>
    %c0_1 = arith.constant 0 : index
    %c0_2 = arith.constant 0 : index
    %1 = vector.load %arg2[%c0_1, %c0_2] : memref<256x256xbf16, #tpu.memory_space<vmem>>, vector<256x256xbf16>
    %cst = arith.constant dense<0.000000e+00> : vector<512x256xf32>
    %2 = tpu.matmul %0, %1, %cst {dimension_numbers = #tpu.dot_dimension_numbers<[1], [0], [0], [1], [0, 0, 1, 1], [], []>} : vector<512x256xbf16>, vector<256x256xbf16>, vector<512x256xf32> -> vector<512x256xf32>
    %c0_3 = arith.constant 0 : index
    %c0_4 = arith.constant 0 : index
    %3 = vector.load %arg3[%c0_3, %c0_4] : memref<1x256xf32, #tpu.memory_space<vmem>>, vector<1x256xf32>
    %4 = vector.broadcast %3 : vector<1x256xf32> to vector<512x256xf32>
    %5 = arith.addf %2, %4 : vector<512x256xf32>
    %6 = vector.extract_strided_slice %5 {offsets = [0, 0], sizes = [512, 128], strides = [1, 1]} : vector<512x256xf32> to vector<512x128xf32>
    %7 = arith.truncf %6 : vector<512x128xf32> to vector<512x128xbf16>
    %c0_5 = arith.constant 0 : index
    %c0_6 = arith.constant 0 : index
    %8 = vector.load %arg8[%c0_5, %c0_6] : memref<512x128xbf16, #tpu.memory_space<vmem>>, vector<512x128xbf16>
    tpu.vector_store %arg8[%c0_5, %c0_6], %7 {strides = array<i32>} : memref<512x128xbf16, #tpu.memory_space<vmem>>, vector<512x128xbf16>,
    %9 = vector.extract_strided_slice %5 {offsets = [0, 128], sizes = [512, 128], strides = [1, 1]} : vector<512x256xf32> to vector<512x128xf32>
    %cst_7 = arith.constant 5.000000e-01 : f32
    %10 = vector.broadcast %cst_7 : f32 to vector<512x128xf32>
    %11 = arith.mulf %10, %9 : vector<512x128xf32>
    %12 = arith.mulf %9, %9 : vector<512x128xf32>
    %13 = arith.mulf %12, %9 : vector<512x128xf32>
    %cst_8 = arith.constant 4.471500e-02 : f32
    %14 = vector.broadcast %cst_8 : f32 to vector<512x128xf32>
    %15 = arith.mulf %14, %13 : vector<512x128xf32>
    %16 = arith.addf %9, %15 : vector<512x128xf32>
    %cst_9 = arith.constant 0.797884583 : f32
    %17 = vector.broadcast %cst_9 : f32 to vector<512x128xf32>
    %18 = arith.mulf %17, %16 : vector<512x128xf32>
    %19 = math.tanh %18 : vector<512x128xf32>
    %cst_10 = arith.constant 1.000000e+00 : f32
    %20 = vector.broadcast %cst_10 : f32 to vector<512x128xf32>
    %21 = arith.addf %20, %19 : vector<512x128xf32>
    %22 = arith.mulf %11, %21 : vector<512x128xf32>
    %23 = arith.truncf %22 : vector<512x128xf32> to vector<512x128xbf16>
    %c0_11 = arith.constant 0 : index
    %c0_12 = arith.constant 0 : index
    %24 = vector.load %arg4[%c0_11, %c0_12] : memref<128x128xbf16, #tpu.memory_space<vmem>>, vector<128x128xbf16>
    %cst_13 = arith.constant dense<0.000000e+00> : vector<512x128xf32>
    %25 = tpu.matmul %23, %24, %cst_13 {dimension_numbers = #tpu.dot_dimension_numbers<[1], [0], [0], [1], [0, 0, 1, 1], [], []>} : vector<512x128xbf16>, vector<128x128xbf16>, vector<512x128xf32> -> vector<512x128xf32>
    %c0_14 = arith.constant 0 : index
    %c0_15 = arith.constant 0 : index
    %26 = vector.load %arg5[%c0_14, %c0_15] : memref<1x128xf32, #tpu.memory_space<vmem>>, vector<1x128xf32>
    %27 = vector.broadcast %26 : vector<1x128xf32> to vector<512x128xf32>
    %28 = arith.addf %25, %27 : vector<512x128xf32>
    %cst_16 = arith.constant 5.000000e-01 : f32
    %29 = vector.broadcast %cst_16 : f32 to vector<512x128xf32>
    %30 = arith.mulf %29, %28 : vector<512x128xf32>
    %31 = arith.mulf %28, %28 : vector<512x128xf32>
    %32 = arith.mulf %31, %28 : vector<512x128xf32>
    %cst_17 = arith.constant 4.471500e-02 : f32
    %33 = vector.broadcast %cst_17 : f32 to vector<512x128xf32>
    %34 = arith.mulf %33, %32 : vector<512x128xf32>
    %35 = arith.addf %28, %34 : vector<512x128xf32>
    %cst_18 = arith.constant 0.797884583 : f32
    %36 = vector.broadcast %cst_18 : f32 to vector<512x128xf32>
    %37 = arith.mulf %36, %35 : vector<512x128xf32>
    %38 = math.tanh %37 : vector<512x128xf32>
    %cst_19 = arith.constant 1.000000e+00 : f32
    %39 = vector.broadcast %cst_19 : f32 to vector<512x128xf32>
    %40 = arith.addf %39, %38 : vector<512x128xf32>
    %41 = arith.mulf %30, %40 : vector<512x128xf32>
    %42 = arith.truncf %41 : vector<512x128xf32> to vector<512x128xbf16>
    %c0_20 = arith.constant 0 : index
    %c0_21 = arith.constant 0 : index
    %43 = vector.load %arg6[%c0_20, %c0_21] : memref<128x128xbf16, #tpu.memory_space<vmem>>, vector<128x128xbf16>
    %cst_22 = arith.constant dense<0.000000e+00> : vector<512x128xf32>
    %44 = tpu.matmul %42, %43, %cst_22 {dimension_numbers = #tpu.dot_dimension_numbers<[1], [0], [0], [1], [0, 0, 1, 1], [], []>} : vector<512x128xbf16>, vector<128x128xbf16>, vector<512x128xf32> -> vector<512x128xf32>
    %c0_23 = arith.constant 0 : index
    %c0_24 = arith.constant 0 : index
    %45 = vector.load %arg7[%c0_23, %c0_24] : memref<1x128xf32, #tpu.memory_space<vmem>>, vector<1x128xf32>
    %46 = vector.broadcast %45 : vector<1x128xf32> to vector<512x128xf32>
    %47 = arith.addf %44, %46 : vector<512x128xf32>
    %48 = arith.truncf %47 : vector<512x128xf32> to vector<512x128xbf16>
    %c0_25 = arith.constant 0 : index
    %c0_26 = arith.constant 0 : index
    %49 = vector.load %arg9[%c0_25, %c0_26] : memref<512x128xbf16, #tpu.memory_space<vmem>>, vector<512x128xbf16>
    tpu.vector_store %arg9[%c0_25, %c0_26], %48 {strides = array<i32>} : memref<512x128xbf16, #tpu.memory_space<vmem>>, vector<512x128xbf16>,
    return
  }
  func.func @transform_0(%arg0: i32) -> (i32, i32) {
    %c0_i32 = arith.constant 0 : i32
    %c0_i32_0 = arith.constant 0 : i32
    return %arg0, %c0_i32 : i32, i32
  }
  func.func @transform_1(%arg0: i32) -> (i32, i32) {
    %c0_i32 = arith.constant 0 : i32
    %c0_i32_0 = arith.constant 0 : i32
    %c0_i32_1 = arith.constant 0 : i32
    return %c0_i32, %c0_i32_0 : i32, i32
  }
  func.func @transform_2(%arg0: i32) -> (i32, i32) {
    %c0_i32 = arith.constant 0 : i32
    %c0_i32_0 = arith.constant 0 : i32
    %c0_i32_1 = arith.constant 0 : i32
    return %c0_i32, %c0_i32_0 : i32, i32
  }
  func.func @transform_3(%arg0: i32) -> (i32, i32) {
    %c0_i32 = arith.constant 0 : i32
    %c0_i32_0 = arith.constant 0 : i32
    %c0_i32_1 = arith.constant 0 : i32
    return %c0_i32, %c0_i32_0 : i32, i32
  }
  func.func @transform_4(%arg0: i32) -> (i32, i32) {
    %c0_i32 = arith.constant 0 : i32
    %c0_i32_0 = arith.constant 0 : i32
    %c0_i32_1 = arith.constant 0 : i32
    return %c0_i32, %c0_i32_0 : i32, i32
  }
  func.func @transform_5(%arg0: i32) -> (i32, i32) {
    %c0_i32 = arith.constant 0 : i32
    %c0_i32_0 = arith.constant 0 : i32
    %c0_i32_1 = arith.constant 0 : i32
    return %c0_i32, %c0_i32_0 : i32, i32
  }
  func.func @transform_6(%arg0: i32) -> (i32, i32) {
    %c0_i32 = arith.constant 0 : i32
    %c0_i32_0 = arith.constant 0 : i32
    %c0_i32_1 = arith.constant 0 : i32
    return %c0_i32, %c0_i32_0 : i32, i32
  }
  func.func @transform_7(%arg0: i32) -> (i32, i32) {
    %c0_i32 = arith.constant 0 : i32
    %c0_i32_0 = arith.constant 0 : i32
    return %arg0, %c0_i32 : i32, i32
  }
  func.func @transform_8(%arg0: i32) -> (i32, i32) {
    %c0_i32 = arith.constant 0 : i32
    %c0_i32_0 = arith.constant 0 : i32
    return %arg0, %c0_i32 : i32, i32
  }
}

</mosaic_0001>

<llo_original>
// kernel: tpu_custom_call.1
$region0: #{tpu_custom_call.1}
  #allocation0 [shape = 'u32[]', space=smem, size = 0x4, offset = 0x4, fixed_abs, tag = 'smem constant byte address 0x4 - core index']
  #allocation1 [shape = 'u32[144,128]{1,0:T(1,128)}', space=vmem, size = 0x12000, scoped, tag = 'internal scratch']
  %s0 = inlined_call_operand.hbm [shape: bf16[512,256], index: 0, kind: input, shape index: {}]
  %s1 = inlined_call_operand.hbm [shape: bf16[256,256], index: 1, kind: input, shape index: {}]
  %s2 = inlined_call_operand.vmem [shape: f32[1,256], index: 2, kind: input, shape index: {}]
  %s3 = inlined_call_operand.hbm [shape: bf16[128,128], index: 3, kind: input, shape index: {}]
  %s4 = inlined_call_operand.vmem [shape: f32[1,128], index: 4, kind: input, shape index: {}]
  %s5 = inlined_call_operand.hbm [shape: bf16[128,128], index: 5, kind: input, shape index: {}]
  %s6 = inlined_call_operand.vmem [shape: f32[1,128], index: 6, kind: input, shape index: {}]
  %s7 = inlined_call_operand.hbm [shape: bf16[512,128], index: 7, kind: output, shape index: {0}]
  %s8 = inlined_call_operand.hbm [shape: bf16[512,128], index: 8, kind: output, shape index: {1}]
  %9 = xla_tuple %s7, %s8
  %s10 = sld [smem:[#allocation0]]
  $region62: #{tpu_custom_call.1} parent=0
    _
  %s12 = ssub.s32 1, %s10
  %s13 = scalar_select 0, %s12, %s10
  $region1: #{tpu_custom_call.1} parent=0
    #allocation2 [shape = 'u8[262144]{0}', space=vmem, size = 0x40000, scoped, tag = 'input window, operand 0, single buffered']
    #allocation3 [shape = 's32[1]{0}', space=sflag, size = 0x4, scoped, tag = 'scoped memory for tpu_custom_call.1']
    #allocation4 [shape = 's32[1]{0}', space=sflag, size = 0x4, scoped, tag = 'scoped memory for tpu_custom_call.1']
    #allocation5 [shape = 'u8[131072]{0}', space=vmem, size = 0x20000, scoped, tag = 'input window, operand 1, single buffered']
    #allocation6 [shape = 's32[1]{0}', space=sflag, size = 0x4, scoped, tag = 'scoped memory for tpu_custom_call.1']
    #allocation7 [shape = 'u8[32768]{0}', space=vmem, size = 0x8000, scoped, tag = 'input window, operand 3, single buffered']
    #allocation8 [shape = 'u8[32768]{0}', space=vmem, size = 0x8000, scoped, tag = 'input window, operand 5, single buffered']
    #allocation9 [shape = 's32[1]{0}', space=sflag, size = 0x4, scoped, tag = 'scoped memory for tpu_custom_call.1']
    #allocation10 [shape = 'u8[131072]{0}', space=vmem, size = 0x20000, scoped, tag = 'output window, operand 0, single buffered']
    #allocation11 [shape = 'u8[131072]{0}', space=vmem, size = 0x20000, scoped, tag = 'output window, operand 1, single buffered']
    #allocation12 [shape = 's32[1]{0}', space=sflag, size = 0x4, scoped, tag = 'scoped memory for tpu_custom_call.1']
    %14 = vsyncpa [#allocation3], 0
    %15 = vsyncpa [#allocation6], 0
    %16 = vsyncpa [#allocation9], 0
    %17 = vsyncpa [#allocation4], 0
    %18 = vsyncpa [#allocation12], 0
    // Predicated region
    $region2: #{tpu_custom_call.1} parent=1 // pred_check
      _
    $region3: #{tpu_custom_call.1} parent=1 // pred_check_branch
      %20 = sbr.rel (0) target = $region5
    $region4: #{tpu_custom_call.1} parent=1 // pred_region
      %s22 = ssub.s32 8192, 8192
      %23 = vsyncadd [#allocation3], %s22
      %s24 = sshll.u32 [#allocation2], 4
      %s25 = int_to_ptr.vmem [resolvable:$true] %s24
      %30 = dma.hbm_to_vmem [thread:$0]  %s0, 8192, %s25, [#allocation3], 128, 128, 8
    $region5: #{tpu_custom_call.1} parent=1 // pred_fallthru
      _
    // Predicated region
    $region6: #{tpu_custom_call.1} parent=1 // pred_check
      _
    $region7: #{tpu_custom_call.1} parent=1 // pred_check_branch
      %32 = sbr.rel (0) target = $region9
    $region8: #{tpu_custom_call.1} parent=1 // pred_region
      %s34 = ssub.s32 4096, 4096
      %35 = vsyncadd [#allocation6], %s34
      %s36 = sshll.u32 [#allocation5], 4
      %s37 = int_to_ptr.vmem [resolvable:$true] %s36
      %42 = dma.hbm_to_vmem [thread:$0]  %s1, 4096, %s37, [#allocation6], 128, 128, 8
    $region9: #{tpu_custom_call.1} parent=1 // pred_fallthru
      _
    // Predicated region
    $region10: #{tpu_custom_call.1} parent=1 // pred_check
      _
    $region11: #{tpu_custom_call.1} parent=1 // pred_check_branch
      %44 = sbr.rel (0) target = $region13
    $region12: #{tpu_custom_call.1} parent=1 // pred_region
      _
    $region13: #{tpu_custom_call.1} parent=1 // pred_fallthru
      _
    // Predicated region
    $region14: #{tpu_custom_call.1} parent=1 // pred_check
      _
    $region15: #{tpu_custom_call.1} parent=1 // pred_check_branch
      %46 = sbr.rel (0) target = $region17
    $region16: #{tpu_custom_call.1} parent=1 // pred_region
      %s48 = ssub.s32 1024, 1024
      %49 = vsyncadd [#allocation6], %s48
      %s50 = sshll.u32 [#allocation7], 4
      %s51 = int_to_ptr.vmem [resolvable:$true] %s50
      %56 = dma.hbm_to_vmem [thread:$0]  %s3, 1024, %s51, [#allocation6], 64, 64, 4
    $region17: #{tpu_custom_call.1} parent=1 // pred_fallthru
      _
    // Predicated region
    $region18: #{tpu_custom_call.1} parent=1 // pred_check
      _
    $region19: #{tpu_custom_call.1} parent=1 // pred_check_branch
      %58 = sbr.rel (0) target = $region21
    $region20: #{tpu_custom_call.1} parent=1 // pred_region
      _
    $region21: #{tpu_custom_call.1} parent=1 // pred_fallthru
      _
    // Predicated region
    $region22: #{tpu_custom_call.1} parent=1 // pred_check
      _
    $region23: #{tpu_custom_call.1} parent=1 // pred_check_branch
      %60 = sbr.rel (0) target = $region25
    $region24: #{tpu_custom_call.1} parent=1 // pred_region
      %s62 = ssub.s32 1024, 1024
      %63 = vsyncadd [#allocation9], %s62
      %s64 = sshll.u32 [#allocation8], 4
      %s65 = int_to_ptr.vmem [resolvable:$true] %s64
      %70 = dma.hbm_to_vmem [thread:$0]  %s5, 1024, %s65, [#allocation9], 64, 64, 4
    $region25: #{tpu_custom_call.1} parent=1 // pred_fallthru
      _
    // Predicated region
    $region26: #{tpu_custom_call.1} parent=1 // pred_check
      _
    $region27: #{tpu_custom_call.1} parent=1 // pred_check_branch
      %72 = sbr.rel (0) target = $region29
    $region28: #{tpu_custom_call.1} parent=1 // pred_region
      _
    $region29: #{tpu_custom_call.1} parent=1 // pred_fallthru
      _
    // Predicated region
    $region30: #{tpu_custom_call.1} parent=1 // pred_check
      _
    $region31: #{tpu_custom_call.1} parent=1 // pred_check_branch
      %74 = sbr.rel (0) target = $region33
    $region32: #{tpu_custom_call.1} parent=1 // pred_region
      %75 = dma.done [#allocation3], 8192
    $region33: #{tpu_custom_call.1} parent=1 // pred_fallthru
      _
    // Predicated region
    $region34: #{tpu_custom_call.1} parent=1 // pred_check
      _
    $region35: #{tpu_custom_call.1} parent=1 // pred_check_branch
      %77 = sbr.rel (0) target = $region37
    $region36: #{tpu_custom_call.1} parent=1 // pred_region
      %78 = dma.done [#allocation6], 4096
    $region37: #{tpu_custom_call.1} parent=1 // pred_fallthru
      _
    // Predicated region
    $region38: #{tpu_custom_call.1} parent=1 // pred_check
      _
    $region39: #{tpu_custom_call.1} parent=1 // pred_check_branch
      %80 = sbr.rel (0) target = $region41
    $region40: #{tpu_custom_call.1} parent=1 // pred_region
      %81 = dma.done [#allocation6], 1024
    $region41: #{tpu_custom_call.1} parent=1 // pred_fallthru
      _
    // Predicated region
    $region42: #{tpu_custom_call.1} parent=1 // pred_check
      _
    $region43: #{tpu_custom_call.1} parent=1 // pred_check_branch
      %83 = sbr.rel (0) target = $region45
    $region44: #{tpu_custom_call.1} parent=1 // pred_region
      %84 = dma.done [#allocation9], 1024
    $region45: #{tpu_custom_call.1} parent=1 // pred_fallthru
      _
    %v86 = vld [vmem:[#allocation2] sm:$0xff]
    %v87 = vld [vmem:[#allocation2 + $0x8] sm:$0xff]
    %v88 = vld [vmem:[#allocation2 + $0x10] sm:$0xff]
    %v89 = vld [vmem:[#allocation2 + $0x18] sm:$0xff]
    %v90 = vld [vmem:[#allocation2 + $0x20] sm:$0xff]
    %v91 = vld [vmem:[#allocation2 + $0x28] sm:$0xff]
    %v92 = vld [vmem:[#allocation2 + $0x30] sm:$0xff]
    %v93 = vld [vmem:[#allocation2 + $0x38] sm:$0xff]
    %v94 = vld [vmem:[#allocation2 + $0x40] sm:$0xff]
    %v95 = vld [vmem:[#allocation2 + $0x48] sm:$0xff]
    %v96 = vld [vmem:[#allocation2 + $0x50] sm:$0xff]
    %v97 = vld [vmem:[#allocation2 + $0x58] sm:$0xff]
    %v98 = vld [vmem:[#allocation2 + $0x60] sm:$0xff]
    %v99 = vld [vmem:[#allocation2 + $0x68] sm:$0xff]
    %v100 = vld [vmem:[#allocation2 + $0x70] sm:$0xff]
    %v101 = vld [vmem:[#allocation2 + $0x78] sm:$0xff]
    %v102 = vld [vmem:[#allocation2 + $0x80] sm:$0xff]
    %v103 = vld [vmem:[#allocation2 + $0x88] sm:$0xff]
    %v104 = vld [vmem:[#allocation2 + $0x90] sm:$0xff]
    %v105 = vld [vmem:[#allocation2 + $0x98] sm:$0xff]
    %v106 = vld [vmem:[#allocation2 + $0xa0] sm:$0xff]
    %v107 = vld [vmem:[#allocation2 + $0xa8] sm:$0xff]
    %v108 = vld [vmem:[#allocation2 + $0xb0] sm:$0xff]
    %v109 = vld [vmem:[#allocation2 + $0xb8] sm:$0xff]
    %v110 = vld [vmem:[#allocation2 + $0xc0] sm:$0xff]
    %v111 = vld [vmem:[#allocation2 + $0xc8] sm:$0xff]
    %v112 = vld [vmem:[#allocation2 + $0xd0] sm:$0xff]
    %v113 = vld [vmem:[#allocation2 + $0xd8] sm:$0xff]
    %v114 = vld [vmem:[#allocation2 + $0xe0] sm:$0xff]
    %v115 = vld [vmem:[#allocation2 + $0xe8] sm:$0xff]
    %v116 = vld [vmem:[#allocation2 + $0xf0] sm:$0xff]
    %v117 = vld [vmem:[#allocation2 + $0xf8] sm:$0xff]
    %v118 = vld [vmem:[#allocation2 + $0x100] sm:$0xff]
    %v119 = vld [vmem:[#allocation2 + $0x108] sm:$0xff]
    %v120 = vld [vmem:[#allocation2 + $0x110] sm:$0xff]
    %v121 = vld [vmem:[#allocation2 + $0x118] sm:$0xff]
    %v122 = vld [vmem:[#allocation2 + $0x120] sm:$0xff]
    %v123 = vld [vmem:[#allocation2 + $0x128] sm:$0xff]
    %v124 = vld [vmem:[#allocation2 + $0x130] sm:$0xff]
    %v125 = vld [vmem:[#allocation2 + $0x138] sm:$0xff]
    %v126 = vld [vmem:[#allocation2 + $0x140] sm:$0xff]
    %v127 = vld [vmem:[#allocation2 + $0x148] sm:$0xff]
    %v128 = vld [vmem:[#allocation2 + $0x150] sm:$0xff]
    %v129 = vld [vmem:[#allocation2 + $0x158] sm:$0xff]
    %v130 = vld [vmem:[#allocation2 + $0x160] sm:$0xff]
    %v131 = vld [vmem:[#allocation2 + $0x168] sm:$0xff]
    %v132 = vld [vmem:[#allocation2 + $0x170] sm:$0xff]
    %v133 = vld [vmem:[#allocation2 + $0x178] sm:$0xff]
    %v134 = vld [vmem:[#allocation2 + $0x180] sm:$0xff]
    %v135 = vld [vmem:[#allocation2 + $0x188] sm:$0xff]
    %v136 = vld [vmem:[#allocation2 + $0x190] sm:$0xff]
    %v137 = vld [vmem:[#allocation2 + $0x198] sm:$0xff]
    %v138 = vld [vmem:[#allocation2 + $0x1a0] sm:$0xff]
    %v139 = vld [vmem:[#allocation2 + $0x1a8] sm:$0xff]
    %v140 = vld [vmem:[#allocation2 + $0x1b0] sm:$0xff]
    %v141 = vld [vmem:[#allocation2 + $0x1b8] sm:$0xff]
    %v142 = vld [vmem:[#allocation2 + $0x1c0] sm:$0xff]
    %v143 = vld [vmem:[#allocation2 + $0x1c8] sm:$0xff]
    %v144 = vld [vmem:[#allocation2 + $0x1d0] sm:$0xff]
    %v145 = vld [vmem:[#allocation2 + $0x1d8] sm:$0xff]
    %v146 = vld [vmem:[#allocation2 + $0x1e0] sm:$0xff]
    %v147 = vld [vmem:[#allocation2 + $0x1e8] sm:$0xff]
    %v148 = vld [vmem:[#allocation2 + $0x1f0] sm:$0xff]
    %v149 = vld [vmem:[#allocation2 + $0x1f8] sm:$0xff]
    %v150 = vld [vmem:[#allocation5] sm:$0xff]
    %v151 = vld [vmem:[#allocation5 + $0x8] sm:$0xff]
    %v152 = vld [vmem:[#allocation5 + $0x10] sm:$0xff]
    %v153 = vld [vmem:[#allocation5 + $0x18] sm:$0xff]
    %v154 = vld [vmem:[#allocation5 + $0x20] sm:$0xff]
    %v155 = vld [vmem:[#allocation5 + $0x28] sm:$0xff]
    %v156 = vld [vmem:[#allocation5 + $0x30] sm:$0xff]
    %v157 = vld [vmem:[#allocation5 + $0x38] sm:$0xff]
    %v158 = vld [vmem:[#allocation5 + $0x40] sm:$0xff]
    %v159 = vld [vmem:[#allocation5 + $0x48] sm:$0xff]
    %v160 = vld [vmem:[#allocation5 + $0x50] sm:$0xff]
    %v161 = vld [vmem:[#allocation5 + $0x58] sm:$0xff]
    %v162 = vld [vmem:[#allocation5 + $0x60] sm:$0xff]
    %v163 = vld [vmem:[#allocation5 + $0x68] sm:$0xff]
    %v164 = vld [vmem:[#allocation5 + $0x70] sm:$0xff]
    %v165 = vld [vmem:[#allocation5 + $0x78] sm:$0xff]
    %v166 = vld [vmem:[#allocation5 + $0x80] sm:$0xff]
    %v167 = vld [vmem:[#allocation5 + $0x88] sm:$0xff]
    %v168 = vld [vmem:[#allocation5 + $0x90] sm:$0xff]
    %v169 = vld [vmem:[#allocation5 + $0x98] sm:$0xff]
    %v170 = vld [vmem:[#allocation5 + $0xa0] sm:$0xff]
    %v171 = vld [vmem:[#allocation5 + $0xa8] sm:$0xff]
    %v172 = vld [vmem:[#allocation5 + $0xb0] sm:$0xff]
    %v173 = vld [vmem:[#allocation5 + $0xb8] sm:$0xff]
    %v174 = vld [vmem:[#allocation5 + $0xc0] sm:$0xff]
    %v175 = vld [vmem:[#allocation5 + $0xc8] sm:$0xff]
    %v176 = vld [vmem:[#allocation5 + $0xd0] sm:$0xff]
    %v177 = vld [vmem:[#allocation5 + $0xd8] sm:$0xff]
    %v178 = vld [vmem:[#allocation5 + $0xe0] sm:$0xff]
    %v179 = vld [vmem:[#allocation5 + $0xe8] sm:$0xff]
    %v180 = vld [vmem:[#allocation5 + $0xf0] sm:$0xff]
    %v181 = vld [vmem:[#allocation5 + $0xf8] sm:$0xff]
    %v182 = vld [vmem:[%s2] sm:$0x3]
    %v184 = vlaneseq
    %v185 = vshrl.u32 %v184, 7
    %v186 = vsub.s32 0, %v185
    %v187 = vrot.slane %v182, %v186
    %v188 = vlaneseq
    %v189 = vshrl.u32 %v188, 7
    %v190 = vsub.s32 1, %v189
    %v191 = vrot.slane %v182, %v190
    %v258 = vunpack.c.l.b16 %v86
    %v259 = vunpack.c.h.b16 %v86
    %v260 = vunpack.c.l.b16 %v87
    %v261 = vunpack.c.h.b16 %v87
    %v262 = vunpack.c.l.b16 %v88
    %v263 = vunpack.c.h.b16 %v88
    %v264 = vunpack.c.l.b16 %v89
    %v265 = vunpack.c.h.b16 %v89
    %v266 = vunpack.c.l.b16 %v90
    %v267 = vunpack.c.h.b16 %v90
    %v268 = vunpack.c.l.b16 %v91
    %v269 = vunpack.c.h.b16 %v91
    %v270 = vunpack.c.l.b16 %v92
    %v271 = vunpack.c.h.b16 %v92
    %v272 = vunpack.c.l.b16 %v93
    %v273 = vunpack.c.h.b16 %v93
    %v274 = vunpack.c.l.b16 %v94
    %v275 = vunpack.c.h.b16 %v94
    %v276 = vunpack.c.l.b16 %v95
    %v277 = vunpack.c.h.b16 %v95
    %v278 = vunpack.c.l.b16 %v96
    %v279 = vunpack.c.h.b16 %v96
    %v280 = vunpack.c.l.b16 %v97
    %v281 = vunpack.c.h.b16 %v97
    %v282 = vunpack.c.l.b16 %v98
    %v283 = vunpack.c.h.b16 %v98
    %v284 = vunpack.c.l.b16 %v99
    %v285 = vunpack.c.h.b16 %v99
    %v286 = vunpack.c.l.b16 %v100
    %v287 = vunpack.c.h.b16 %v100
    %v288 = vunpack.c.l.b16 %v101
    %v289 = vunpack.c.h.b16 %v101
    %v290 = vunpack.c.l.b16 %v102
    %v291 = vunpack.c.h.b16 %v102
    %v292 = vunpack.c.l.b16 %v103
    %v293 = vunpack.c.h.b16 %v103
    %v294 = vunpack.c.l.b16 %v104
    %v295 = vunpack.c.h.b16 %v104
    %v296 = vunpack.c.l.b16 %v105
    %v297 = vunpack.c.h.b16 %v105
    %v298 = vunpack.c.l.b16 %v106
    %v299 = vunpack.c.h.b16 %v106
    %v300 = vunpack.c.l.b16 %v107
    %v301 = vunpack.c.h.b16 %v107
    %v302 = vunpack.c.l.b16 %v108
    %v303 = vunpack.c.h.b16 %v108
    %v304 = vunpack.c.l.b16 %v109
    %v305 = vunpack.c.h.b16 %v109
    %v306 = vunpack.c.l.b16 %v110
    %v307 = vunpack.c.h.b16 %v110
    %v308 = vunpack.c.l.b16 %v111
    %v309 = vunpack.c.h.b16 %v111
    %v310 = vunpack.c.l.b16 %v112
    %v311 = vunpack.c.h.b16 %v112
    %v312 = vunpack.c.l.b16 %v113
    %v313 = vunpack.c.h.b16 %v113
    %v314 = vunpack.c.l.b16 %v114
    %v315 = vunpack.c.h.b16 %v114
    %v316 = vunpack.c.l.b16 %v115
    %v317 = vunpack.c.h.b16 %v115
    %v318 = vunpack.c.l.b16 %v116
    %v319 = vunpack.c.h.b16 %v116
    %v320 = vunpack.c.l.b16 %v117
    %v321 = vunpack.c.h.b16 %v117
    %v322 = vunpack.c.l.b16 %v118
    %v323 = vunpack.c.h.b16 %v118
    %v324 = vunpack.c.l.b16 %v119
    %v325 = vunpack.c.h.b16 %v119
    %v326 = vunpack.c.l.b16 %v120
    %v327 = vunpack.c.h.b16 %v120
    %v328 = vunpack.c.l.b16 %v121
    %v329 = vunpack.c.h.b16 %v121
    %v330 = vunpack.c.l.b16 %v122
    %v331 = vunpack.c.h.b16 %v122
    %v332 = vunpack.c.l.b16 %v123
    %v333 = vunpack.c.h.b16 %v123
    %v334 = vunpack.c.l.b16 %v124
    %v335 = vunpack.c.h.b16 %v124
    %v336 = vunpack.c.l.b16 %v125
    %v337 = vunpack.c.h.b16 %v125
    %v338 = vunpack.c.l.b16 %v126
    %v339 = vunpack.c.h.b16 %v126
    %v340 = vunpack.c.l.b16 %v127
    %v341 = vunpack.c.h.b16 %v127
    %v342 = vunpack.c.l.b16 %v128
    %v343 = vunpack.c.h.b16 %v128
    %v344 = vunpack.c.l.b16 %v129
    %v345 = vunpack.c.h.b16 %v129
    %v346 = vunpack.c.l.b16 %v130
    %v347 = vunpack.c.h.b16 %v130
    %v348 = vunpack.c.l.b16 %v131
    %v349 = vunpack.c.h.b16 %v131
    %v350 = vunpack.c.l.b16 %v132
    %v351 = vunpack.c.h.b16 %v132
    %v352 = vunpack.c.l.b16 %v133
    %v353 = vunpack.c.h.b16 %v133
    %v354 = vunpack.c.l.b16 %v134
    %v355 = vunpack.c.h.b16 %v134
    %v356 = vunpack.c.l.b16 %v135
    %v357 = vunpack.c.h.b16 %v135
    %v358 = vunpack.c.l.b16 %v136
    %v359 = vunpack.c.h.b16 %v136
    %v360 = vunpack.c.l.b16 %v137
    %v361 = vunpack.c.h.b16 %v137
    %v362 = vunpack.c.l.b16 %v138
    %v363 = vunpack.c.h.b16 %v138
    %v364 = vunpack.c.l.b16 %v139
    %v365 = vunpack.c.h.b16 %v139
    %v366 = vunpack.c.l.b16 %v140
    %v367 = vunpack.c.h.b16 %v140
    %v368 = vunpack.c.l.b16 %v141
    %v369 = vunpack.c.h.b16 %v141
    %v370 = vunpack.c.l.b16 %v142
    %v371 = vunpack.c.h.b16 %v142
    %v372 = vunpack.c.l.b16 %v143
    %v373 = vunpack.c.h.b16 %v143
    %v374 = vunpack.c.l.b16 %v144
    %v375 = vunpack.c.h.b16 %v144
    %v376 = vunpack.c.l.b16 %v145
    %v377 = vunpack.c.h.b16 %v145
    %v378 = vunpack.c.l.b16 %v146
    %v379 = vunpack.c.h.b16 %v146
    %v380 = vunpack.c.l.b16 %v147
    %v381 = vunpack.c.h.b16 %v147
    %v382 = vunpack.c.l.b16 %v148
    %v383 = vunpack.c.h.b16 %v148
    %v384 = vunpack.c.l.b16 %v149
    %v385 = vunpack.c.h.b16 %v149
    %v386 = vpack.c.b16 %v260, %v258
    %v387 = vpack.c.b16 %v261, %v259
    %v388 = vpack.c.b16 %v264, %v262
    %v389 = vpack.c.b16 %v265, %v263
    %v390 = vpack.c.b16 %v268, %v266
    %v391 = vpack.c.b16 %v269, %v267
    %v392 = vpack.c.b16 %v272, %v270
    %v393 = vpack.c.b16 %v273, %v271
    %v394 = vpack.c.b16 %v276, %v274
    %v395 = vpack.c.b16 %v277, %v275
    %v396 = vpack.c.b16 %v280, %v278
    %v397 = vpack.c.b16 %v281, %v279
    %v398 = vpack.c.b16 %v284, %v282
    %v399 = vpack.c.b16 %v285, %v283
    %v400 = vpack.c.b16 %v288, %v286
    %v401 = vpack.c.b16 %v289, %v287
    %v402 = vpack.c.b16 %v292, %v290
    %v403 = vpack.c.b16 %v293, %v291
    %v404 = vpack.c.b16 %v296, %v294
    %v405 = vpack.c.b16 %v297, %v295
    %v406 = vpack.c.b16 %v300, %v298
    %v407 = vpack.c.b16 %v301, %v299
    %v408 = vpack.c.b16 %v304, %v302
    %v409 = vpack.c.b16 %v305, %v303
    %v410 = vpack.c.b16 %v308, %v306
    %v411 = vpack.c.b16 %v309, %v307
    %v412 = vpack.c.b16 %v312, %v310
    %v413 = vpack.c.b16 %v313, %v311
    %v414 = vpack.c.b16 %v316, %v314
    %v415 = vpack.c.b16 %v317, %v315
    %v416 = vpack.c.b16 %v320, %v318
    %v417 = vpack.c.b16 %v321, %v319
    %v418 = vpack.c.b16 %v324, %v322
    %v419 = vpack.c.b16 %v325, %v323
    %v420 = vpack.c.b16 %v328, %v326
    %v421 = vpack.c.b16 %v329, %v327
    %v422 = vpack.c.b16 %v332, %v330
    %v423 = vpack.c.b16 %v333, %v331
    %v424 = vpack.c.b16 %v336, %v334
    %v425 = vpack.c.b16 %v337, %v335
    %v426 = vpack.c.b16 %v340, %v338
    %v427 = vpack.c.b16 %v341, %v339
    %v428 = vpack.c.b16 %v344, %v342
    %v429 = vpack.c.b16 %v345, %v343
    %v430 = vpack.c.b16 %v348, %v346
    %v431 = vpack.c.b16 %v349, %v347
    %v432 = vpack.c.b16 %v352, %v350
    %v433 = vpack.c.b16 %v353, %v351
    %v434 = vpack.c.b16 %v356, %v354
    %v435 = vpack.c.b16 %v357, %v355
    %v436 = vpack.c.b16 %v360, %v358
    %v437 = vpack.c.b16 %v361, %v359
    %v438 = vpack.c.b16 %v364, %v362
    %v439 = vpack.c.b16 %v365, %v363
    %v440 = vpack.c.b16 %v368, %v366
    %v441 = vpack.c.b16 %v369, %v367
    %v442 = vpack.c.b16 %v372, %v370
    %v443 = vpack.c.b16 %v373, %v371
    %v444 = vpack.c.b16 %v376, %v374
    %v445 = vpack.c.b16 %v377, %v375
    %v446 = vpack.c.b16 %v380, %v378
    %v447 = vpack.c.b16 %v381, %v379
    %v448 = vpack.c.b16 %v384, %v382
    %v449 = vpack.c.b16 %v385, %v383
    %v546 = vunpack.c.l.b16 %v150
    %v547 = vunpack.c.h.b16 %v150
    %v548 = vunpack.c.l.b16 %v151
    %v549 = vunpack.c.h.b16 %v151
    %v550 = vunpack.c.l.b16 %v152
    %v551 = vunpack.c.h.b16 %v152
    %v552 = vunpack.c.l.b16 %v153
    %v553 = vunpack.c.h.b16 %v153
    %v554 = vunpack.c.l.b16 %v154
    %v555 = vunpack.c.h.b16 %v154
    %v556 = vunpack.c.l.b16 %v155
    %v557 = vunpack.c.h.b16 %v155
    %v558 = vunpack.c.l.b16 %v156
    %v559 = vunpack.c.h.b16 %v156
    %v560 = vunpack.c.l.b16 %v157
    %v561 = vunpack.c.h.b16 %v157
    %v562 = vunpack.c.l.b16 %v158
    %v563 = vunpack.c.h.b16 %v158
    %v564 = vunpack.c.l.b16 %v159
    %v565 = vunpack.c.h.b16 %v159
    %v566 = vunpack.c.l.b16 %v160
    %v567 = vunpack.c.h.b16 %v160
    %v568 = vunpack.c.l.b16 %v161
    %v569 = vunpack.c.h.b16 %v161
    %v570 = vunpack.c.l.b16 %v162
    %v571 = vunpack.c.h.b16 %v162
    %v572 = vunpack.c.l.b16 %v163
    %v573 = vunpack.c.h.b16 %v163
    %v574 = vunpack.c.l.b16 %v164
    %v575 = vunpack.c.h.b16 %v164
    %v576 = vunpack.c.l.b16 %v165
    %v577 = vunpack.c.h.b16 %v165
    %v578 = vunpack.c.l.b16 %v166
    %v579 = vunpack.c.h.b16 %v166
    %v580 = vunpack.c.l.b16 %v167
    %v581 = vunpack.c.h.b16 %v167
    %v582 = vunpack.c.l.b16 %v168
    %v583 = vunpack.c.h.b16 %v168
    %v584 = vunpack.c.l.b16 %v169
    %v585 = vunpack.c.h.b16 %v169
    %v586 = vunpack.c.l.b16 %v170
    %v587 = vunpack.c.h.b16 %v170
    %v588 = vunpack.c.l.b16 %v171
    %v589 = vunpack.c.h.b16 %v171
    %v590 = vunpack.c.l.b16 %v172
    %v591 = vunpack.c.h.b16 %v172
    %v592 = vunpack.c.l.b16 %v173
    %v593 = vunpack.c.h.b16 %v173
    %v594 = vunpack.c.l.b16 %v174
    %v595 = vunpack.c.h.b16 %v174
    %v596 = vunpack.c.l.b16 %v175
    %v597 = vunpack.c.h.b16 %v175
    %v598 = vunpack.c.l.b16 %v176
    %v599 = vunpack.c.h.b16 %v176
    %v600 = vunpack.c.l.b16 %v177
    %v601 = vunpack.c.h.b16 %v177
    %v602 = vunpack.c.l.b16 %v178
    %v603 = vunpack.c.h.b16 %v178
    %v604 = vunpack.c.l.b16 %v179
    %v605 = vunpack.c.h.b16 %v179
    %v606 = vunpack.c.l.b16 %v180
    %v607 = vunpack.c.h.b16 %v180
    %v608 = vunpack.c.l.b16 %v181
    %v609 = vunpack.c.h.b16 %v181
    %v610 = vpack.c.b16 %v548, %v546
    %v611 = vpack.c.b16 %v549, %v547
    %v612 = vpack.c.b16 %v552, %v550
    %v613 = vpack.c.b16 %v553, %v551
    %v614 = vpack.c.b16 %v556, %v554
    %v615 = vpack.c.b16 %v557, %v555
    %v616 = vpack.c.b16 %v560, %v558
    %v617 = vpack.c.b16 %v561, %v559
    %v618 = vpack.c.b16 %v564, %v562
    %v619 = vpack.c.b16 %v565, %v563
    %v620 = vpack.c.b16 %v568, %v566
    %v621 = vpack.c.b16 %v569, %v567
    %v622 = vpack.c.b16 %v572, %v570
    %v623 = vpack.c.b16 %v573, %v571
    %v624 = vpack.c.b16 %v576, %v574
    %v625 = vpack.c.b16 %v577, %v575
    %v626 = vpack.c.b16 %v580, %v578
    %v627 = vpack.c.b16 %v581, %v579
    %v628 = vpack.c.b16 %v584, %v582
    %v629 = vpack.c.b16 %v585, %v583
    %v630 = vpack.c.b16 %v588, %v586
    %v631 = vpack.c.b16 %v589, %v587
    %v632 = vpack.c.b16 %v592, %v590
    %v633 = vpack.c.b16 %v593, %v591
    %v634 = vpack.c.b16 %v596, %v594
    %v635 = vpack.c.b16 %v597, %v595
    %v636 = vpack.c.b16 %v600, %v598
    %v637 = vpack.c.b16 %v601, %v599
    %v638 = vpack.c.b16 %v604, %v602
    %v639 = vpack.c.b16 %v605, %v603
    %v640 = vpack.c.b16 %v608, %v606
    %v641 = vpack.c.b16 %v609, %v607
    %674 = vmatprep.subr.bf16.mxu0 %v625
    %675 = vmatpush1.bf16.msra.mxu0 %v624
    %676 = vmatprep.subr.bf16.mxu0 %v623
    %677 = vmatpush1.bf16.msra.mxu0 %v622
    %678 = vmatprep.subr.bf16.mxu0 %v621
    %679 = vmatpush1.bf16.msra.mxu0 %v620
    %680 = vmatprep.subr.bf16.mxu0 %v619
    %681 = vmatpush1.bf16.msra.mxu0 %v618
    %682 = vmatprep.subr.bf16.mxu0 %v617
    %683 = vmatpush1.bf16.msra.mxu0 %v616
    %684 = vmatprep.subr.bf16.mxu0 %v615
    %685 = vmatpush1.bf16.msra.mxu0 %v614
    %686 = vmatprep.subr.bf16.mxu0 %v613
    %687 = vmatpush1.bf16.msra.mxu0 %v612
    %688 = vmatprep.subr.bf16.mxu0 %v611
    %689 = vmatpush1.bf16.msra.mxu0 %v610
    %690 = vmatprep.subr.bf16.mxu0 %v641
    %691 = vmatpush2.bf16.msra.mxu0 %v640
    %692 = vmatprep.subr.bf16.mxu0 %v639
    %693 = vmatpush2.bf16.msra.mxu0 %v638
    %694 = vmatprep.subr.bf16.mxu0 %v637
    %695 = vmatpush2.bf16.msra.mxu0 %v636
    %696 = vmatprep.subr.bf16.mxu0 %v635
    %697 = vmatpush2.bf16.msra.mxu0 %v634
    %698 = vmatprep.subr.bf16.mxu0 %v633
    %699 = vmatpush2.bf16.msra.mxu0 %v632
    %700 = vmatprep.subr.bf16.mxu0 %v631
    %701 = vmatpush2.bf16.msra.mxu0 %v630
    %702 = vmatprep.subr.bf16.mxu0 %v629
    %703 = vmatpush2.bf16.msra.mxu0 %v628
    %704 = vmatprep.subr.bf16.mxu0 %v627
    %705 = vmatpush2.bf16.msra.mxu0 %v626
    %706 = vmatprep.mubr.bf16.mxu0 %v387
    %707 = vmatmul.mubr.bf16.gmra.mxu0 %v386
    %v708 = vpop.f32.mrf.mxu0
    %v709 = vadd.f32 %v187, %v708
    %v710 = vpop.f32.mrf.mxu0
    %v711 = vadd.f32 %v191, %v710
    %v712 = vpop.f32.mrf.mxu0
    %v713 = vadd.f32 %v187, %v712
    %v714 = vpop.f32.mrf.mxu0
    %v715 = vadd.f32 %v191, %v714
    %716 = vmatprep.mubr.bf16.mxu0 %v389
    %717 = vmatmul.mubr.bf16.gmra.mxu0 %v388
    %v718 = vpop.f32.mrf.mxu0
    %v719 = vadd.f32 %v187, %v718
    %v720 = vpop.f32.mrf.mxu0
    %v721 = vadd.f32 %v191, %v720
    %v722 = vpop.f32.mrf.mxu0
    %v723 = vadd.f32 %v187, %v722
    %v724 = vpop.f32.mrf.mxu0
    %v725 = vadd.f32 %v191, %v724
    %726 = vmatprep.mubr.bf16.mxu0 %v391
    %727 = vmatmul.mubr.bf16.gmra.mxu0 %v390
    %v728 = vpop.f32.mrf.mxu0
    %v729 = vadd.f32 %v187, %v728
    %v730 = vpop.f32.mrf.mxu0
    %v731 = vadd.f32 %v191, %v730
    %v732 = vpop.f32.mrf.mxu0
    %v733 = vadd.f32 %v187, %v732
    %v734 = vpop.f32.mrf.mxu0
    %v735 = vadd.f32 %v191, %v734
    %736 = vmatprep.mubr.bf16.mxu0 %v393
    %737 = vmatmul.mubr.bf16.gmra.mxu0 %v392
    %v738 = vpop.f32.mrf.mxu0
    %v739 = vadd.f32 %v187, %v738
    %v740 = vpop.f32.mrf.mxu0
    %v741 = vadd.f32 %v191, %v740
    %v742 = vpop.f32.mrf.mxu0
    %v743 = vadd.f32 %v187, %v742
    %v744 = vpop.f32.mrf.mxu0
    %v745 = vadd.f32 %v191, %v744
    %746 = vmatprep.mubr.bf16.mxu0 %v395
    %747 = vmatmul.mubr.bf16.gmra.mxu0 %v394
    %v748 = vpop.f32.mrf.mxu0
    %v749 = vadd.f32 %v187, %v748
    %v750 = vpop.f32.mrf.mxu0
    %v751 = vadd.f32 %v191, %v750
    %v752 = vpop.f32.mrf.mxu0
    %v753 = vadd.f32 %v187, %v752
    %v754 = vpop.f32.mrf.mxu0
    %v755 = vadd.f32 %v191, %v754
    %756 = vmatprep.mubr.bf16.mxu0 %v397
    %757 = vmatmul.mubr.bf16.gmra.mxu0 %v396
    %v758 = vpop.f32.mrf.mxu0
    %v759 = vadd.f32 %v187, %v758
    %v760 = vpop.f32.mrf.mxu0
    %v761 = vadd.f32 %v191, %v760
    %v762 = vpop.f32.mrf.mxu0
    %v763 = vadd.f32 %v187, %v762
    %v764 = vpop.f32.mrf.mxu0
    %v765 = vadd.f32 %v191, %v764
    %766 = vmatprep.mubr.bf16.mxu0 %v399
    %767 = vmatmul.mubr.bf16.gmra.mxu0 %v398
    %v768 = vpop.f32.mrf.mxu0
    %v769 = vadd.f32 %v187, %v768
    %v770 = vpop.f32.mrf.mxu0
    %v771 = vadd.f32 %v191, %v770
    %v772 = vpop.f32.mrf.mxu0
    %v773 = vadd.f32 %v187, %v772
    %v774 = vpop.f32.mrf.mxu0
    %v775 = vadd.f32 %v191, %v774
    %776 = vmatprep.mubr.bf16.mxu0 %v401
    %777 = vmatmul.mubr.bf16.gmra.mxu0 %v400
    %v778 = vpop.f32.mrf.mxu0
    %v779 = vadd.f32 %v187, %v778
    %v780 = vpop.f32.mrf.mxu0
    %v781 = vadd.f32 %v191, %v780
    %v782 = vpop.f32.mrf.mxu0
    %v783 = vadd.f32 %v187, %v782
    %v784 = vpop.f32.mrf.mxu0
    %v785 = vadd.f32 %v191, %v784
    %786 = vmatprep.mubr.bf16.mxu0 %v403
    %787 = vmatmul.mubr.bf16.gmra.mxu0 %v402
    %v788 = vpop.f32.mrf.mxu0
    %v789 = vadd.f32 %v187, %v788
    %v790 = vpop.f32.mrf.mxu0
    %v791 = vadd.f32 %v191, %v790
    %v792 = vpop.f32.mrf.mxu0
    %v793 = vadd.f32 %v187, %v792
    %v794 = vpop.f32.mrf.mxu0
    %v795 = vadd.f32 %v191, %v794
    %796 = vmatprep.mubr.bf16.mxu0 %v405
    %797 = vmatmul.mubr.bf16.gmra.mxu0 %v404
    %v798 = vpop.f32.mrf.mxu0
    %v799 = vadd.f32 %v187, %v798
    %v800 = vpop.f32.mrf.mxu0
    %v801 = vadd.f32 %v191, %v800
    %v802 = vpop.f32.mrf.mxu0
    %v803 = vadd.f32 %v187, %v802
    %v804 = vpop.f32.mrf.mxu0
    %v805 = vadd.f32 %v191, %v804
    %806 = vmatprep.mubr.bf16.mxu0 %v407
    %807 = vmatmul.mubr.bf16.gmra.mxu0 %v406
    %v808 = vpop.f32.mrf.mxu0
    %v809 = vadd.f32 %v187, %v808
    %v810 = vpop.f32.mrf.mxu0
    %v811 = vadd.f32 %v191, %v810
    %v812 = vpop.f32.mrf.mxu0
    %v813 = vadd.f32 %v187, %v812
    %v814 = vpop.f32.mrf.mxu0
    %v815 = vadd.f32 %v191, %v814
    %816 = vmatprep.mubr.bf16.mxu0 %v409
    %817 = vmatmul.mubr.bf16.gmra.mxu0 %v408
    %v818 = vpop.f32.mrf.mxu0
    %v819 = vadd.f32 %v187, %v818
    %v820 = vpop.f32.mrf.mxu0
    %v821 = vadd.f32 %v191, %v820
    %v822 = vpop.f32.mrf.mxu0
    %v823 = vadd.f32 %v187, %v822
    %v824 = vpop.f32.mrf.mxu0
    %v825 = vadd.f32 %v191, %v824
    %826 = vmatprep.mubr.bf16.mxu0 %v411
    %827 = vmatmul.mubr.bf16.gmra.mxu0 %v410
    %v828 = vpop.f32.mrf.mxu0
    %v829 = vadd.f32 %v187, %v828
    %v830 = vpop.f32.mrf.mxu0
    %v831 = vadd.f32 %v191, %v830
    %v832 = vpop.f32.mrf.mxu0
    %v833 = vadd.f32 %v187, %v832
    %v834 = vpop.f32.mrf.mxu0
    %v835 = vadd.f32 %v191, %v834
    %836 = vmatprep.mubr.bf16.mxu0 %v413
    %837 = vmatmul.mubr.bf16.gmra.mxu0 %v412
    %v838 = vpop.f32.mrf.mxu0
    %v839 = vadd.f32 %v187, %v838
    %v840 = vpop.f32.mrf.mxu0
    %v841 = vadd.f32 %v191, %v840
    %v842 = vpop.f32.mrf.mxu0
    %v843 = vadd.f32 %v187, %v842
    %v844 = vpop.f32.mrf.mxu0
    %v845 = vadd.f32 %v191, %v844
    %846 = vmatprep.mubr.bf16.mxu0 %v415
    %847 = vmatmul.mubr.bf16.gmra.mxu0 %v414
    %v848 = vpop.f32.mrf.mxu0
    %v849 = vadd.f32 %v187, %v848
    %v850 = vpop.f32.mrf.mxu0
    %v851 = vadd.f32 %v191, %v850
    %v852 = vpop.f32.mrf.mxu0
    %v853 = vadd.f32 %v187, %v852
    %v854 = vpop.f32.mrf.mxu0
    %v855 = vadd.f32 %v191, %v854
    %856 = vmatprep.mubr.bf16.mxu0 %v417
    %857 = vmatmul.mubr.bf16.gmra.mxu0 %v416
    %v858 = vpop.f32.mrf.mxu0
    %v859 = vadd.f32 %v187, %v858
    %v860 = vpop.f32.mrf.mxu0
    %v861 = vadd.f32 %v191, %v860
    %v862 = vpop.f32.mrf.mxu0
    %v863 = vadd.f32 %v187, %v862
    %v864 = vpop.f32.mrf.mxu0
    %v865 = vadd.f32 %v191, %v864
    %866 = vmatprep.mubr.bf16.mxu0 %v419
    %867 = vmatmul.mubr.bf16.gmra.mxu0 %v418
    %v868 = vpop.f32.mrf.mxu0
    %v869 = vadd.f32 %v187, %v868
    %v870 = vpop.f32.mrf.mxu0
    %v871 = vadd.f32 %v191, %v870
    %v872 = vpop.f32.mrf.mxu0
    %v873 = vadd.f32 %v187, %v872
    %v874 = vpop.f32.mrf.mxu0
    %v875 = vadd.f32 %v191, %v874
    %876 = vmatprep.mubr.bf16.mxu0 %v421
    %877 = vmatmul.mubr.bf16.gmra.mxu0 %v420
    %v878 = vpop.f32.mrf.mxu0
    %v879 = vadd.f32 %v187, %v878
    %v880 = vpop.f32.mrf.mxu0
    %v881 = vadd.f32 %v191, %v880
    %v882 = vpop.f32.mrf.mxu0
    %v883 = vadd.f32 %v187, %v882
    %v884 = vpop.f32.mrf.mxu0
    %v885 = vadd.f32 %v191, %v884
    %886 = vmatprep.mubr.bf16.mxu0 %v423
    %887 = vmatmul.mubr.bf16.gmra.mxu0 %v422
    %v888 = vpop.f32.mrf.mxu0
    %v889 = vadd.f32 %v187, %v888
    %v890 = vpop.f32.mrf.mxu0
    %v891 = vadd.f32 %v191, %v890
    %v892 = vpop.f32.mrf.mxu0
    %v893 = vadd.f32 %v187, %v892
    %v894 = vpop.f32.mrf.mxu0
    %v895 = vadd.f32 %v191, %v894
    %896 = vmatprep.mubr.bf16.mxu0 %v425
    %897 = vmatmul.mubr.bf16.gmra.mxu0 %v424
    %v898 = vpop.f32.mrf.mxu0
    %v899 = vadd.f32 %v187, %v898
    %v900 = vpop.f32.mrf.mxu0
    %v901 = vadd.f32 %v191, %v900
    %v902 = vpop.f32.mrf.mxu0
    %v903 = vadd.f32 %v187, %v902
    %v904 = vpop.f32.mrf.mxu0
    %v905 = vadd.f32 %v191, %v904
    %906 = vmatprep.mubr.bf16.mxu0 %v427
    %907 = vmatmul.mubr.bf16.gmra.mxu0 %v426
    %v908 = vpop.f32.mrf.mxu0
    %v909 = vadd.f32 %v187, %v908
    %v910 = vpop.f32.mrf.mxu0
    %v911 = vadd.f32 %v191, %v910
    %v912 = vpop.f32.mrf.mxu0
    %v913 = vadd.f32 %v187, %v912
    %v914 = vpop.f32.mrf.mxu0
    %v915 = vadd.f32 %v191, %v914
    %916 = vmatprep.mubr.bf16.mxu0 %v429
    %917 = vmatmul.mubr.bf16.gmra.mxu0 %v428
    %v918 = vpop.f32.mrf.mxu0
    %v919 = vadd.f32 %v187, %v918
    %v920 = vpop.f32.mrf.mxu0
    %v921 = vadd.f32 %v191, %v920
    %v922 = vpop.f32.mrf.mxu0
    %v923 = vadd.f32 %v187, %v922
    %v924 = vpop.f32.mrf.mxu0
    %v925 = vadd.f32 %v191, %v924
    %926 = vmatprep.mubr.bf16.mxu0 %v431
    %927 = vmatmul.mubr.bf16.gmra.mxu0 %v430
    %v928 = vpop.f32.mrf.mxu0
    %v929 = vadd.f32 %v187, %v928
    %v930 = vpop.f32.mrf.mxu0
    %v931 = vadd.f32 %v191, %v930
    %v932 = vpop.f32.mrf.mxu0
    %v933 = vadd.f32 %v187, %v932
    %v934 = vpop.f32.mrf.mxu0
    %v935 = vadd.f32 %v191, %v934
    %936 = vmatprep.mubr.bf16.mxu0 %v433
    %937 = vmatmul.mubr.bf16.gmra.mxu0 %v432
    %v938 = vpop.f32.mrf.mxu0
    %v939 = vadd.f32 %v187, %v938
    %v940 = vpop.f32.mrf.mxu0
    %v941 = vadd.f32 %v191, %v940
    %v942 = vpop.f32.mrf.mxu0
    %v943 = vadd.f32 %v187, %v942
    %v944 = vpop.f32.mrf.mxu0
    %v945 = vadd.f32 %v191, %v944
    %946 = vmatprep.mubr.bf16.mxu0 %v435
    %947 = vmatmul.mubr.bf16.gmra.mxu0 %v434
    %v948 = vpop.f32.mrf.mxu0
    %v949 = vadd.f32 %v187, %v948
    %v950 = vpop.f32.mrf.mxu0
    %v951 = vadd.f32 %v191, %v950
    %v952 = vpop.f32.mrf.mxu0
    %v953 = vadd.f32 %v187, %v952
    %v954 = vpop.f32.mrf.mxu0
    %v955 = vadd.f32 %v191, %v954
    %956 = vmatprep.mubr.bf16.mxu0 %v437
    %957 = vmatmul.mubr.bf16.gmra.mxu0 %v436
    %v958 = vpop.f32.mrf.mxu0
    %v959 = vadd.f32 %v187, %v958
    %v960 = vpop.f32.mrf.mxu0
    %v961 = vadd.f32 %v191, %v960
    %v962 = vpop.f32.mrf.mxu0
    %v963 = vadd.f32 %v187, %v962
    %v964 = vpop.f32.mrf.mxu0
    %v965 = vadd.f32 %v191, %v964
    %966 = vmatprep.mubr.bf16.mxu0 %v439
    %967 = vmatmul.mubr.bf16.gmra.mxu0 %v438
    %v968 = vpop.f32.mrf.mxu0
    %v969 = vadd.f32 %v187, %v968
    %v970 = vpop.f32.mrf.mxu0
    %v971 = vadd.f32 %v191, %v970
    %v972 = vpop.f32.mrf.mxu0
    %v973 = vadd.f32 %v187, %v972
    %v974 = vpop.f32.mrf.mxu0
    %v975 = vadd.f32 %v191, %v974
    %976 = vmatprep.mubr.bf16.mxu0 %v441
    %977 = vmatmul.mubr.bf16.gmra.mxu0 %v440
    %v978 = vpop.f32.mrf.mxu0
    %v979 = vadd.f32 %v187, %v978
    %v980 = vpop.f32.mrf.mxu0
    %v981 = vadd.f32 %v191, %v980
    %v982 = vpop.f32.mrf.mxu0
    %v983 = vadd.f32 %v187, %v982
    %v984 = vpop.f32.mrf.mxu0
    %v985 = vadd.f32 %v191, %v984
    %986 = vmatprep.mubr.bf16.mxu0 %v443
    %987 = vmatmul.mubr.bf16.gmra.mxu0 %v442
    %v988 = vpop.f32.mrf.mxu0
    %v989 = vadd.f32 %v187, %v988
    %v990 = vpop.f32.mrf.mxu0
    %v991 = vadd.f32 %v191, %v990
    %v992 = vpop.f32.mrf.mxu0
    %v993 = vadd.f32 %v187, %v992
    %v994 = vpop.f32.mrf.mxu0
    %v995 = vadd.f32 %v191, %v994
    %996 = vmatprep.mubr.bf16.mxu0 %v445
    %997 = vmatmul.mubr.bf16.gmra.mxu0 %v444
    %v998 = vpop.f32.mrf.mxu0
    %v999 = vadd.f32 %v187, %v998
    %v1000 = vpop.f32.mrf.mxu0
    %v1001 = vadd.f32 %v191, %v1000
    %v1002 = vpop.f32.mrf.mxu0
    %v1003 = vadd.f32 %v187, %v1002
    %v1004 = vpop.f32.mrf.mxu0
    %v1005 = vadd.f32 %v191, %v1004
    %1006 = vmatprep.mubr.bf16.mxu0 %v447
    %1007 = vmatmul.mubr.bf16.gmra.mxu0 %v446
    %v1008 = vpop.f32.mrf.mxu0
    %v1009 = vadd.f32 %v187, %v1008
    %v1010 = vpop.f32.mrf.mxu0
    %v1011 = vadd.f32 %v191, %v1010
    %v1012 = vpop.f32.mrf.mxu0
    %v1013 = vadd.f32 %v187, %v1012
    %v1014 = vpop.f32.mrf.mxu0
    %v1015 = vadd.f32 %v191, %v1014
    %1016 = vmatprep.mubr.bf16.mxu0 %v449
    %1017 = vmatmul.mubr.bf16.gmra.mxu0 %v448
    %v1018 = vpop.f32.mrf.mxu0
    %v1019 = vadd.f32 %v187, %v1018
    %v1020 = vpop.f32.mrf.mxu0
    %v1021 = vadd.f32 %v191, %v1020
    %v1022 = vpop.f32.mrf.mxu0
    %v1023 = vadd.f32 %v187, %v1022
    %v1024 = vpop.f32.mrf.mxu0
    %v1025 = vadd.f32 %v191, %v1024
    %1026 = vdwg.mxu0
    %v1027 = vpack.c.bf16 %v713, %v709
    %v1028 = vpack.c.bf16 %v723, %v719
    %v1029 = vpack.c.bf16 %v733, %v729
    %v1030 = vpack.c.bf16 %v743, %v739
    %v1031 = vpack.c.bf16 %v753, %v749
    %v1032 = vpack.c.bf16 %v763, %v759
    %v1033 = vpack.c.bf16 %v773, %v769
    %v1034 = vpack.c.bf16 %v783, %v779
    %v1035 = vpack.c.bf16 %v793, %v789
    %v1036 = vpack.c.bf16 %v803, %v799
    %v1037 = vpack.c.bf16 %v813, %v809
    %v1038 = vpack.c.bf16 %v823, %v819
    %v1039 = vpack.c.bf16 %v833, %v829
    %v1040 = vpack.c.bf16 %v843, %v839
    %v1041 = vpack.c.bf16 %v853, %v849
    %v1042 = vpack.c.bf16 %v863, %v859
    %v1043 = vpack.c.bf16 %v873, %v869
    %v1044 = vpack.c.bf16 %v883, %v879
    %v1045 = vpack.c.bf16 %v893, %v889
    %v1046 = vpack.c.bf16 %v903, %v899
    %v1047 = vpack.c.bf16 %v913, %v909
    %v1048 = vpack.c.bf16 %v923, %v919
    %v1049 = vpack.c.bf16 %v933, %v929
    %v1050 = vpack.c.bf16 %v943, %v939
    %v1051 = vpack.c.bf16 %v953, %v949
    %v1052 = vpack.c.bf16 %v963, %v959
    %v1053 = vpack.c.bf16 %v973, %v969
    %v1054 = vpack.c.bf16 %v983, %v979
    %v1055 = vpack.c.bf16 %v993, %v989
    %v1056 = vpack.c.bf16 %v1003, %v999
    %v1057 = vpack.c.bf16 %v1013, %v1009
    %v1058 = vpack.c.bf16 %v1023, %v1019
    %v1091 = vunpack.c.l.b16 %v1027
    %v1092 = vunpack.c.h.b16 %v1027
    %v1093 = vunpack.c.l.b16 %v1028
    %v1094 = vunpack.c.h.b16 %v1028
    %v1095 = vunpack.c.l.b16 %v1029
    %v1096 = vunpack.c.h.b16 %v1029
    %v1097 = vunpack.c.l.b16 %v1030
    %v1098 = vunpack.c.h.b16 %v1030
    %v1099 = vunpack.c.l.b16 %v1031
    %v1100 = vunpack.c.h.b16 %v1031
    %v1101 = vunpack.c.l.b16 %v1032
    %v1102 = vunpack.c.h.b16 %v1032
    %v1103 = vunpack.c.l.b16 %v1033
    %v1104 = vunpack.c.h.b16 %v1033
    %v1105 = vunpack.c.l.b16 %v1034
    %v1106 = vunpack.c.h.b16 %v1034
    %v1107 = vunpack.c.l.b16 %v1035
    %v1108 = vunpack.c.h.b16 %v1035
    %v1109 = vunpack.c.l.b16 %v1036
    %v1110 = vunpack.c.h.b16 %v1036
    %v1111 = vunpack.c.l.b16 %v1037
    %v1112 = vunpack.c.h.b16 %v1037
    %v1113 = vunpack.c.l.b16 %v1038
    %v1114 = vunpack.c.h.b16 %v1038
    %v1115 = vunpack.c.l.b16 %v1039
    %v1116 = vunpack.c.h.b16 %v1039
    %v1117 = vunpack.c.l.b16 %v1040
    %v1118 = vunpack.c.h.b16 %v1040
    %v1119 = vunpack.c.l.b16 %v1041
    %v1120 = vunpack.c.h.b16 %v1041
    %v1121 = vunpack.c.l.b16 %v1042
    %v1122 = vunpack.c.h.b16 %v1042
    %v1123 = vunpack.c.l.b16 %v1043
    %v1124 = vunpack.c.h.b16 %v1043
    %v1125 = vunpack.c.l.b16 %v1044
    %v1126 = vunpack.c.h.b16 %v1044
    %v1127 = vunpack.c.l.b16 %v1045
    %v1128 = vunpack.c.h.b16 %v1045
    %v1129 = vunpack.c.l.b16 %v1046
    %v1130 = vunpack.c.h.b16 %v1046
    %v1131 = vunpack.c.l.b16 %v1047
    %v1132 = vunpack.c.h.b16 %v1047
    %v1133 = vunpack.c.l.b16 %v1048
    %v1134 = vunpack.c.h.b16 %v1048
    %v1135 = vunpack.c.l.b16 %v1049
    %v1136 = vunpack.c.h.b16 %v1049
    %v1137 = vunpack.c.l.b16 %v1050
    %v1138 = vunpack.c.h.b16 %v1050
    %v1139 = vunpack.c.l.b16 %v1051
    %v1140 = vunpack.c.h.b16 %v1051
    %v1141 = vunpack.c.l.b16 %v1052
    %v1142 = vunpack.c.h.b16 %v1052
    %v1143 = vunpack.c.l.b16 %v1053
    %v1144 = vunpack.c.h.b16 %v1053
    %v1145 = vunpack.c.l.b16 %v1054
    %v1146 = vunpack.c.h.b16 %v1054
    %v1147 = vunpack.c.l.b16 %v1055
    %v1148 = vunpack.c.h.b16 %v1055
    %v1149 = vunpack.c.l.b16 %v1056
    %v1150 = vunpack.c.h.b16 %v1056
    %v1151 = vunpack.c.l.b16 %v1057
    %v1152 = vunpack.c.h.b16 %v1057
    %v1153 = vunpack.c.l.b16 %v1058
    %v1154 = vunpack.c.h.b16 %v1058
    %v1155 = vpack.c.b16 %v1091, %v1091
    %v1156 = vpack.c.b16 %v1092, %v1092
    %v1157 = vpack.c.b16 %v1093, %v1093
    %v1158 = vpack.c.b16 %v1094, %v1094
    %v1159 = vpack.c.b16 %v1095, %v1095
    %v1160 = vpack.c.b16 %v1096, %v1096
    %v1161 = vpack.c.b16 %v1097, %v1097
    %v1162 = vpack.c.b16 %v1098, %v1098
    %v1163 = vpack.c.b16 %v1099, %v1099
    %v1164 = vpack.c.b16 %v1100, %v1100
    %v1165 = vpack.c.b16 %v1101, %v1101
    %v1166 = vpack.c.b16 %v1102, %v1102
    %v1167 = vpack.c.b16 %v1103, %v1103
    %v1168 = vpack.c.b16 %v1104, %v1104
    %v1169 = vpack.c.b16 %v1105, %v1105
    %v1170 = vpack.c.b16 %v1106, %v1106
    %v1171 = vpack.c.b16 %v1107, %v1107
    %v1172 = vpack.c.b16 %v1108, %v1108
    %v1173 = vpack.c.b16 %v1109, %v1109
    %v1174 = vpack.c.b16 %v1110, %v1110
    %v1175 = vpack.c.b16 %v1111, %v1111
    %v1176 = vpack.c.b16 %v1112, %v1112
    %v1177 = vpack.c.b16 %v1113, %v1113
    %v1178 = vpack.c.b16 %v1114, %v1114
    %v1179 = vpack.c.b16 %v1115, %v1115
    %v1180 = vpack.c.b16 %v1116, %v1116
    %v1181 = vpack.c.b16 %v1117, %v1117
    %v1182 = vpack.c.b16 %v1118, %v1118
    %v1183 = vpack.c.b16 %v1119, %v1119
    %v1184 = vpack.c.b16 %v1120, %v1120
    %v1185 = vpack.c.b16 %v1121, %v1121
    %v1186 = vpack.c.b16 %v1122, %v1122
    %v1187 = vpack.c.b16 %v1123, %v1123
    %v1188 = vpack.c.b16 %v1124, %v1124
    %v1189 = vpack.c.b16 %v1125, %v1125
    %v1190 = vpack.c.b16 %v1126, %v1126
    %v1191 = vpack.c.b16 %v1127, %v1127
    %v1192 = vpack.c.b16 %v1128, %v1128
    %v1193 = vpack.c.b16 %v1129, %v1129
    %v1194 = vpack.c.b16 %v1130, %v1130
    %v1195 = vpack.c.b16 %v1131, %v1131
    %v1196 = vpack.c.b16 %v1132, %v1132
    %v1197 = vpack.c.b16 %v1133, %v1133
    %v1198 = vpack.c.b16 %v1134, %v1134
    %v1199 = vpack.c.b16 %v1135, %v1135
    %v1200 = vpack.c.b16 %v1136, %v1136
    %v1201 = vpack.c.b16 %v1137, %v1137
    %v1202 = vpack.c.b16 %v1138, %v1138
    %v1203 = vpack.c.b16 %v1139, %v1139
    %v1204 = vpack.c.b16 %v1140, %v1140
    %v1205 = vpack.c.b16 %v1141, %v1141
    %v1206 = vpack.c.b16 %v1142, %v1142
    %v1207 = vpack.c.b16 %v1143, %v1143
    %v1208 = vpack.c.b16 %v1144, %v1144
    %v1209 = vpack.c.b16 %v1145, %v1145
    %v1210 = vpack.c.b16 %v1146, %v1146
    %v1211 = vpack.c.b16 %v1147, %v1147
    %v1212 = vpack.c.b16 %v1148, %v1148
    %v1213 = vpack.c.b16 %v1149, %v1149
    %v1214 = vpack.c.b16 %v1150, %v1150
    %v1215 = vpack.c.b16 %v1151, %v1151
    %v1216 = vpack.c.b16 %v1152, %v1152
    %v1217 = vpack.c.b16 %v1153, %v1153
    %v1218 = vpack.c.b16 %v1154, %v1154
    %1283 = vst [vmem:[#allocation10] sm:$0xf] %v1155
    %1284 = vst [vmem:[#allocation10 + $0x4] sm:$0xf] %v1156
    %1285 = vst [vmem:[#allocation10 + $0x8] sm:$0xf] %v1157
    %1286 = vst [vmem:[#allocation10 + $0xc] sm:$0xf] %v1158
    %1287 = vst [vmem:[#allocation10 + $0x10] sm:$0xf] %v1159
    %1288 = vst [vmem:[#allocation10 + $0x14] sm:$0xf] %v1160
    %1289 = vst [vmem:[#allocation10 + $0x18] sm:$0xf] %v1161
    %1290 = vst [vmem:[#allocation10 + $0x1c] sm:$0xf] %v1162
    %1291 = vst [vmem:[#allocation10 + $0x20] sm:$0xf] %v1163
    %1292 = vst [vmem:[#allocation10 + $0x24] sm:$0xf] %v1164
    %1293 = vst [vmem:[#allocation10 + $0x28] sm:$0xf] %v1165
    %1294 = vst [vmem:[#allocation10 + $0x2c] sm:$0xf] %v1166
    %1295 = vst [vmem:[#allocation10 + $0x30] sm:$0xf] %v1167
    %1296 = vst [vmem:[#allocation10 + $0x34] sm:$0xf] %v1168
    %1297 = vst [vmem:[#allocation10 + $0x38] sm:$0xf] %v1169
    %1298 = vst [vmem:[#allocation10 + $0x3c] sm:$0xf] %v1170
    %1299 = vst [vmem:[#allocation10 + $0x40] sm:$0xf] %v1171
    %1300 = vst [vmem:[#allocation10 + $0x44] sm:$0xf] %v1172
    %1301 = vst [vmem:[#allocation10 + $0x48] sm:$0xf] %v1173
    %1302 = vst [vmem:[#allocation10 + $0x4c] sm:$0xf] %v1174
    %1303 = vst [vmem:[#allocation10 + $0x50] sm:$0xf] %v1175
    %1304 = vst [vmem:[#allocation10 + $0x54] sm:$0xf] %v1176
    %1305 = vst [vmem:[#allocation10 + $0x58] sm:$0xf] %v1177
    %1306 = vst [vmem:[#allocation10 + $0x5c] sm:$0xf] %v1178
    %1307 = vst [vmem:[#allocation10 + $0x60] sm:$0xf] %v1179
    %1308 = vst [vmem:[#allocation10 + $0x64] sm:$0xf] %v1180
    %1309 = vst [vmem:[#allocation10 + $0x68] sm:$0xf] %v1181
    %1310 = vst [vmem:[#allocation10 + $0x6c] sm:$0xf] %v1182
    %1311 = vst [vmem:[#allocation10 + $0x70] sm:$0xf] %v1183
    %1312 = vst [vmem:[#allocation10 + $0x74] sm:$0xf] %v1184
    %1313 = vst [vmem:[#allocation10 + $0x78] sm:$0xf] %v1185
    %1314 = vst [vmem:[#allocation10 + $0x7c] sm:$0xf] %v1186
    %1315 = vst [vmem:[#allocation10 + $0x80] sm:$0xf] %v1187
    %1316 = vst [vmem:[#allocation10 + $0x84] sm:$0xf] %v1188
    %1317 = vst [vmem:[#allocation10 + $0x88] sm:$0xf] %v1189
    %1318 = vst [vmem:[#allocation10 + $0x8c] sm:$0xf] %v1190
    %1319 = vst [vmem:[#allocation10 + $0x90] sm:$0xf] %v1191
    %1320 = vst [vmem:[#allocation10 + $0x94] sm:$0xf] %v1192
    %1321 = vst [vmem:[#allocation10 + $0x98] sm:$0xf] %v1193
    %1322 = vst [vmem:[#allocation10 + $0x9c] sm:$0xf] %v1194
    %1323 = vst [vmem:[#allocation10 + $0xa0] sm:$0xf] %v1195
    %1324 = vst [vmem:[#allocation10 + $0xa4] sm:$0xf] %v1196
    %1325 = vst [vmem:[#allocation10 + $0xa8] sm:$0xf] %v1197
    %1326 = vst [vmem:[#allocation10 + $0xac] sm:$0xf] %v1198
    %1327 = vst [vmem:[#allocation10 + $0xb0] sm:$0xf] %v1199
    %1328 = vst [vmem:[#allocation10 + $0xb4] sm:$0xf] %v1200
    %1329 = vst [vmem:[#allocation10 + $0xb8] sm:$0xf] %v1201
    %1330 = vst [vmem:[#allocation10 + $0xbc] sm:$0xf] %v1202
    %1331 = vst [vmem:[#allocation10 + $0xc0] sm:$0xf] %v1203
    %1332 = vst [vmem:[#allocation10 + $0xc4] sm:$0xf] %v1204
    %1333 = vst [vmem:[#allocation10 + $0xc8] sm:$0xf] %v1205
    %1334 = vst [vmem:[#allocation10 + $0xcc] sm:$0xf] %v1206
    %1335 = vst [vmem:[#allocation10 + $0xd0] sm:$0xf] %v1207
    %1336 = vst [vmem:[#allocation10 + $0xd4] sm:$0xf] %v1208
    %1337 = vst [vmem:[#allocation10 + $0xd8] sm:$0xf] %v1209
    %1338 = vst [vmem:[#allocation10 + $0xdc] sm:$0xf] %v1210
    %1339 = vst [vmem:[#allocation10 + $0xe0] sm:$0xf] %v1211
    %1340 = vst [vmem:[#allocation10 + $0xe4] sm:$0xf] %v1212
    %1341 = vst [vmem:[#allocation10 + $0xe8] sm:$0xf] %v1213
    %1342 = vst [vmem:[#allocation10 + $0xec] sm:$0xf] %v1214
    %1343 = vst [vmem:[#allocation10 + $0xf0] sm:$0xf] %v1215
    %1344 = vst [vmem:[#allocation10 + $0xf4] sm:$0xf] %v1216
    %1345 = vst [vmem:[#allocation10 + $0xf8] sm:$0xf] %v1217
    %1346 = vst [vmem:[#allocation10 + $0xfc] sm:$0xf] %v1218
    %v1347 = vmul.f32 %v711, 0.5
    %v1348 = vmul.f32 %v715, 0.5
    %v1349 = vmul.f32 %v721, 0.5
    %v1350 = vmul.f32 %v725, 0.5
    %v1351 = vmul.f32 %v731, 0.5
    %v1352 = vmul.f32 %v735, 0.5
    %v1353 = vmul.f32 %v741, 0.5
    %v1354 = vmul.f32 %v745, 0.5
    %v1355 = vmul.f32 %v751, 0.5
    %v1356 = vmul.f32 %v755, 0.5
    %v1357 = vmul.f32 %v761, 0.5
    %v1358 = vmul.f32 %v765, 0.5
    %v1359 = vmul.f32 %v771, 0.5
    %v1360 = vmul.f32 %v775, 0.5
    %v1361 = vmul.f32 %v781, 0.5
    %v1362 = vmul.f32 %v785, 0.5
    %v1363 = vmul.f32 %v791, 0.5
    %v1364 = vmul.f32 %v795, 0.5
    %v1365 = vmul.f32 %v801, 0.5
    %v1366 = vmul.f32 %v805, 0.5
    %v1367 = vmul.f32 %v811, 0.5
    %v1368 = vmul.f32 %v815, 0.5
    %v1369 = vmul.f32 %v821, 0.5
    %v1370 = vmul.f32 %v825, 0.5
    %v1371 = vmul.f32 %v831, 0.5
    %v1372 = vmul.f32 %v835, 0.5
    %v1373 = vmul.f32 %v841, 0.5
    %v1374 = vmul.f32 %v845, 0.5
    %v1375 = vmul.f32 %v851, 0.5
    %v1376 = vmul.f32 %v855, 0.5
    %v1377 = vmul.f32 %v861, 0.5
    %v1378 = vmul.f32 %v865, 0.5
    %v1379 = vmul.f32 %v871, 0.5
    %v1380 = vmul.f32 %v875, 0.5
    %v1381 = vmul.f32 %v881, 0.5
    %v1382 = vmul.f32 %v885, 0.5
    %v1383 = vmul.f32 %v891, 0.5
    %v1384 = vmul.f32 %v895, 0.5
    %v1385 = vmul.f32 %v901, 0.5
    %v1386 = vmul.f32 %v905, 0.5
    %v1387 = vmul.f32 %v911, 0.5
    %v1388 = vmul.f32 %v915, 0.5
    %v1389 = vmul.f32 %v921, 0.5
    %v1390 = vmul.f32 %v925, 0.5
    %v1391 = vmul.f32 %v931, 0.5
    %v1392 = vmul.f32 %v935, 0.5
    %v1393 = vmul.f32 %v941, 0.5
    %v1394 = vmul.f32 %v945, 0.5
    %v1395 = vmul.f32 %v951, 0.5
    %v1396 = vmul.f32 %v955, 0.5
    %v1397 = vmul.f32 %v961, 0.5
    %v1398 = vmul.f32 %v965, 0.5
    %v1399 = vmul.f32 %v971, 0.5
    %v1400 = vmul.f32 %v975, 0.5
    %v1401 = vmul.f32 %v981, 0.5
    %v1402 = vmul.f32 %v985, 0.5
    %v1403 = vmul.f32 %v991, 0.5
    %v1404 = vmul.f32 %v995, 0.5
    %v1405 = vmul.f32 %v1001, 0.5
    %v1406 = vmul.f32 %v1005, 0.5
    %v1407 = vmul.f32 %v1011, 0.5
    %v1408 = vmul.f32 %v1015, 0.5
    %v1409 = vmul.f32 %v1021, 0.5
    %v1410 = vmul.f32 %v1025, 0.5
    %v1411 = vmul.f32 %v711, %v711
    %v1412 = vmul.f32 %v715, %v715
    %v1413 = vmul.f32 %v721, %v721
    %v1414 = vmul.f32 %v725, %v725
    %v1415 = vmul.f32 %v731, %v731
    %v1416 = vmul.f32 %v735, %v735
    %v1417 = vmul.f32 %v741, %v741
    %v1418 = vmul.f32 %v745, %v745
    %v1419 = vmul.f32 %v751, %v751
    %v1420 = vmul.f32 %v755, %v755
    %v1421 = vmul.f32 %v761, %v761
    %v1422 = vmul.f32 %v765, %v765
    %v1423 = vmul.f32 %v771, %v771
    %v1424 = vmul.f32 %v775, %v775
    %v1425 = vmul.f32 %v781, %v781
    %v1426 = vmul.f32 %v785, %v785
    %v1427 = vmul.f32 %v791, %v791
    %v1428 = vmul.f32 %v795, %v795
    %v1429 = vmul.f32 %v801, %v801
    %v1430 = vmul.f32 %v805, %v805
    %v1431 = vmul.f32 %v811, %v811
    %v1432 = vmul.f32 %v815, %v815
    %v1433 = vmul.f32 %v821, %v821
    %v1434 = vmul.f32 %v825, %v825
    %v1435 = vmul.f32 %v831, %v831
    %v1436 = vmul.f32 %v835, %v835
    %v1437 = vmul.f32 %v841, %v841
    %v1438 = vmul.f32 %v845, %v845
    %v1439 = vmul.f32 %v851, %v851
    %v1440 = vmul.f32 %v855, %v855
    %v1441 = vmul.f32 %v861, %v861
    %v1442 = vmul.f32 %v865, %v865
    %v1443 = vmul.f32 %v871, %v871
    %v1444 = vmul.f32 %v875, %v875
    %v1445 = vmul.f32 %v881, %v881
    %v1446 = vmul.f32 %v885, %v885
    %v1447 = vmul.f32 %v891, %v891
    %v1448 = vmul.f32 %v895, %v895
    %v1449 = vmul.f32 %v901, %v901
    %v1450 = vmul.f32 %v905, %v905
    %v1451 = vmul.f32 %v911, %v911
    %v1452 = vmul.f32 %v915, %v915
    %v1453 = vmul.f32 %v921, %v921
    %v1454 = vmul.f32 %v925, %v925
    %v1455 = vmul.f32 %v931, %v931
    %v1456 = vmul.f32 %v935, %v935
    %v1457 = vmul.f32 %v941, %v941
    %v1458 = vmul.f32 %v945, %v945
    %v1459 = vmul.f32 %v951, %v951
    %v1460 = vmul.f32 %v955, %v955
    %v1461 = vmul.f32 %v961, %v961
    %v1462 = vmul.f32 %v965, %v965
    %v1463 = vmul.f32 %v971, %v971
    %v1464 = vmul.f32 %v975, %v975
    %v1465 = vmul.f32 %v981, %v981
    %v1466 = vmul.f32 %v985, %v985
    %v1467 = vmul.f32 %v991, %v991
    %v1468 = vmul.f32 %v995, %v995
    %v1469 = vmul.f32 %v1001, %v1001
    %v1470 = vmul.f32 %v1005, %v1005
    %v1471 = vmul.f32 %v1011, %v1011
    %v1472 = vmul.f32 %v1015, %v1015
    %v1473 = vmul.f32 %v1021, %v1021
    %v1474 = vmul.f32 %v1025, %v1025
    %v1475 = vmul.f32 %v1411, %v711
    %v1476 = vmul.f32 %v1412, %v715
    %v1477 = vmul.f32 %v1413, %v721
    %v1478 = vmul.f32 %v1414, %v725
    %v1479 = vmul.f32 %v1415, %v731
    %v1480 = vmul.f32 %v1416, %v735
    %v1481 = vmul.f32 %v1417, %v741
    %v1482 = vmul.f32 %v1418, %v745
    %v1483 = vmul.f32 %v1419, %v751
    %v1484 = vmul.f32 %v1420, %v755
    %v1485 = vmul.f32 %v1421, %v761
    %v1486 = vmul.f32 %v1422, %v765
    %v1487 = vmul.f32 %v1423, %v771
    %v1488 = vmul.f32 %v1424, %v775
    %v1489 = vmul.f32 %v1425, %v781
    %v1490 = vmul.f32 %v1426, %v785
    %v1491 = vmul.f32 %v1427, %v791
    %v1492 = vmul.f32 %v1428, %v795
    %v1493 = vmul.f32 %v1429, %v801
    %v1494 = vmul.f32 %v1430, %v805
    %v1495 = vmul.f32 %v1431, %v811
    %v1496 = vmul.f32 %v1432, %v815
    %v1497 = vmul.f32 %v1433, %v821
    %v1498 = vmul.f32 %v1434, %v825
    %v1499 = vmul.f32 %v1435, %v831
    %v1500 = vmul.f32 %v1436, %v835
    %v1501 = vmul.f32 %v1437, %v841
    %v1502 = vmul.f32 %v1438, %v845
    %v1503 = vmul.f32 %v1439, %v851
    %v1504 = vmul.f32 %v1440, %v855
    %v1505 = vmul.f32 %v1441, %v861
    %v1506 = vmul.f32 %v1442, %v865
    %v1507 = vmul.f32 %v1443, %v871
    %v1508 = vmul.f32 %v1444, %v875
    %v1509 = vmul.f32 %v1445, %v881
    %v1510 = vmul.f32 %v1446, %v885
    %v1511 = vmul.f32 %v1447, %v891
    %v1512 = vmul.f32 %v1448, %v895
    %v1513 = vmul.f32 %v1449, %v901
    %v1514 = vmul.f32 %v1450, %v905
    %v1515 = vmul.f32 %v1451, %v911
    %v1516 = vmul.f32 %v1452, %v915
    %v1517 = vmul.f32 %v1453, %v921
    %v1518 = vmul.f32 %v1454, %v925
    %v1519 = vmul.f32 %v1455, %v931
    %v1520 = vmul.f32 %v1456, %v935
    %v1521 = vmul.f32 %v1457, %v941
    %v1522 = vmul.f32 %v1458, %v945
    %v1523 = vmul.f32 %v1459, %v951
    %v1524 = vmul.f32 %v1460, %v955
    %v1525 = vmul.f32 %v1461, %v961
    %v1526 = vmul.f32 %v1462, %v965
    %v1527 = vmul.f32 %v1463, %v971
    %v1528 = vmul.f32 %v1464, %v975
    %v1529 = vmul.f32 %v1465, %v981
    %v1530 = vmul.f32 %v1466, %v985
    %v1531 = vmul.f32 %v1467, %v991
    %v1532 = vmul.f32 %v1468, %v995
    %v1533 = vmul.f32 %v1469, %v1001
    %v1534 = vmul.f32 %v1470, %v1005
    %v1535 = vmul.f32 %v1471, %v1011
    %v1536 = vmul.f32 %v1472, %v1015
    %v1537 = vmul.f32 %v1473, %v1021
    %v1538 = vmul.f32 %v1474, %v1025
    %v1539 = vmul.f32 %v1475, 0.044715
    %v1540 = vmul.f32 %v1476, 0.044715
    %v1541 = vmul.f32 %v1477, 0.044715
    %v1542 = vmul.f32 %v1478, 0.044715
    %v1543 = vmul.f32 %v1479, 0.044715
    %v1544 = vmul.f32 %v1480, 0.044715
    %v1545 = vmul.f32 %v1481, 0.044715
    %v1546 = vmul.f32 %v1482, 0.044715
    %v1547 = vmul.f32 %v1483, 0.044715
    %v1548 = vmul.f32 %v1484, 0.044715
    %v1549 = vmul.f32 %v1485, 0.044715
    %v1550 = vmul.f32 %v1486, 0.044715
    %v1551 = vmul.f32 %v1487, 0.044715
    %v1552 = vmul.f32 %v1488, 0.044715
    %v1553 = vmul.f32 %v1489, 0.044715
    %v1554 = vmul.f32 %v1490, 0.044715
    %v1555 = vmul.f32 %v1491, 0.044715
    %v1556 = vmul.f32 %v1492, 0.044715
    %v1557 = vmul.f32 %v1493, 0.044715
    %v1558 = vmul.f32 %v1494, 0.044715
    %v1559 = vmul.f32 %v1495, 0.044715
    %v1560 = vmul.f32 %v1496, 0.044715
    %v1561 = vmul.f32 %v1497, 0.044715
    %v1562 = vmul.f32 %v1498, 0.044715
    %v1563 = vmul.f32 %v1499, 0.044715
    %v1564 = vmul.f32 %v1500, 0.044715
    %v1565 = vmul.f32 %v1501, 0.044715
    %v1566 = vmul.f32 %v1502, 0.044715
    %v1567 = vmul.f32 %v1503, 0.044715
    %v1568 = vmul.f32 %v1504, 0.044715
    %v1569 = vmul.f32 %v1505, 0.044715
    %v1570 = vmul.f32 %v1506, 0.044715
    %v1571 = vmul.f32 %v1507, 0.044715
    %v1572 = vmul.f32 %v1508, 0.044715
    %v1573 = vmul.f32 %v1509, 0.044715
    %v1574 = vmul.f32 %v1510, 0.044715
    %v1575 = vmul.f32 %v1511, 0.044715
    %v1576 = vmul.f32 %v1512, 0.044715
    %v1577 = vmul.f32 %v1513, 0.044715
    %v1578 = vmul.f32 %v1514, 0.044715
    %v1579 = vmul.f32 %v1515, 0.044715
    %v1580 = vmul.f32 %v1516, 0.044715
    %v1581 = vmul.f32 %v1517, 0.044715
    %v1582 = vmul.f32 %v1518, 0.044715
    %v1583 = vmul.f32 %v1519, 0.044715
    %v1584 = vmul.f32 %v1520, 0.044715
    %v1585 = vmul.f32 %v1521, 0.044715
    %v1586 = vmul.f32 %v1522, 0.044715
    %v1587 = vmul.f32 %v1523, 0.044715
    %v1588 = vmul.f32 %v1524, 0.044715
    %v1589 = vmul.f32 %v1525, 0.044715
    %v1590 = vmul.f32 %v1526, 0.044715
    %v1591 = vmul.f32 %v1527, 0.044715
    %v1592 = vmul.f32 %v1528, 0.044715
    %v1593 = vmul.f32 %v1529, 0.044715
    %v1594 = vmul.f32 %v1530, 0.044715
    %v1595 = vmul.f32 %v1531, 0.044715
    %v1596 = vmul.f32 %v1532, 0.044715
    %v1597 = vmul.f32 %v1533, 0.044715
    %v1598 = vmul.f32 %v1534, 0.044715
    %v1599 = vmul.f32 %v1535, 0.044715
    %v1600 = vmul.f32 %v1536, 0.044715
    %v1601 = vmul.f32 %v1537, 0.044715
    %v1602 = vmul.f32 %v1538, 0.044715
    %v1603 = vadd.f32 %v711, %v1539
    %v1604 = vadd.f32 %v715, %v1540
    %v1605 = vadd.f32 %v721, %v1541
    %v1606 = vadd.f32 %v725, %v1542
    %v1607 = vadd.f32 %v731, %v1543
    %v1608 = vadd.f32 %v735, %v1544
    %v1609 = vadd.f32 %v741, %v1545
    %v1610 = vadd.f32 %v745, %v1546
    %v1611 = vadd.f32 %v751, %v1547
    %v1612 = vadd.f32 %v755, %v1548
    %v1613 = vadd.f32 %v761, %v1549
    %v1614 = vadd.f32 %v765, %v1550
    %v1615 = vadd.f32 %v771, %v1551
    %v1616 = vadd.f32 %v775, %v1552
    %v1617 = vadd.f32 %v781, %v1553
    %v1618 = vadd.f32 %v785, %v1554
    %v1619 = vadd.f32 %v791, %v1555
    %v1620 = vadd.f32 %v795, %v1556
    %v1621 = vadd.f32 %v801, %v1557
    %v1622 = vadd.f32 %v805, %v1558
    %v1623 = vadd.f32 %v811, %v1559
    %v1624 = vadd.f32 %v815, %v1560
    %v1625 = vadd.f32 %v821, %v1561
    %v1626 = vadd.f32 %v825, %v1562
    %v1627 = vadd.f32 %v831, %v1563
    %v1628 = vadd.f32 %v835, %v1564
    %v1629 = vadd.f32 %v841, %v1565
    %v1630 = vadd.f32 %v845, %v1566
    %v1631 = vadd.f32 %v851, %v1567
    %v1632 = vadd.f32 %v855, %v1568
    %v1633 = vadd.f32 %v861, %v1569
    %v1634 = vadd.f32 %v865, %v1570
    %v1635 = vadd.f32 %v871, %v1571
    %v1636 = vadd.f32 %v875, %v1572
    %v1637 = vadd.f32 %v881, %v1573
    %v1638 = vadd.f32 %v885, %v1574
    %v1639 = vadd.f32 %v891, %v1575
    %v1640 = vadd.f32 %v895, %v1576
    %v1641 = vadd.f32 %v901, %v1577
    %v1642 = vadd.f32 %v905, %v1578
    %v1643 = vadd.f32 %v911, %v1579
    %v1644 = vadd.f32 %v915, %v1580
    %v1645 = vadd.f32 %v921, %v1581
    %v1646 = vadd.f32 %v925, %v1582
    %v1647 = vadd.f32 %v931, %v1583
    %v1648 = vadd.f32 %v935, %v1584
    %v1649 = vadd.f32 %v941, %v1585
    %v1650 = vadd.f32 %v945, %v1586
    %v1651 = vadd.f32 %v951, %v1587
    %v1652 = vadd.f32 %v955, %v1588
    %v1653 = vadd.f32 %v961, %v1589
    %v1654 = vadd.f32 %v965, %v1590
    %v1655 = vadd.f32 %v971, %v1591
    %v1656 = vadd.f32 %v975, %v1592
    %v1657 = vadd.f32 %v981, %v1593
    %v1658 = vadd.f32 %v985, %v1594
    %v1659 = vadd.f32 %v991, %v1595
    %v1660 = vadd.f32 %v995, %v1596
    %v1661 = vadd.f32 %v1001, %v1597
    %v1662 = vadd.f32 %v1005, %v1598
    %v1663 = vadd.f32 %v1011, %v1599
    %v1664 = vadd.f32 %v1015, %v1600
    %v1665 = vadd.f32 %v1021, %v1601
    %v1666 = vadd.f32 %v1025, %v1602
    %v1667 = vmul.f32 %v1603, 0.7978846
    %v1668 = vmul.f32 %v1604, 0.7978846
    %v1669 = vmul.f32 %v1605, 0.7978846
    %v1670 = vmul.f32 %v1606, 0.7978846
    %v1671 = vmul.f32 %v1607, 0.7978846
    %v1672 = vmul.f32 %v1608, 0.7978846
    %v1673 = vmul.f32 %v1609, 0.7978846
    %v1674 = vmul.f32 %v1610, 0.7978846
    %v1675 = vmul.f32 %v1611, 0.7978846
    %v1676 = vmul.f32 %v1612, 0.7978846
    %v1677 = vmul.f32 %v1613, 0.7978846
    %v1678 = vmul.f32 %v1614, 0.7978846
    %v1679 = vmul.f32 %v1615, 0.7978846
    %v1680 = vmul.f32 %v1616, 0.7978846
    %v1681 = vmul.f32 %v1617, 0.7978846
    %v1682 = vmul.f32 %v1618, 0.7978846
    %v1683 = vmul.f32 %v1619, 0.7978846
    %v1684 = vmul.f32 %v1620, 0.7978846
    %v1685 = vmul.f32 %v1621, 0.7978846
    %v1686 = vmul.f32 %v1622, 0.7978846
    %v1687 = vmul.f32 %v1623, 0.7978846
    %v1688 = vmul.f32 %v1624, 0.7978846
    %v1689 = vmul.f32 %v1625, 0.7978846
    %v1690 = vmul.f32 %v1626, 0.7978846
    %v1691 = vmul.f32 %v1627, 0.7978846
    %v1692 = vmul.f32 %v1628, 0.7978846
    %v1693 = vmul.f32 %v1629, 0.7978846
    %v1694 = vmul.f32 %v1630, 0.7978846
    %v1695 = vmul.f32 %v1631, 0.7978846
    %v1696 = vmul.f32 %v1632, 0.7978846
    %v1697 = vmul.f32 %v1633, 0.7978846
    %v1698 = vmul.f32 %v1634, 0.7978846
    %v1699 = vmul.f32 %v1635, 0.7978846
    %v1700 = vmul.f32 %v1636, 0.7978846
    %v1701 = vmul.f32 %v1637, 0.7978846
    %v1702 = vmul.f32 %v1638, 0.7978846
    %v1703 = vmul.f32 %v1639, 0.7978846
    %v1704 = vmul.f32 %v1640, 0.7978846
    %v1705 = vmul.f32 %v1641, 0.7978846
    %v1706 = vmul.f32 %v1642, 0.7978846
    %v1707 = vmul.f32 %v1643, 0.7978846
    %v1708 = vmul.f32 %v1644, 0.7978846
    %v1709 = vmul.f32 %v1645, 0.7978846
    %v1710 = vmul.f32 %v1646, 0.7978846
    %v1711 = vmul.f32 %v1647, 0.7978846
    %v1712 = vmul.f32 %v1648, 0.7978846
    %v1713 = vmul.f32 %v1649, 0.7978846
    %v1714 = vmul.f32 %v1650, 0.7978846
    %v1715 = vmul.f32 %v1651, 0.7978846
    %v1716 = vmul.f32 %v1652, 0.7978846
    %v1717 = vmul.f32 %v1653, 0.7978846
    %v1718 = vmul.f32 %v1654, 0.7978846
    %v1719 = vmul.f32 %v1655, 0.7978846
    %v1720 = vmul.f32 %v1656, 0.7978846
    %v1721 = vmul.f32 %v1657, 0.7978846
    %v1722 = vmul.f32 %v1658, 0.7978846
    %v1723 = vmul.f32 %v1659, 0.7978846
    %v1724 = vmul.f32 %v1660, 0.7978846
    %v1725 = vmul.f32 %v1661, 0.7978846
    %v1726 = vmul.f32 %v1662, 0.7978846
    %v1727 = vmul.f32 %v1663, 0.7978846
    %v1728 = vmul.f32 %v1664, 0.7978846
    %v1729 = vmul.f32 %v1665, 0.7978846
    %v1730 = vmul.f32 %v1666, 0.7978846
    %v1731 = vtanh.pop %v1667
    %v1732 = vtanh.pop %v1668
    %v1733 = vtanh.pop %v1669
    %v1734 = vtanh.pop %v1670
    %v1735 = vtanh.pop %v1671
    %v1736 = vtanh.pop %v1672
    %v1737 = vtanh.pop %v1673
    %v1738 = vtanh.pop %v1674
    %v1739 = vtanh.pop %v1675
    %v1740 = vtanh.pop %v1676
    %v1741 = vtanh.pop %v1677
    %v1742 = vtanh.pop %v1678
    %v1743 = vtanh.pop %v1679
    %v1744 = vtanh.pop %v1680
    %v1745 = vtanh.pop %v1681
    %v1746 = vtanh.pop %v1682
    %v1747 = vtanh.pop %v1683
    %v1748 = vtanh.pop %v1684
    %v1749 = vtanh.pop %v1685
    %v1750 = vtanh.pop %v1686
    %v1751 = vtanh.pop %v1687
    %v1752 = vtanh.pop %v1688
    %v1753 = vtanh.pop %v1689
    %v1754 = vtanh.pop %v1690
    %v1755 = vtanh.pop %v1691
    %v1756 = vtanh.pop %v1692
    %v1757 = vtanh.pop %v1693
    %v1758 = vtanh.pop %v1694
    %v1759 = vtanh.pop %v1695
    %v1760 = vtanh.pop %v1696
    %v1761 = vtanh.pop %v1697
    %v1762 = vtanh.pop %v1698
    %v1763 = vtanh.pop %v1699
    %v1764 = vtanh.pop %v1700
    %v1765 = vtanh.pop %v1701
    %v1766 = vtanh.pop %v1702
    %v1767 = vtanh.pop %v1703
    %v1768 = vtanh.pop %v1704
    %v1769 = vtanh.pop %v1705
    %v1770 = vtanh.pop %v1706
    %v1771 = vtanh.pop %v1707
    %v1772 = vtanh.pop %v1708
    %v1773 = vtanh.pop %v1709
    %v1774 = vtanh.pop %v1710
    %v1775 = vtanh.pop %v1711
    %v1776 = vtanh.pop %v1712
    %v1777 = vtanh.pop %v1713
    %v1778 = vtanh.pop %v1714
    %v1779 = vtanh.pop %v1715
    %v1780 = vtanh.pop %v1716
    %v1781 = vtanh.pop %v1717
    %v1782 = vtanh.pop %v1718
    %v1783 = vtanh.pop %v1719
    %v1784 = vtanh.pop %v1720
    %v1785 = vtanh.pop %v1721
    %v1786 = vtanh.pop %v1722
    %v1787 = vtanh.pop %v1723
    %v1788 = vtanh.pop %v1724
    %v1789 = vtanh.pop %v1725
    %v1790 = vtanh.pop %v1726
    %v1791 = vtanh.pop %v1727
    %v1792 = vtanh.pop %v1728
    %v1793 = vtanh.pop %v1729
    %v1794 = vtanh.pop %v1730
    %v1795 = vadd.f32 %v1731, 1.0
    %v1796 = vadd.f32 %v1732, 1.0
    %v1797 = vadd.f32 %v1733, 1.0
    %v1798 = vadd.f32 %v1734, 1.0
    %v1799 = vadd.f32 %v1735, 1.0
    %v1800 = vadd.f32 %v1736, 1.0
    %v1801 = vadd.f32 %v1737, 1.0
    %v1802 = vadd.f32 %v1738, 1.0
    %v1803 = vadd.f32 %v1739, 1.0
    %v1804 = vadd.f32 %v1740, 1.0
    %v1805 = vadd.f32 %v1741, 1.0
    %v1806 = vadd.f32 %v1742, 1.0
    %v1807 = vadd.f32 %v1743, 1.0
    %v1808 = vadd.f32 %v1744, 1.0
    %v1809 = vadd.f32 %v1745, 1.0
    %v1810 = vadd.f32 %v1746, 1.0
    %v1811 = vadd.f32 %v1747, 1.0
    %v1812 = vadd.f32 %v1748, 1.0
    %v1813 = vadd.f32 %v1749, 1.0
    %v1814 = vadd.f32 %v1750, 1.0
    %v1815 = vadd.f32 %v1751, 1.0
    %v1816 = vadd.f32 %v1752, 1.0
    %v1817 = vadd.f32 %v1753, 1.0
    %v1818 = vadd.f32 %v1754, 1.0
    %v1819 = vadd.f32 %v1755, 1.0
    %v1820 = vadd.f32 %v1756, 1.0
    %v1821 = vadd.f32 %v1757, 1.0
    %v1822 = vadd.f32 %v1758, 1.0
    %v1823 = vadd.f32 %v1759, 1.0
    %v1824 = vadd.f32 %v1760, 1.0
    %v1825 = vadd.f32 %v1761, 1.0
    %v1826 = vadd.f32 %v1762, 1.0
    %v1827 = vadd.f32 %v1763, 1.0
    %v1828 = vadd.f32 %v1764, 1.0
    %v1829 = vadd.f32 %v1765, 1.0
    %v1830 = vadd.f32 %v1766, 1.0
    %v1831 = vadd.f32 %v1767, 1.0
    %v1832 = vadd.f32 %v1768, 1.0
    %v1833 = vadd.f32 %v1769, 1.0
    %v1834 = vadd.f32 %v1770, 1.0
    %v1835 = vadd.f32 %v1771, 1.0
    %v1836 = vadd.f32 %v1772, 1.0
    %v1837 = vadd.f32 %v1773, 1.0
    %v1838 = vadd.f32 %v1774, 1.0
    %v1839 = vadd.f32 %v1775, 1.0
    %v1840 = vadd.f32 %v1776, 1.0
    %v1841 = vadd.f32 %v1777, 1.0
    %v1842 = vadd.f32 %v1778, 1.0
    %v1843 = vadd.f32 %v1779, 1.0
    %v1844 = vadd.f32 %v1780, 1.0
    %v1845 = vadd.f32 %v1781, 1.0
    %v1846 = vadd.f32 %v1782, 1.0
    %v1847 = vadd.f32 %v1783, 1.0
    %v1848 = vadd.f32 %v1784, 1.0
    %v1849 = vadd.f32 %v1785, 1.0
    %v1850 = vadd.f32 %v1786, 1.0
    %v1851 = vadd.f32 %v1787, 1.0
    %v1852 = vadd.f32 %v1788, 1.0
    %v1853 = vadd.f32 %v1789, 1.0
    %v1854 = vadd.f32 %v1790, 1.0
    %v1855 = vadd.f32 %v1791, 1.0
    %v1856 = vadd.f32 %v1792, 1.0
    %v1857 = vadd.f32 %v1793, 1.0
    %v1858 = vadd.f32 %v1794, 1.0
    %v1859 = vmul.f32 %v1347, %v1795
    %v1860 = vmul.f32 %v1348, %v1796
    %v1861 = vmul.f32 %v1349, %v1797
    %v1862 = vmul.f32 %v1350, %v1798
    %v1863 = vmul.f32 %v1351, %v1799
    %v1864 = vmul.f32 %v1352, %v1800
    %v1865 = vmul.f32 %v1353, %v1801
    %v1866 = vmul.f32 %v1354, %v1802
    %v1867 = vmul.f32 %v1355, %v1803
    %v1868 = vmul.f32 %v1356, %v1804
    %v1869 = vmul.f32 %v1357, %v1805
    %v1870 = vmul.f32 %v1358, %v1806
    %v1871 = vmul.f32 %v1359, %v1807
    %v1872 = vmul.f32 %v1360, %v1808
    %v1873 = vmul.f32 %v1361, %v1809
    %v1874 = vmul.f32 %v1362, %v1810
    %v1875 = vmul.f32 %v1363, %v1811
    %v1876 = vmul.f32 %v1364, %v1812
    %v1877 = vmul.f32 %v1365, %v1813
    %v1878 = vmul.f32 %v1366, %v1814
    %v1879 = vmul.f32 %v1367, %v1815
    %v1880 = vmul.f32 %v1368, %v1816
    %v1881 = vmul.f32 %v1369, %v1817
    %v1882 = vmul.f32 %v1370, %v1818
    %v1883 = vmul.f32 %v1371, %v1819
    %v1884 = vmul.f32 %v1372, %v1820
    %v1885 = vmul.f32 %v1373, %v1821
    %v1886 = vmul.f32 %v1374, %v1822
    %v1887 = vmul.f32 %v1375, %v1823
    %v1888 = vmul.f32 %v1376, %v1824
    %v1889 = vmul.f32 %v1377, %v1825
    %v1890 = vmul.f32 %v1378, %v1826
    %v1891 = vmul.f32 %v1379, %v1827
    %v1892 = vmul.f32 %v1380, %v1828
    %v1893 = vmul.f32 %v1381, %v1829
    %v1894 = vmul.f32 %v1382, %v1830
    %v1895 = vmul.f32 %v1383, %v1831
    %v1896 = vmul.f32 %v1384, %v1832
    %v1897 = vmul.f32 %v1385, %v1833
    %v1898 = vmul.f32 %v1386, %v1834
    %v1899 = vmul.f32 %v1387, %v1835
    %v1900 = vmul.f32 %v1388, %v1836
    %v1901 = vmul.f32 %v1389, %v1837
    %v1902 = vmul.f32 %v1390, %v1838
    %v1903 = vmul.f32 %v1391, %v1839
    %v1904 = vmul.f32 %v1392, %v1840
    %v1905 = vmul.f32 %v1393, %v1841
    %v1906 = vmul.f32 %v1394, %v1842
    %v1907 = vmul.f32 %v1395, %v1843
    %v1908 = vmul.f32 %v1396, %v1844
    %v1909 = vmul.f32 %v1397, %v1845
    %v1910 = vmul.f32 %v1398, %v1846
    %v1911 = vmul.f32 %v1399, %v1847
    %v1912 = vmul.f32 %v1400, %v1848
    %v1913 = vmul.f32 %v1401, %v1849
    %v1914 = vmul.f32 %v1402, %v1850
    %v1915 = vmul.f32 %v1403, %v1851
    %v1916 = vmul.f32 %v1404, %v1852
    %v1917 = vmul.f32 %v1405, %v1853
    %v1918 = vmul.f32 %v1406, %v1854
    %v1919 = vmul.f32 %v1407, %v1855
    %v1920 = vmul.f32 %v1408, %v1856
    %v1921 = vmul.f32 %v1409, %v1857
    %v1922 = vmul.f32 %v1410, %v1858
    %v1923 = vpack.c.bf16 %v1860, %v1859
    %v1924 = vpack.c.bf16 %v1862, %v1861
    %v1925 = vpack.c.bf16 %v1864, %v1863
    %v1926 = vpack.c.bf16 %v1866, %v1865
    %v1927 = vpack.c.bf16 %v1868, %v1867
    %v1928 = vpack.c.bf16 %v1870, %v1869
    %v1929 = vpack.c.bf16 %v1872, %v1871
    %v1930 = vpack.c.bf16 %v1874, %v1873
    %v1931 = vpack.c.bf16 %v1876, %v1875
    %v1932 = vpack.c.bf16 %v1878, %v1877
    %v1933 = vpack.c.bf16 %v1880, %v1879
    %v1934 = vpack.c.bf16 %v1882, %v1881
    %v1935 = vpack.c.bf16 %v1884, %v1883
    %v1936 = vpack.c.bf16 %v1886, %v1885
    %v1937 = vpack.c.bf16 %v1888, %v1887
    %v1938 = vpack.c.bf16 %v1890, %v1889
    %v1939 = vpack.c.bf16 %v1892, %v1891
    %v1940 = vpack.c.bf16 %v1894, %v1893
    %v1941 = vpack.c.bf16 %v1896, %v1895
    %v1942 = vpack.c.bf16 %v1898, %v1897
    %v1943 = vpack.c.bf16 %v1900, %v1899
    %v1944 = vpack.c.bf16 %v1902, %v1901
    %v1945 = vpack.c.bf16 %v1904, %v1903
    %v1946 = vpack.c.bf16 %v1906, %v1905
    %v1947 = vpack.c.bf16 %v1908, %v1907
    %v1948 = vpack.c.bf16 %v1910, %v1909
    %v1949 = vpack.c.bf16 %v1912, %v1911
    %v1950 = vpack.c.bf16 %v1914, %v1913
    %v1951 = vpack.c.bf16 %v1916, %v1915
    %v1952 = vpack.c.bf16 %v1918, %v1917
    %v1953 = vpack.c.bf16 %v1920, %v1919
    %v1954 = vpack.c.bf16 %v1922, %v1921
    %v1955 = vld [vmem:[#allocation7] sm:$0xf]
    %v1956 = vld [vmem:[#allocation7 + $0x4] sm:$0xf]
    %v1957 = vld [vmem:[#allocation7 + $0x8] sm:$0xf]
    %v1958 = vld [vmem:[#allocation7 + $0xc] sm:$0xf]
    %v1959 = vld [vmem:[#allocation7 + $0x10] sm:$0xf]
    %v1960 = vld [vmem:[#allocation7 + $0x14] sm:$0xf]
    %v1961 = vld [vmem:[#allocation7 + $0x18] sm:$0xf]
    %v1962 = vld [vmem:[#allocation7 + $0x1c] sm:$0xf]
    %v1963 = vld [vmem:[#allocation7 + $0x20] sm:$0xf]
    %v1964 = vld [vmem:[#allocation7 + $0x24] sm:$0xf]
    %v1965 = vld [vmem:[#allocation7 + $0x28] sm:$0xf]
    %v1966 = vld [vmem:[#allocation7 + $0x2c] sm:$0xf]
    %v1967 = vld [vmem:[#allocation7 + $0x30] sm:$0xf]
    %v1968 = vld [vmem:[#allocation7 + $0x34] sm:$0xf]
    %v1969 = vld [vmem:[#allocation7 + $0x38] sm:$0xf]
    %v1970 = vld [vmem:[#allocation7 + $0x3c] sm:$0xf]
    %v1971 = vld [vmem:[%s4] sm:$0x1]
    %v1973 = vlaneseq
    %v1974 = vshrl.u32 %v1973, 7
    %v1975 = vsub.s32 0, %v1974
    %v1976 = vrot.slane %v1971, %v1975
    %v1994 = vunpack.c.l.b16 %v1955
    %v1995 = vunpack.c.l.b16 %v1956
    %v1996 = vunpack.c.l.b16 %v1957
    %v1997 = vunpack.c.l.b16 %v1958
    %v1998 = vunpack.c.l.b16 %v1959
    %v1999 = vunpack.c.l.b16 %v1960
    %v2000 = vunpack.c.l.b16 %v1961
    %v2001 = vunpack.c.l.b16 %v1962
    %v2002 = vunpack.c.l.b16 %v1963
    %v2003 = vunpack.c.l.b16 %v1964
    %v2004 = vunpack.c.l.b16 %v1965
    %v2005 = vunpack.c.l.b16 %v1966
    %v2006 = vunpack.c.l.b16 %v1967
    %v2007 = vunpack.c.l.b16 %v1968
    %v2008 = vunpack.c.l.b16 %v1969
    %v2009 = vunpack.c.l.b16 %v1970
    %v2010 = vpack.c.b16 %v1995, %v1994
    %v2011 = vpack.c.b16 %v1997, %v1996
    %v2012 = vpack.c.b16 %v1999, %v1998
    %v2013 = vpack.c.b16 %v2001, %v2000
    %v2014 = vpack.c.b16 %v2003, %v2002
    %v2015 = vpack.c.b16 %v2005, %v2004
    %v2016 = vpack.c.b16 %v2007, %v2006
    %v2017 = vpack.c.b16 %v2009, %v2008
    %2026 = vmatprep.subr.bf16.mxu0 0
    %2027 = vmatpush1.bf16.msra.mxu0 %v2017
    %2028 = vmatprep.subr.bf16.mxu0 0
    %2029 = vmatpush1.bf16.msra.mxu0 %v2016
    %2030 = vmatprep.subr.bf16.mxu0 0
    %2031 = vmatpush1.bf16.msra.mxu0 %v2015
    %2032 = vmatprep.subr.bf16.mxu0 0
    %2033 = vmatpush1.bf16.msra.mxu0 %v2014
    %2034 = vmatprep.subr.bf16.mxu0 0
    %2035 = vmatpush1.bf16.msra.mxu0 %v2013
    %2036 = vmatprep.subr.bf16.mxu0 0
    %2037 = vmatpush1.bf16.msra.mxu0 %v2012
    %2038 = vmatprep.subr.bf16.mxu0 0
    %2039 = vmatpush1.bf16.msra.mxu0 %v2011
    %2040 = vmatprep.subr.bf16.mxu0 0
    %2041 = vmatpush1.bf16.msra.mxu0 %v2010
    %2042 = vmatprep.subr.bf16.mxu0 0
    %2043 = vmatpush2.bf16.msra.mxu0 0
    %2044 = vmatprep.subr.bf16.mxu0 0
    %2045 = vmatpush2.bf16.msra.mxu0 0
    %2046 = vmatprep.subr.bf16.mxu0 0
    %2047 = vmatpush2.bf16.msra.mxu0 0
    %2048 = vmatprep.subr.bf16.mxu0 0
    %2049 = vmatpush2.bf16.msra.mxu0 0
    %2050 = vmatprep.subr.bf16.mxu0 0
    %2051 = vmatpush2.bf16.msra.mxu0 0
    %2052 = vmatprep.subr.bf16.mxu0 0
    %2053 = vmatpush2.bf16.msra.mxu0 0
    %2054 = vmatprep.subr.bf16.mxu0 0
    %2055 = vmatpush2.bf16.msra.mxu0 0
    %2056 = vmatprep.subr.bf16.mxu0 0
    %2057 = vmatpush2.bf16.msra.mxu0 0
    %2058 = vmatprep.mubr.bf16.mxu0 0
    %2059 = vmatmul.mubr.bf16.gmra.mxu0 %v1923
    %v2060 = vpop.f32.mrf.mxu0
    %v2061 = vadd.f32 %v1976, %v2060
    %v2062 = vpop.f32.mrf.mxu0
    %v2063 = vpop.f32.mrf.mxu0
    %v2064 = vadd.f32 %v1976, %v2063
    %v2065 = vpop.f32.mrf.mxu0
    %2066 = vmatprep.mubr.bf16.mxu0 0
    %2067 = vmatmul.mubr.bf16.gmra.mxu0 %v1924
    %v2068 = vpop.f32.mrf.mxu0
    %v2069 = vadd.f32 %v1976, %v2068
    %v2070 = vpop.f32.mrf.mxu0
    %v2071 = vpop.f32.mrf.mxu0
    %v2072 = vadd.f32 %v1976, %v2071
    %v2073 = vpop.f32.mrf.mxu0
    %2074 = vmatprep.mubr.bf16.mxu0 0
    %2075 = vmatmul.mubr.bf16.gmra.mxu0 %v1925
    %v2076 = vpop.f32.mrf.mxu0
    %v2077 = vadd.f32 %v1976, %v2076
    %v2078 = vpop.f32.mrf.mxu0
    %v2079 = vpop.f32.mrf.mxu0
    %v2080 = vadd.f32 %v1976, %v2079
    %v2081 = vpop.f32.mrf.mxu0
    %2082 = vmatprep.mubr.bf16.mxu0 0
    %2083 = vmatmul.mubr.bf16.gmra.mxu0 %v1926
    %v2084 = vpop.f32.mrf.mxu0
    %v2085 = vadd.f32 %v1976, %v2084
    %v2086 = vpop.f32.mrf.mxu0
    %v2087 = vpop.f32.mrf.mxu0
    %v2088 = vadd.f32 %v1976, %v2087
    %v2089 = vpop.f32.mrf.mxu0
    %2090 = vmatprep.mubr.bf16.mxu0 0
    %2091 = vmatmul.mubr.bf16.gmra.mxu0 %v1927
    %v2092 = vpop.f32.mrf.mxu0
    %v2093 = vadd.f32 %v1976, %v2092
    %v2094 = vpop.f32.mrf.mxu0
    %v2095 = vpop.f32.mrf.mxu0
    %v2096 = vadd.f32 %v1976, %v2095
    %v2097 = vpop.f32.mrf.mxu0
    %2098 = vmatprep.mubr.bf16.mxu0 0
    %2099 = vmatmul.mubr.bf16.gmra.mxu0 %v1928
    %v2100 = vpop.f32.mrf.mxu0
    %v2101 = vadd.f32 %v1976, %v2100
    %v2102 = vpop.f32.mrf.mxu0
    %v2103 = vpop.f32.mrf.mxu0
    %v2104 = vadd.f32 %v1976, %v2103
    %v2105 = vpop.f32.mrf.mxu0
    %2106 = vmatprep.mubr.bf16.mxu0 0
    %2107 = vmatmul.mubr.bf16.gmra.mxu0 %v1929
    %v2108 = vpop.f32.mrf.mxu0
    %v2109 = vadd.f32 %v1976, %v2108
    %v2110 = vpop.f32.mrf.mxu0
    %v2111 = vpop.f32.mrf.mxu0
    %v2112 = vadd.f32 %v1976, %v2111
    %v2113 = vpop.f32.mrf.mxu0
    %2114 = vmatprep.mubr.bf16.mxu0 0
    %2115 = vmatmul.mubr.bf16.gmra.mxu0 %v1930
    %v2116 = vpop.f32.mrf.mxu0
    %v2117 = vadd.f32 %v1976, %v2116
    %v2118 = vpop.f32.mrf.mxu0
    %v2119 = vpop.f32.mrf.mxu0
    %v2120 = vadd.f32 %v1976, %v2119
    %v2121 = vpop.f32.mrf.mxu0
    %2122 = vmatprep.mubr.bf16.mxu0 0
    %2123 = vmatmul.mubr.bf16.gmra.mxu0 %v1931
    %v2124 = vpop.f32.mrf.mxu0
    %v2125 = vadd.f32 %v1976, %v2124
    %v2126 = vpop.f32.mrf.mxu0
    %v2127 = vpop.f32.mrf.mxu0
    %v2128 = vadd.f32 %v1976, %v2127
    %v2129 = vpop.f32.mrf.mxu0
    %2130 = vmatprep.mubr.bf16.mxu0 0
    %2131 = vmatmul.mubr.bf16.gmra.mxu0 %v1932
    %v2132 = vpop.f32.mrf.mxu0
    %v2133 = vadd.f32 %v1976, %v2132
    %v2134 = vpop.f32.mrf.mxu0
    %v2135 = vpop.f32.mrf.mxu0
    %v2136 = vadd.f32 %v1976, %v2135
    %v2137 = vpop.f32.mrf.mxu0
    %2138 = vmatprep.mubr.bf16.mxu0 0
    %2139 = vmatmul.mubr.bf16.gmra.mxu0 %v1933
    %v2140 = vpop.f32.mrf.mxu0
    %v2141 = vadd.f32 %v1976, %v2140
    %v2142 = vpop.f32.mrf.mxu0
    %v2143 = vpop.f32.mrf.mxu0
    %v2144 = vadd.f32 %v1976, %v2143
    %v2145 = vpop.f32.mrf.mxu0
    %2146 = vmatprep.mubr.bf16.mxu0 0
    %2147 = vmatmul.mubr.bf16.gmra.mxu0 %v1934
    %v2148 = vpop.f32.mrf.mxu0
    %v2149 = vadd.f32 %v1976, %v2148
    %v2150 = vpop.f32.mrf.mxu0
    %v2151 = vpop.f32.mrf.mxu0
    %v2152 = vadd.f32 %v1976, %v2151
    %v2153 = vpop.f32.mrf.mxu0
    %2154 = vmatprep.mubr.bf16.mxu0 0
    %2155 = vmatmul.mubr.bf16.gmra.mxu0 %v1935
    %v2156 = vpop.f32.mrf.mxu0
    %v2157 = vadd.f32 %v1976, %v2156
    %v2158 = vpop.f32.mrf.mxu0
    %v2159 = vpop.f32.mrf.mxu0
    %v2160 = vadd.f32 %v1976, %v2159
    %v2161 = vpop.f32.mrf.mxu0
    %2162 = vmatprep.mubr.bf16.mxu0 0
    %2163 = vmatmul.mubr.bf16.gmra.mxu0 %v1936
    %v2164 = vpop.f32.mrf.mxu0
    %v2165 = vadd.f32 %v1976, %v2164
    %v2166 = vpop.f32.mrf.mxu0
    %v2167 = vpop.f32.mrf.mxu0
    %v2168 = vadd.f32 %v1976, %v2167
    %v2169 = vpop.f32.mrf.mxu0
    %2170 = vmatprep.mubr.bf16.mxu0 0
    %2171 = vmatmul.mubr.bf16.gmra.mxu0 %v1937
    %v2172 = vpop.f32.mrf.mxu0
    %v2173 = vadd.f32 %v1976, %v2172
    %v2174 = vpop.f32.mrf.mxu0
    %v2175 = vpop.f32.mrf.mxu0
    %v2176 = vadd.f32 %v1976, %v2175
    %v2177 = vpop.f32.mrf.mxu0
    %2178 = vmatprep.mubr.bf16.mxu0 0
    %2179 = vmatmul.mubr.bf16.gmra.mxu0 %v1938
    %v2180 = vpop.f32.mrf.mxu0
    %v2181 = vadd.f32 %v1976, %v2180
    %v2182 = vpop.f32.mrf.mxu0
    %v2183 = vpop.f32.mrf.mxu0
    %v2184 = vadd.f32 %v1976, %v2183
    %v2185 = vpop.f32.mrf.mxu0
    %2186 = vmatprep.mubr.bf16.mxu0 0
    %2187 = vmatmul.mubr.bf16.gmra.mxu0 %v1939
    %v2188 = vpop.f32.mrf.mxu0
    %v2189 = vadd.f32 %v1976, %v2188
    %v2190 = vpop.f32.mrf.mxu0
    %v2191 = vpop.f32.mrf.mxu0
    %v2192 = vadd.f32 %v1976, %v2191
    %v2193 = vpop.f32.mrf.mxu0
    %2194 = vmatprep.mubr.bf16.mxu0 0
    %2195 = vmatmul.mubr.bf16.gmra.mxu0 %v1940
    %v2196 = vpop.f32.mrf.mxu0
    %v2197 = vadd.f32 %v1976, %v2196
    %v2198 = vpop.f32.mrf.mxu0
    %v2199 = vpop.f32.mrf.mxu0
    %v2200 = vadd.f32 %v1976, %v2199
    %v2201 = vpop.f32.mrf.mxu0
    %2202 = vmatprep.mubr.bf16.mxu0 0
    %2203 = vmatmul.mubr.bf16.gmra.mxu0 %v1941
    %v2204 = vpop.f32.mrf.mxu0
    %v2205 = vadd.f32 %v1976, %v2204
    %v2206 = vpop.f32.mrf.mxu0
    %v2207 = vpop.f32.mrf.mxu0
    %v2208 = vadd.f32 %v1976, %v2207
    %v2209 = vpop.f32.mrf.mxu0
    %2210 = vmatprep.mubr.bf16.mxu0 0
    %2211 = vmatmul.mubr.bf16.gmra.mxu0 %v1942
    %v2212 = vpop.f32.mrf.mxu0
    %v2213 = vadd.f32 %v1976, %v2212
    %v2214 = vpop.f32.mrf.mxu0
    %v2215 = vpop.f32.mrf.mxu0
    %v2216 = vadd.f32 %v1976, %v2215
    %v2217 = vpop.f32.mrf.mxu0
    %2218 = vmatprep.mubr.bf16.mxu0 0
    %2219 = vmatmul.mubr.bf16.gmra.mxu0 %v1943
    %v2220 = vpop.f32.mrf.mxu0
    %v2221 = vadd.f32 %v1976, %v2220
    %v2222 = vpop.f32.mrf.mxu0
    %v2223 = vpop.f32.mrf.mxu0
    %v2224 = vadd.f32 %v1976, %v2223
    %v2225 = vpop.f32.mrf.mxu0
    %2226 = vmatprep.mubr.bf16.mxu0 0
    %2227 = vmatmul.mubr.bf16.gmra.mxu0 %v1944
    %v2228 = vpop.f32.mrf.mxu0
    %v2229 = vadd.f32 %v1976, %v2228
    %v2230 = vpop.f32.mrf.mxu0
    %v2231 = vpop.f32.mrf.mxu0
    %v2232 = vadd.f32 %v1976, %v2231
    %v2233 = vpop.f32.mrf.mxu0
    %2234 = vmatprep.mubr.bf16.mxu0 0
    %2235 = vmatmul.mubr.bf16.gmra.mxu0 %v1945
    %v2236 = vpop.f32.mrf.mxu0
    %v2237 = vadd.f32 %v1976, %v2236
    %v2238 = vpop.f32.mrf.mxu0
    %v2239 = vpop.f32.mrf.mxu0
    %v2240 = vadd.f32 %v1976, %v2239
    %v2241 = vpop.f32.mrf.mxu0
    %2242 = vmatprep.mubr.bf16.mxu0 0
    %2243 = vmatmul.mubr.bf16.gmra.mxu0 %v1946
    %v2244 = vpop.f32.mrf.mxu0
    %v2245 = vadd.f32 %v1976, %v2244
    %v2246 = vpop.f32.mrf.mxu0
    %v2247 = vpop.f32.mrf.mxu0
    %v2248 = vadd.f32 %v1976, %v2247
    %v2249 = vpop.f32.mrf.mxu0
    %2250 = vmatprep.mubr.bf16.mxu0 0
    %2251 = vmatmul.mubr.bf16.gmra.mxu0 %v1947
    %v2252 = vpop.f32.mrf.mxu0
    %v2253 = vadd.f32 %v1976, %v2252
    %v2254 = vpop.f32.mrf.mxu0
    %v2255 = vpop.f32.mrf.mxu0
    %v2256 = vadd.f32 %v1976, %v2255
    %v2257 = vpop.f32.mrf.mxu0
    %2258 = vmatprep.mubr.bf16.mxu0 0
    %2259 = vmatmul.mubr.bf16.gmra.mxu0 %v1948
    %v2260 = vpop.f32.mrf.mxu0
    %v2261 = vadd.f32 %v1976, %v2260
    %v2262 = vpop.f32.mrf.mxu0
    %v2263 = vpop.f32.mrf.mxu0
    %v2264 = vadd.f32 %v1976, %v2263
    %v2265 = vpop.f32.mrf.mxu0
    %2266 = vmatprep.mubr.bf16.mxu0 0
    %2267 = vmatmul.mubr.bf16.gmra.mxu0 %v1949
    %v2268 = vpop.f32.mrf.mxu0
    %v2269 = vadd.f32 %v1976, %v2268
    %v2270 = vpop.f32.mrf.mxu0
    %v2271 = vpop.f32.mrf.mxu0
    %v2272 = vadd.f32 %v1976, %v2271
    %v2273 = vpop.f32.mrf.mxu0
    %2274 = vmatprep.mubr.bf16.mxu0 0
    %2275 = vmatmul.mubr.bf16.gmra.mxu0 %v1950
    %v2276 = vpop.f32.mrf.mxu0
    %v2277 = vadd.f32 %v1976, %v2276
    %v2278 = vpop.f32.mrf.mxu0
    %v2279 = vpop.f32.mrf.mxu0
    %v2280 = vadd.f32 %v1976, %v2279
    %v2281 = vpop.f32.mrf.mxu0
    %2282 = vmatprep.mubr.bf16.mxu0 0
    %2283 = vmatmul.mubr.bf16.gmra.mxu0 %v1951
    %v2284 = vpop.f32.mrf.mxu0
    %v2285 = vadd.f32 %v1976, %v2284
    %v2286 = vpop.f32.mrf.mxu0
    %v2287 = vpop.f32.mrf.mxu0
    %v2288 = vadd.f32 %v1976, %v2287
    %v2289 = vpop.f32.mrf.mxu0
    %2290 = vmatprep.mubr.bf16.mxu0 0
    %2291 = vmatmul.mubr.bf16.gmra.mxu0 %v1952
    %v2292 = vpop.f32.mrf.mxu0
    %v2293 = vadd.f32 %v1976, %v2292
    %v2294 = vpop.f32.mrf.mxu0
    %v2295 = vpop.f32.mrf.mxu0
    %v2296 = vadd.f32 %v1976, %v2295
    %v2297 = vpop.f32.mrf.mxu0
    %2298 = vmatprep.mubr.bf16.mxu0 0
    %2299 = vmatmul.mubr.bf16.gmra.mxu0 %v1953
    %v2300 = vpop.f32.mrf.mxu0
    %v2301 = vadd.f32 %v1976, %v2300
    %v2302 = vpop.f32.mrf.mxu0
    %v2303 = vpop.f32.mrf.mxu0
    %v2304 = vadd.f32 %v1976, %v2303
    %v2305 = vpop.f32.mrf.mxu0
    %2306 = vmatprep.mubr.bf16.mxu0 0
    %2307 = vmatmul.mubr.bf16.gmra.mxu0 %v1954
    %v2308 = vpop.f32.mrf.mxu0
    %v2309 = vadd.f32 %v1976, %v2308
    %v2310 = vpop.f32.mrf.mxu0
    %v2311 = vpop.f32.mrf.mxu0
    %v2312 = vadd.f32 %v1976, %v2311
    %v2313 = vpop.f32.mrf.mxu0
    %2314 = vdwg.mxu0
    %v2315 = vmul.f32 %v2061, 0.5
    %v2316 = vmul.f32 %v2064, 0.5
    %v2317 = vmul.f32 %v2069, 0.5
    %v2318 = vmul.f32 %v2072, 0.5
    %v2319 = vmul.f32 %v2077, 0.5
    %v2320 = vmul.f32 %v2080, 0.5
    %v2321 = vmul.f32 %v2085, 0.5
    %v2322 = vmul.f32 %v2088, 0.5
    %v2323 = vmul.f32 %v2093, 0.5
    %v2324 = vmul.f32 %v2096, 0.5
    %v2325 = vmul.f32 %v2101, 0.5
    %v2326 = vmul.f32 %v2104, 0.5
    %v2327 = vmul.f32 %v2109, 0.5
    %v2328 = vmul.f32 %v2112, 0.5
    %v2329 = vmul.f32 %v2117, 0.5
    %v2330 = vmul.f32 %v2120, 0.5
    %v2331 = vmul.f32 %v2125, 0.5
    %v2332 = vmul.f32 %v2128, 0.5
    %v2333 = vmul.f32 %v2133, 0.5
    %v2334 = vmul.f32 %v2136, 0.5
    %v2335 = vmul.f32 %v2141, 0.5
    %v2336 = vmul.f32 %v2144, 0.5
    %v2337 = vmul.f32 %v2149, 0.5
    %v2338 = vmul.f32 %v2152, 0.5
    %v2339 = vmul.f32 %v2157, 0.5
    %v2340 = vmul.f32 %v2160, 0.5
    %v2341 = vmul.f32 %v2165, 0.5
    %v2342 = vmul.f32 %v2168, 0.5
    %v2343 = vmul.f32 %v2173, 0.5
    %v2344 = vmul.f32 %v2176, 0.5
    %v2345 = vmul.f32 %v2181, 0.5
    %v2346 = vmul.f32 %v2184, 0.5
    %v2347 = vmul.f32 %v2189, 0.5
    %v2348 = vmul.f32 %v2192, 0.5
    %v2349 = vmul.f32 %v2197, 0.5
    %v2350 = vmul.f32 %v2200, 0.5
    %v2351 = vmul.f32 %v2205, 0.5
    %v2352 = vmul.f32 %v2208, 0.5
    %v2353 = vmul.f32 %v2213, 0.5
    %v2354 = vmul.f32 %v2216, 0.5
    %v2355 = vmul.f32 %v2221, 0.5
    %v2356 = vmul.f32 %v2224, 0.5
    %v2357 = vmul.f32 %v2229, 0.5
    %v2358 = vmul.f32 %v2232, 0.5
    %v2359 = vmul.f32 %v2237, 0.5
    %v2360 = vmul.f32 %v2240, 0.5
    %v2361 = vmul.f32 %v2245, 0.5
    %v2362 = vmul.f32 %v2248, 0.5
    %v2363 = vmul.f32 %v2253, 0.5
    %v2364 = vmul.f32 %v2256, 0.5
    %v2365 = vmul.f32 %v2261, 0.5
    %v2366 = vmul.f32 %v2264, 0.5
    %v2367 = vmul.f32 %v2269, 0.5
    %v2368 = vmul.f32 %v2272, 0.5
    %v2369 = vmul.f32 %v2277, 0.5
    %v2370 = vmul.f32 %v2280, 0.5
    %v2371 = vmul.f32 %v2285, 0.5
    %v2372 = vmul.f32 %v2288, 0.5
    %v2373 = vmul.f32 %v2293, 0.5
    %v2374 = vmul.f32 %v2296, 0.5
    %v2375 = vmul.f32 %v2301, 0.5
    %v2376 = vmul.f32 %v2304, 0.5
    %v2377 = vmul.f32 %v2309, 0.5
    %v2378 = vmul.f32 %v2312, 0.5
    %v2379 = vmul.f32 %v2061, %v2061
    %v2380 = vmul.f32 %v2064, %v2064
    %v2381 = vmul.f32 %v2069, %v2069
    %v2382 = vmul.f32 %v2072, %v2072
    %v2383 = vmul.f32 %v2077, %v2077
    %v2384 = vmul.f32 %v2080, %v2080
    %v2385 = vmul.f32 %v2085, %v2085
    %v2386 = vmul.f32 %v2088, %v2088
    %v2387 = vmul.f32 %v2093, %v2093
    %v2388 = vmul.f32 %v2096, %v2096
    %v2389 = vmul.f32 %v2101, %v2101
    %v2390 = vmul.f32 %v2104, %v2104
    %v2391 = vmul.f32 %v2109, %v2109
    %v2392 = vmul.f32 %v2112, %v2112
    %v2393 = vmul.f32 %v2117, %v2117
    %v2394 = vmul.f32 %v2120, %v2120
    %v2395 = vmul.f32 %v2125, %v2125
    %v2396 = vmul.f32 %v2128, %v2128
    %v2397 = vmul.f32 %v2133, %v2133
    %v2398 = vmul.f32 %v2136, %v2136
    %v2399 = vmul.f32 %v2141, %v2141
    %v2400 = vmul.f32 %v2144, %v2144
    %v2401 = vmul.f32 %v2149, %v2149
    %v2402 = vmul.f32 %v2152, %v2152
    %v2403 = vmul.f32 %v2157, %v2157
    %v2404 = vmul.f32 %v2160, %v2160
    %v2405 = vmul.f32 %v2165, %v2165
    %v2406 = vmul.f32 %v2168, %v2168
    %v2407 = vmul.f32 %v2173, %v2173
    %v2408 = vmul.f32 %v2176, %v2176
    %v2409 = vmul.f32 %v2181, %v2181
    %v2410 = vmul.f32 %v2184, %v2184
    %v2411 = vmul.f32 %v2189, %v2189
    %v2412 = vmul.f32 %v2192, %v2192
    %v2413 = vmul.f32 %v2197, %v2197
    %v2414 = vmul.f32 %v2200, %v2200
    %v2415 = vmul.f32 %v2205, %v2205
    %v2416 = vmul.f32 %v2208, %v2208
    %v2417 = vmul.f32 %v2213, %v2213
    %v2418 = vmul.f32 %v2216, %v2216
    %v2419 = vmul.f32 %v2221, %v2221
    %v2420 = vmul.f32 %v2224, %v2224
    %v2421 = vmul.f32 %v2229, %v2229
    %v2422 = vmul.f32 %v2232, %v2232
    %v2423 = vmul.f32 %v2237, %v2237
    %v2424 = vmul.f32 %v2240, %v2240
    %v2425 = vmul.f32 %v2245, %v2245
    %v2426 = vmul.f32 %v2248, %v2248
    %v2427 = vmul.f32 %v2253, %v2253
    %v2428 = vmul.f32 %v2256, %v2256
    %v2429 = vmul.f32 %v2261, %v2261
    %v2430 = vmul.f32 %v2264, %v2264
    %v2431 = vmul.f32 %v2269, %v2269
    %v2432 = vmul.f32 %v2272, %v2272
    %v2433 = vmul.f32 %v2277, %v2277
    %v2434 = vmul.f32 %v2280, %v2280
    %v2435 = vmul.f32 %v2285, %v2285
    %v2436 = vmul.f32 %v2288, %v2288
    %v2437 = vmul.f32 %v2293, %v2293
    %v2438 = vmul.f32 %v2296, %v2296
    %v2439 = vmul.f32 %v2301, %v2301
    %v2440 = vmul.f32 %v2304, %v2304
    %v2441 = vmul.f32 %v2309, %v2309
    %v2442 = vmul.f32 %v2312, %v2312
    %v2443 = vmul.f32 %v2379, %v2061
    %v2444 = vmul.f32 %v2380, %v2064
    %v2445 = vmul.f32 %v2381, %v2069
    %v2446 = vmul.f32 %v2382, %v2072
    %v2447 = vmul.f32 %v2383, %v2077
    %v2448 = vmul.f32 %v2384, %v2080
    %v2449 = vmul.f32 %v2385, %v2085
    %v2450 = vmul.f32 %v2386, %v2088
    %v2451 = vmul.f32 %v2387, %v2093
    %v2452 = vmul.f32 %v2388, %v2096
    %v2453 = vmul.f32 %v2389, %v2101
    %v2454 = vmul.f32 %v2390, %v2104
    %v2455 = vmul.f32 %v2391, %v2109
    %v2456 = vmul.f32 %v2392, %v2112
    %v2457 = vmul.f32 %v2393, %v2117
    %v2458 = vmul.f32 %v2394, %v2120
    %v2459 = vmul.f32 %v2395, %v2125
    %v2460 = vmul.f32 %v2396, %v2128
    %v2461 = vmul.f32 %v2397, %v2133
    %v2462 = vmul.f32 %v2398, %v2136
    %v2463 = vmul.f32 %v2399, %v2141
    %v2464 = vmul.f32 %v2400, %v2144
    %v2465 = vmul.f32 %v2401, %v2149
    %v2466 = vmul.f32 %v2402, %v2152
    %v2467 = vmul.f32 %v2403, %v2157
    %v2468 = vmul.f32 %v2404, %v2160
    %v2469 = vmul.f32 %v2405, %v2165
    %v2470 = vmul.f32 %v2406, %v2168
    %v2471 = vmul.f32 %v2407, %v2173
    %v2472 = vmul.f32 %v2408, %v2176
    %v2473 = vmul.f32 %v2409, %v2181
    %v2474 = vmul.f32 %v2410, %v2184
    %v2475 = vmul.f32 %v2411, %v2189
    %v2476 = vmul.f32 %v2412, %v2192
    %v2477 = vmul.f32 %v2413, %v2197
    %v2478 = vmul.f32 %v2414, %v2200
    %v2479 = vmul.f32 %v2415, %v2205
    %v2480 = vmul.f32 %v2416, %v2208
    %v2481 = vmul.f32 %v2417, %v2213
    %v2482 = vmul.f32 %v2418, %v2216
    %v2483 = vmul.f32 %v2419, %v2221
    %v2484 = vmul.f32 %v2420, %v2224
    %v2485 = vmul.f32 %v2421, %v2229
    %v2486 = vmul.f32 %v2422, %v2232
    %v2487 = vmul.f32 %v2423, %v2237
    %v2488 = vmul.f32 %v2424, %v2240
    %v2489 = vmul.f32 %v2425, %v2245
    %v2490 = vmul.f32 %v2426, %v2248
    %v2491 = vmul.f32 %v2427, %v2253
    %v2492 = vmul.f32 %v2428, %v2256
    %v2493 = vmul.f32 %v2429, %v2261
    %v2494 = vmul.f32 %v2430, %v2264
    %v2495 = vmul.f32 %v2431, %v2269
    %v2496 = vmul.f32 %v2432, %v2272
    %v2497 = vmul.f32 %v2433, %v2277
    %v2498 = vmul.f32 %v2434, %v2280
    %v2499 = vmul.f32 %v2435, %v2285
    %v2500 = vmul.f32 %v2436, %v2288
    %v2501 = vmul.f32 %v2437, %v2293
    %v2502 = vmul.f32 %v2438, %v2296
    %v2503 = vmul.f32 %v2439, %v2301
    %v2504 = vmul.f32 %v2440, %v2304
    %v2505 = vmul.f32 %v2441, %v2309
    %v2506 = vmul.f32 %v2442, %v2312
    %v2507 = vmul.f32 %v2443, 0.044715
    %v2508 = vmul.f32 %v2444, 0.044715
    %v2509 = vmul.f32 %v2445, 0.044715
    %v2510 = vmul.f32 %v2446, 0.044715
    %v2511 = vmul.f32 %v2447, 0.044715
    %v2512 = vmul.f32 %v2448, 0.044715
    %v2513 = vmul.f32 %v2449, 0.044715
    %v2514 = vmul.f32 %v2450, 0.044715
    %v2515 = vmul.f32 %v2451, 0.044715
    %v2516 = vmul.f32 %v2452, 0.044715
    %v2517 = vmul.f32 %v2453, 0.044715
    %v2518 = vmul.f32 %v2454, 0.044715
    %v2519 = vmul.f32 %v2455, 0.044715
    %v2520 = vmul.f32 %v2456, 0.044715
    %v2521 = vmul.f32 %v2457, 0.044715
    %v2522 = vmul.f32 %v2458, 0.044715
    %v2523 = vmul.f32 %v2459, 0.044715
    %v2524 = vmul.f32 %v2460, 0.044715
    %v2525 = vmul.f32 %v2461, 0.044715
    %v2526 = vmul.f32 %v2462, 0.044715
    %v2527 = vmul.f32 %v2463, 0.044715
    %v2528 = vmul.f32 %v2464, 0.044715
    %v2529 = vmul.f32 %v2465, 0.044715
    %v2530 = vmul.f32 %v2466, 0.044715
    %v2531 = vmul.f32 %v2467, 0.044715
    %v2532 = vmul.f32 %v2468, 0.044715
    %v2533 = vmul.f32 %v2469, 0.044715
    %v2534 = vmul.f32 %v2470, 0.044715
    %v2535 = vmul.f32 %v2471, 0.044715
    %v2536 = vmul.f32 %v2472, 0.044715
    %v2537 = vmul.f32 %v2473, 0.044715
    %v2538 = vmul.f32 %v2474, 0.044715
    %v2539 = vmul.f32 %v2475, 0.044715
    %v2540 = vmul.f32 %v2476, 0.044715
    %v2541 = vmul.f32 %v2477, 0.044715
    %v2542 = vmul.f32 %v2478, 0.044715
    %v2543 = vmul.f32 %v2479, 0.044715
    %v2544 = vmul.f32 %v2480, 0.044715
    %v2545 = vmul.f32 %v2481, 0.044715
    %v2546 = vmul.f32 %v2482, 0.044715
    %v2547 = vmul.f32 %v2483, 0.044715
    %v2548 = vmul.f32 %v2484, 0.044715
    %v2549 = vmul.f32 %v2485, 0.044715
    %v2550 = vmul.f32 %v2486, 0.044715
    %v2551 = vmul.f32 %v2487, 0.044715
    %v2552 = vmul.f32 %v2488, 0.044715
    %v2553 = vmul.f32 %v2489, 0.044715
    %v2554 = vmul.f32 %v2490, 0.044715
    %v2555 = vmul.f32 %v2491, 0.044715
    %v2556 = vmul.f32 %v2492, 0.044715
    %v2557 = vmul.f32 %v2493, 0.044715
    %v2558 = vmul.f32 %v2494, 0.044715
    %v2559 = vmul.f32 %v2495, 0.044715
    %v2560 = vmul.f32 %v2496, 0.044715
    %v2561 = vmul.f32 %v2497, 0.044715
    %v2562 = vmul.f32 %v2498, 0.044715
    %v2563 = vmul.f32 %v2499, 0.044715
    %v2564 = vmul.f32 %v2500, 0.044715
    %v2565 = vmul.f32 %v2501, 0.044715
    %v2566 = vmul.f32 %v2502, 0.044715
    %v2567 = vmul.f32 %v2503, 0.044715
    %v2568 = vmul.f32 %v2504, 0.044715
    %v2569 = vmul.f32 %v2505, 0.044715
    %v2570 = vmul.f32 %v2506, 0.044715
    %v2571 = vadd.f32 %v2061, %v2507
    %v2572 = vadd.f32 %v2064, %v2508
    %v2573 = vadd.f32 %v2069, %v2509
    %v2574 = vadd.f32 %v2072, %v2510
    %v2575 = vadd.f32 %v2077, %v2511
    %v2576 = vadd.f32 %v2080, %v2512
    %v2577 = vadd.f32 %v2085, %v2513
    %v2578 = vadd.f32 %v2088, %v2514
    %v2579 = vadd.f32 %v2093, %v2515
    %v2580 = vadd.f32 %v2096, %v2516
    %v2581 = vadd.f32 %v2101, %v2517
    %v2582 = vadd.f32 %v2104, %v2518
    %v2583 = vadd.f32 %v2109, %v2519
    %v2584 = vadd.f32 %v2112, %v2520
    %v2585 = vadd.f32 %v2117, %v2521
    %v2586 = vadd.f32 %v2120, %v2522
    %v2587 = vadd.f32 %v2125, %v2523
    %v2588 = vadd.f32 %v2128, %v2524
    %v2589 = vadd.f32 %v2133, %v2525
    %v2590 = vadd.f32 %v2136, %v2526
    %v2591 = vadd.f32 %v2141, %v2527
    %v2592 = vadd.f32 %v2144, %v2528
    %v2593 = vadd.f32 %v2149, %v2529
    %v2594 = vadd.f32 %v2152, %v2530
    %v2595 = vadd.f32 %v2157, %v2531
    %v2596 = vadd.f32 %v2160, %v2532
    %v2597 = vadd.f32 %v2165, %v2533
    %v2598 = vadd.f32 %v2168, %v2534
    %v2599 = vadd.f32 %v2173, %v2535
    %v2600 = vadd.f32 %v2176, %v2536
    %v2601 = vadd.f32 %v2181, %v2537
    %v2602 = vadd.f32 %v2184, %v2538
    %v2603 = vadd.f32 %v2189, %v2539
    %v2604 = vadd.f32 %v2192, %v2540
    %v2605 = vadd.f32 %v2197, %v2541
    %v2606 = vadd.f32 %v2200, %v2542
    %v2607 = vadd.f32 %v2205, %v2543
    %v2608 = vadd.f32 %v2208, %v2544
    %v2609 = vadd.f32 %v2213, %v2545
    %v2610 = vadd.f32 %v2216, %v2546
    %v2611 = vadd.f32 %v2221, %v2547
    %v2612 = vadd.f32 %v2224, %v2548
    %v2613 = vadd.f32 %v2229, %v2549
    %v2614 = vadd.f32 %v2232, %v2550
    %v2615 = vadd.f32 %v2237, %v2551
    %v2616 = vadd.f32 %v2240, %v2552
    %v2617 = vadd.f32 %v2245, %v2553
    %v2618 = vadd.f32 %v2248, %v2554
    %v2619 = vadd.f32 %v2253, %v2555
    %v2620 = vadd.f32 %v2256, %v2556
    %v2621 = vadd.f32 %v2261, %v2557
    %v2622 = vadd.f32 %v2264, %v2558
    %v2623 = vadd.f32 %v2269, %v2559
    %v2624 = vadd.f32 %v2272, %v2560
    %v2625 = vadd.f32 %v2277, %v2561
    %v2626 = vadd.f32 %v2280, %v2562
    %v2627 = vadd.f32 %v2285, %v2563
    %v2628 = vadd.f32 %v2288, %v2564
    %v2629 = vadd.f32 %v2293, %v2565
    %v2630 = vadd.f32 %v2296, %v2566
    %v2631 = vadd.f32 %v2301, %v2567
    %v2632 = vadd.f32 %v2304, %v2568
    %v2633 = vadd.f32 %v2309, %v2569
    %v2634 = vadd.f32 %v2312, %v2570
    %v2635 = vmul.f32 %v2571, 0.7978846
    %v2636 = vmul.f32 %v2572, 0.7978846
    %v2637 = vmul.f32 %v2573, 0.7978846
    %v2638 = vmul.f32 %v2574, 0.7978846
    %v2639 = vmul.f32 %v2575, 0.7978846
    %v2640 = vmul.f32 %v2576, 0.7978846
    %v2641 = vmul.f32 %v2577, 0.7978846
    %v2642 = vmul.f32 %v2578, 0.7978846
    %v2643 = vmul.f32 %v2579, 0.7978846
    %v2644 = vmul.f32 %v2580, 0.7978846
    %v2645 = vmul.f32 %v2581, 0.7978846
    %v2646 = vmul.f32 %v2582, 0.7978846
    %v2647 = vmul.f32 %v2583, 0.7978846
    %v2648 = vmul.f32 %v2584, 0.7978846
    %v2649 = vmul.f32 %v2585, 0.7978846
    %v2650 = vmul.f32 %v2586, 0.7978846
    %v2651 = vmul.f32 %v2587, 0.7978846
    %v2652 = vmul.f32 %v2588, 0.7978846
    %v2653 = vmul.f32 %v2589, 0.7978846
    %v2654 = vmul.f32 %v2590, 0.7978846
    %v2655 = vmul.f32 %v2591, 0.7978846
    %v2656 = vmul.f32 %v2592, 0.7978846
    %v2657 = vmul.f32 %v2593, 0.7978846
    %v2658 = vmul.f32 %v2594, 0.7978846
    %v2659 = vmul.f32 %v2595, 0.7978846
    %v2660 = vmul.f32 %v2596, 0.7978846
    %v2661 = vmul.f32 %v2597, 0.7978846
    %v2662 = vmul.f32 %v2598, 0.7978846
    %v2663 = vmul.f32 %v2599, 0.7978846
    %v2664 = vmul.f32 %v2600, 0.7978846
    %v2665 = vmul.f32 %v2601, 0.7978846
    %v2666 = vmul.f32 %v2602, 0.7978846
    %v2667 = vmul.f32 %v2603, 0.7978846
    %v2668 = vmul.f32 %v2604, 0.7978846
    %v2669 = vmul.f32 %v2605, 0.7978846
    %v2670 = vmul.f32 %v2606, 0.7978846
    %v2671 = vmul.f32 %v2607, 0.7978846
    %v2672 = vmul.f32 %v2608, 0.7978846
    %v2673 = vmul.f32 %v2609, 0.7978846
    %v2674 = vmul.f32 %v2610, 0.7978846
    %v2675 = vmul.f32 %v2611, 0.7978846
    %v2676 = vmul.f32 %v2612, 0.7978846
    %v2677 = vmul.f32 %v2613, 0.7978846
    %v2678 = vmul.f32 %v2614, 0.7978846
    %v2679 = vmul.f32 %v2615, 0.7978846
    %v2680 = vmul.f32 %v2616, 0.7978846
    %v2681 = vmul.f32 %v2617, 0.7978846
    %v2682 = vmul.f32 %v2618, 0.7978846
    %v2683 = vmul.f32 %v2619, 0.7978846
    %v2684 = vmul.f32 %v2620, 0.7978846
    %v2685 = vmul.f32 %v2621, 0.7978846
    %v2686 = vmul.f32 %v2622, 0.7978846
    %v2687 = vmul.f32 %v2623, 0.7978846
    %v2688 = vmul.f32 %v2624, 0.7978846
    %v2689 = vmul.f32 %v2625, 0.7978846
    %v2690 = vmul.f32 %v2626, 0.7978846
    %v2691 = vmul.f32 %v2627, 0.7978846
    %v2692 = vmul.f32 %v2628, 0.7978846
    %v2693 = vmul.f32 %v2629, 0.7978846
    %v2694 = vmul.f32 %v2630, 0.7978846
    %v2695 = vmul.f32 %v2631, 0.7978846
    %v2696 = vmul.f32 %v2632, 0.7978846
    %v2697 = vmul.f32 %v2633, 0.7978846
    %v2698 = vmul.f32 %v2634, 0.7978846
    %v2699 = vtanh.pop %v2635
    %v2700 = vtanh.pop %v2636
    %v2701 = vtanh.pop %v2637
    %v2702 = vtanh.pop %v2638
    %v2703 = vtanh.pop %v2639
    %v2704 = vtanh.pop %v2640
    %v2705 = vtanh.pop %v2641
    %v2706 = vtanh.pop %v2642
    %v2707 = vtanh.pop %v2643
    %v2708 = vtanh.pop %v2644
    %v2709 = vtanh.pop %v2645
    %v2710 = vtanh.pop %v2646
    %v2711 = vtanh.pop %v2647
    %v2712 = vtanh.pop %v2648
    %v2713 = vtanh.pop %v2649
    %v2714 = vtanh.pop %v2650
    %v2715 = vtanh.pop %v2651
    %v2716 = vtanh.pop %v2652
    %v2717 = vtanh.pop %v2653
    %v2718 = vtanh.pop %v2654
    %v2719 = vtanh.pop %v2655
    %v2720 = vtanh.pop %v2656
    %v2721 = vtanh.pop %v2657
    %v2722 = vtanh.pop %v2658
    %v2723 = vtanh.pop %v2659
    %v2724 = vtanh.pop %v2660
    %v2725 = vtanh.pop %v2661
    %v2726 = vtanh.pop %v2662
    %v2727 = vtanh.pop %v2663
    %v2728 = vtanh.pop %v2664
    %v2729 = vtanh.pop %v2665
    %v2730 = vtanh.pop %v2666
    %v2731 = vtanh.pop %v2667
    %v2732 = vtanh.pop %v2668
    %v2733 = vtanh.pop %v2669
    %v2734 = vtanh.pop %v2670
    %v2735 = vtanh.pop %v2671
    %v2736 = vtanh.pop %v2672
    %v2737 = vtanh.pop %v2673
    %v2738 = vtanh.pop %v2674
    %v2739 = vtanh.pop %v2675
    %v2740 = vtanh.pop %v2676
    %v2741 = vtanh.pop %v2677
    %v2742 = vtanh.pop %v2678
    %v2743 = vtanh.pop %v2679
    %v2744 = vtanh.pop %v2680
    %v2745 = vtanh.pop %v2681
    %v2746 = vtanh.pop %v2682
    %v2747 = vtanh.pop %v2683
    %v2748 = vtanh.pop %v2684
    %v2749 = vtanh.pop %v2685
    %v2750 = vtanh.pop %v2686
    %v2751 = vtanh.pop %v2687
    %v2752 = vtanh.pop %v2688
    %v2753 = vtanh.pop %v2689
    %v2754 = vtanh.pop %v2690
    %v2755 = vtanh.pop %v2691
    %v2756 = vtanh.pop %v2692
    %v2757 = vtanh.pop %v2693
    %v2758 = vtanh.pop %v2694
    %v2759 = vtanh.pop %v2695
    %v2760 = vtanh.pop %v2696
    %v2761 = vtanh.pop %v2697
    %v2762 = vtanh.pop %v2698
    %v2763 = vadd.f32 %v2699, 1.0
    %v2764 = vadd.f32 %v2700, 1.0
    %v2765 = vadd.f32 %v2701, 1.0
    %v2766 = vadd.f32 %v2702, 1.0
    %v2767 = vadd.f32 %v2703, 1.0
    %v2768 = vadd.f32 %v2704, 1.0
    %v2769 = vadd.f32 %v2705, 1.0
    %v2770 = vadd.f32 %v2706, 1.0
    %v2771 = vadd.f32 %v2707, 1.0
    %v2772 = vadd.f32 %v2708, 1.0
    %v2773 = vadd.f32 %v2709, 1.0
    %v2774 = vadd.f32 %v2710, 1.0
    %v2775 = vadd.f32 %v2711, 1.0
    %v2776 = vadd.f32 %v2712, 1.0
    %v2777 = vadd.f32 %v2713, 1.0
    %v2778 = vadd.f32 %v2714, 1.0
    %v2779 = vadd.f32 %v2715, 1.0
    %v2780 = vadd.f32 %v2716, 1.0
    %v2781 = vadd.f32 %v2717, 1.0
    %v2782 = vadd.f32 %v2718, 1.0
    %v2783 = vadd.f32 %v2719, 1.0
    %v2784 = vadd.f32 %v2720, 1.0
    %v2785 = vadd.f32 %v2721, 1.0
    %v2786 = vadd.f32 %v2722, 1.0
    %v2787 = vadd.f32 %v2723, 1.0
    %v2788 = vadd.f32 %v2724, 1.0
    %v2789 = vadd.f32 %v2725, 1.0
    %v2790 = vadd.f32 %v2726, 1.0
    %v2791 = vadd.f32 %v2727, 1.0
    %v2792 = vadd.f32 %v2728, 1.0
    %v2793 = vadd.f32 %v2729, 1.0
    %v2794 = vadd.f32 %v2730, 1.0
    %v2795 = vadd.f32 %v2731, 1.0
    %v2796 = vadd.f32 %v2732, 1.0
    %v2797 = vadd.f32 %v2733, 1.0
    %v2798 = vadd.f32 %v2734, 1.0
    %v2799 = vadd.f32 %v2735, 1.0
    %v2800 = vadd.f32 %v2736, 1.0
    %v2801 = vadd.f32 %v2737, 1.0
    %v2802 = vadd.f32 %v2738, 1.0
    %v2803 = vadd.f32 %v2739, 1.0
    %v2804 = vadd.f32 %v2740, 1.0
    %v2805 = vadd.f32 %v2741, 1.0
    %v2806 = vadd.f32 %v2742, 1.0
    %v2807 = vadd.f32 %v2743, 1.0
    %v2808 = vadd.f32 %v2744, 1.0
    %v2809 = vadd.f32 %v2745, 1.0
    %v2810 = vadd.f32 %v2746, 1.0
    %v2811 = vadd.f32 %v2747, 1.0
    %v2812 = vadd.f32 %v2748, 1.0
    %v2813 = vadd.f32 %v2749, 1.0
    %v2814 = vadd.f32 %v2750, 1.0
    %v2815 = vadd.f32 %v2751, 1.0
    %v2816 = vadd.f32 %v2752, 1.0
    %v2817 = vadd.f32 %v2753, 1.0
    %v2818 = vadd.f32 %v2754, 1.0
    %v2819 = vadd.f32 %v2755, 1.0
    %v2820 = vadd.f32 %v2756, 1.0
    %v2821 = vadd.f32 %v2757, 1.0
    %v2822 = vadd.f32 %v2758, 1.0
    %v2823 = vadd.f32 %v2759, 1.0
    %v2824 = vadd.f32 %v2760, 1.0
    %v2825 = vadd.f32 %v2761, 1.0
    %v2826 = vadd.f32 %v2762, 1.0
    %v2827 = vmul.f32 %v2315, %v2763
    %v2828 = vmul.f32 %v2316, %v2764
    %v2829 = vmul.f32 %v2317, %v2765
    %v2830 = vmul.f32 %v2318, %v2766
    %v2831 = vmul.f32 %v2319, %v2767
    %v2832 = vmul.f32 %v2320, %v2768
    %v2833 = vmul.f32 %v2321, %v2769
    %v2834 = vmul.f32 %v2322, %v2770
    %v2835 = vmul.f32 %v2323, %v2771
    %v2836 = vmul.f32 %v2324, %v2772
    %v2837 = vmul.f32 %v2325, %v2773
    %v2838 = vmul.f32 %v2326, %v2774
    %v2839 = vmul.f32 %v2327, %v2775
    %v2840 = vmul.f32 %v2328, %v2776
    %v2841 = vmul.f32 %v2329, %v2777
    %v2842 = vmul.f32 %v2330, %v2778
    %v2843 = vmul.f32 %v2331, %v2779
    %v2844 = vmul.f32 %v2332, %v2780
    %v2845 = vmul.f32 %v2333, %v2781
    %v2846 = vmul.f32 %v2334, %v2782
    %v2847 = vmul.f32 %v2335, %v2783
    %v2848 = vmul.f32 %v2336, %v2784
    %v2849 = vmul.f32 %v2337, %v2785
    %v2850 = vmul.f32 %v2338, %v2786
    %v2851 = vmul.f32 %v2339, %v2787
    %v2852 = vmul.f32 %v2340, %v2788
    %v2853 = vmul.f32 %v2341, %v2789
    %v2854 = vmul.f32 %v2342, %v2790
    %v2855 = vmul.f32 %v2343, %v2791
    %v2856 = vmul.f32 %v2344, %v2792
    %v2857 = vmul.f32 %v2345, %v2793
    %v2858 = vmul.f32 %v2346, %v2794
    %v2859 = vmul.f32 %v2347, %v2795
    %v2860 = vmul.f32 %v2348, %v2796
    %v2861 = vmul.f32 %v2349, %v2797
    %v2862 = vmul.f32 %v2350, %v2798
    %v2863 = vmul.f32 %v2351, %v2799
    %v2864 = vmul.f32 %v2352, %v2800
    %v2865 = vmul.f32 %v2353, %v2801
    %v2866 = vmul.f32 %v2354, %v2802
    %v2867 = vmul.f32 %v2355, %v2803
    %v2868 = vmul.f32 %v2356, %v2804
    %v2869 = vmul.f32 %v2357, %v2805
    %v2870 = vmul.f32 %v2358, %v2806
    %v2871 = vmul.f32 %v2359, %v2807
    %v2872 = vmul.f32 %v2360, %v2808
    %v2873 = vmul.f32 %v2361, %v2809
    %v2874 = vmul.f32 %v2362, %v2810
    %v2875 = vmul.f32 %v2363, %v2811
    %v2876 = vmul.f32 %v2364, %v2812
    %v2877 = vmul.f32 %v2365, %v2813
    %v2878 = vmul.f32 %v2366, %v2814
    %v2879 = vmul.f32 %v2367, %v2815
    %v2880 = vmul.f32 %v2368, %v2816
    %v2881 = vmul.f32 %v2369, %v2817
    %v2882 = vmul.f32 %v2370, %v2818
    %v2883 = vmul.f32 %v2371, %v2819
    %v2884 = vmul.f32 %v2372, %v2820
    %v2885 = vmul.f32 %v2373, %v2821
    %v2886 = vmul.f32 %v2374, %v2822
    %v2887 = vmul.f32 %v2375, %v2823
    %v2888 = vmul.f32 %v2376, %v2824
    %v2889 = vmul.f32 %v2377, %v2825
    %v2890 = vmul.f32 %v2378, %v2826
    %v2891 = vpack.c.bf16 %v2828, %v2827
    %v2892 = vpack.c.bf16 %v2830, %v2829
    %v2893 = vpack.c.bf16 %v2832, %v2831
    %v2894 = vpack.c.bf16 %v2834, %v2833
    %v2895 = vpack.c.bf16 %v2836, %v2835
    %v2896 = vpack.c.bf16 %v2838, %v2837
    %v2897 = vpack.c.bf16 %v2840, %v2839
    %v2898 = vpack.c.bf16 %v2842, %v2841
    %v2899 = vpack.c.bf16 %v2844, %v2843
    %v2900 = vpack.c.bf16 %v2846, %v2845
    %v2901 = vpack.c.bf16 %v2848, %v2847
    %v2902 = vpack.c.bf16 %v2850, %v2849
    %v2903 = vpack.c.bf16 %v2852, %v2851
    %v2904 = vpack.c.bf16 %v2854, %v2853
    %v2905 = vpack.c.bf16 %v2856, %v2855
    %v2906 = vpack.c.bf16 %v2858, %v2857
    %v2907 = vpack.c.bf16 %v2860, %v2859
    %v2908 = vpack.c.bf16 %v2862, %v2861
    %v2909 = vpack.c.bf16 %v2864, %v2863
    %v2910 = vpack.c.bf16 %v2866, %v2865
    %v2911 = vpack.c.bf16 %v2868, %v2867
    %v2912 = vpack.c.bf16 %v2870, %v2869
    %v2913 = vpack.c.bf16 %v2872, %v2871
    %v2914 = vpack.c.bf16 %v2874, %v2873
    %v2915 = vpack.c.bf16 %v2876, %v2875
    %v2916 = vpack.c.bf16 %v2878, %v2877
    %v2917 = vpack.c.bf16 %v2880, %v2879
    %v2918 = vpack.c.bf16 %v2882, %v2881
    %v2919 = vpack.c.bf16 %v2884, %v2883
    %v2920 = vpack.c.bf16 %v2886, %v2885
    %v2921 = vpack.c.bf16 %v2888, %v2887
    %v2922 = vpack.c.bf16 %v2890, %v2889
    %v2923 = vld [vmem:[#allocation8] sm:$0xf]
    %v2924 = vld [vmem:[#allocation8 + $0x4] sm:$0xf]
    %v2925 = vld [vmem:[#allocation8 + $0x8] sm:$0xf]
    %v2926 = vld [vmem:[#allocation8 + $0xc] sm:$0xf]
    %v2927 = vld [vmem:[#allocation8 + $0x10] sm:$0xf]
    %v2928 = vld [vmem:[#allocation8 + $0x14] sm:$0xf]
    %v2929 = vld [vmem:[#allocation8 + $0x18] sm:$0xf]
    %v2930 = vld [vmem:[#allocation8 + $0x1c] sm:$0xf]
    %v2931 = vld [vmem:[#allocation8 + $0x20] sm:$0xf]
    %v2932 = vld [vmem:[#allocation8 + $0x24] sm:$0xf]
    %v2933 = vld [vmem:[#allocation8 + $0x28] sm:$0xf]
    %v2934 = vld [vmem:[#allocation8 + $0x2c] sm:$0xf]
    %v2935 = vld [vmem:[#allocation8 + $0x30] sm:$0xf]
    %v2936 = vld [vmem:[#allocation8 + $0x34] sm:$0xf]
    %v2937 = vld [vmem:[#allocation8 + $0x38] sm:$0xf]
    %v2938 = vld [vmem:[#allocation8 + $0x3c] sm:$0xf]
    %v2939 = vld [vmem:[%s6] sm:$0x1]
    %v2941 = vlaneseq
    %v2942 = vshrl.u32 %v2941, 7
    %v2943 = vsub.s32 0, %v2942
    %v2944 = vrot.slane %v2939, %v2943
    %v2962 = vunpack.c.l.b16 %v2923
    %v2963 = vunpack.c.l.b16 %v2924
    %v2964 = vunpack.c.l.b16 %v2925
    %v2965 = vunpack.c.l.b16 %v2926
    %v2966 = vunpack.c.l.b16 %v2927
    %v2967 = vunpack.c.l.b16 %v2928
    %v2968 = vunpack.c.l.b16 %v2929
    %v2969 = vunpack.c.l.b16 %v2930
    %v2970 = vunpack.c.l.b16 %v2931
    %v2971 = vunpack.c.l.b16 %v2932
    %v2972 = vunpack.c.l.b16 %v2933
    %v2973 = vunpack.c.l.b16 %v2934
    %v2974 = vunpack.c.l.b16 %v2935
    %v2975 = vunpack.c.l.b16 %v2936
    %v2976 = vunpack.c.l.b16 %v2937
    %v2977 = vunpack.c.l.b16 %v2938
    %v2978 = vpack.c.b16 %v2963, %v2962
    %v2979 = vpack.c.b16 %v2965, %v2964
    %v2980 = vpack.c.b16 %v2967, %v2966
    %v2981 = vpack.c.b16 %v2969, %v2968
    %v2982 = vpack.c.b16 %v2971, %v2970
    %v2983 = vpack.c.b16 %v2973, %v2972
    %v2984 = vpack.c.b16 %v2975, %v2974
    %v2985 = vpack.c.b16 %v2977, %v2976
    %2994 = vmatprep.subr.bf16.mxu0 0
    %2995 = vmatpush1.bf16.msra.mxu0 %v2985
    %2996 = vmatprep.subr.bf16.mxu0 0
    %2997 = vmatpush1.bf16.msra.mxu0 %v2984
    %2998 = vmatprep.subr.bf16.mxu0 0
    %2999 = vmatpush1.bf16.msra.mxu0 %v2983
    %3000 = vmatprep.subr.bf16.mxu0 0
    %3001 = vmatpush1.bf16.msra.mxu0 %v2982
    %3002 = vmatprep.subr.bf16.mxu0 0
    %3003 = vmatpush1.bf16.msra.mxu0 %v2981
    %3004 = vmatprep.subr.bf16.mxu0 0
    %3005 = vmatpush1.bf16.msra.mxu0 %v2980
    %3006 = vmatprep.subr.bf16.mxu0 0
    %3007 = vmatpush1.bf16.msra.mxu0 %v2979
    %3008 = vmatprep.subr.bf16.mxu0 0
    %3009 = vmatpush1.bf16.msra.mxu0 %v2978
    %3010 = vmatprep.subr.bf16.mxu0 0
    %3011 = vmatpush2.bf16.msra.mxu0 0
    %3012 = vmatprep.subr.bf16.mxu0 0
    %3013 = vmatpush2.bf16.msra.mxu0 0
    %3014 = vmatprep.subr.bf16.mxu0 0
    %3015 = vmatpush2.bf16.msra.mxu0 0
    %3016 = vmatprep.subr.bf16.mxu0 0
    %3017 = vmatpush2.bf16.msra.mxu0 0
    %3018 = vmatprep.subr.bf16.mxu0 0
    %3019 = vmatpush2.bf16.msra.mxu0 0
    %3020 = vmatprep.subr.bf16.mxu0 0
    %3021 = vmatpush2.bf16.msra.mxu0 0
    %3022 = vmatprep.subr.bf16.mxu0 0
    %3023 = vmatpush2.bf16.msra.mxu0 0
    %3024 = vmatprep.subr.bf16.mxu0 0
    %3025 = vmatpush2.bf16.msra.mxu0 0
    %3026 = vmatprep.mubr.bf16.mxu0 0
    %3027 = vmatmul.mubr.bf16.gmra.mxu0 %v2891
    %v3028 = vpop.f32.mrf.mxu0
    %v3029 = vadd.f32 %v2944, %v3028
    %v3030 = vpop.f32.mrf.mxu0
    %v3031 = vpop.f32.mrf.mxu0
    %v3032 = vadd.f32 %v2944, %v3031
    %v3033 = vpop.f32.mrf.mxu0
    %3034 = vmatprep.mubr.bf16.mxu0 0
    %3035 = vmatmul.mubr.bf16.gmra.mxu0 %v2892
    %v3036 = vpop.f32.mrf.mxu0
    %v3037 = vadd.f32 %v2944, %v3036
    %v3038 = vpop.f32.mrf.mxu0
    %v3039 = vpop.f32.mrf.mxu0
    %v3040 = vadd.f32 %v2944, %v3039
    %v3041 = vpop.f32.mrf.mxu0
    %3042 = vmatprep.mubr.bf16.mxu0 0
    %3043 = vmatmul.mubr.bf16.gmra.mxu0 %v2893
    %v3044 = vpop.f32.mrf.mxu0
    %v3045 = vadd.f32 %v2944, %v3044
    %v3046 = vpop.f32.mrf.mxu0
    %v3047 = vpop.f32.mrf.mxu0
    %v3048 = vadd.f32 %v2944, %v3047
    %v3049 = vpop.f32.mrf.mxu0
    %3050 = vmatprep.mubr.bf16.mxu0 0
    %3051 = vmatmul.mubr.bf16.gmra.mxu0 %v2894
    %v3052 = vpop.f32.mrf.mxu0
    %v3053 = vadd.f32 %v2944, %v3052
    %v3054 = vpop.f32.mrf.mxu0
    %v3055 = vpop.f32.mrf.mxu0
    %v3056 = vadd.f32 %v2944, %v3055
    %v3057 = vpop.f32.mrf.mxu0
    %3058 = vmatprep.mubr.bf16.mxu0 0
    %3059 = vmatmul.mubr.bf16.gmra.mxu0 %v2895
    %v3060 = vpop.f32.mrf.mxu0
    %v3061 = vadd.f32 %v2944, %v3060
    %v3062 = vpop.f32.mrf.mxu0
    %v3063 = vpop.f32.mrf.mxu0
    %v3064 = vadd.f32 %v2944, %v3063
    %v3065 = vpop.f32.mrf.mxu0
    %3066 = vmatprep.mubr.bf16.mxu0 0
    %3067 = vmatmul.mubr.bf16.gmra.mxu0 %v2896
    %v3068 = vpop.f32.mrf.mxu0
    %v3069 = vadd.f32 %v2944, %v3068
    %v3070 = vpop.f32.mrf.mxu0
    %v3071 = vpop.f32.mrf.mxu0
    %v3072 = vadd.f32 %v2944, %v3071
    %v3073 = vpop.f32.mrf.mxu0
    %3074 = vmatprep.mubr.bf16.mxu0 0
    %3075 = vmatmul.mubr.bf16.gmra.mxu0 %v2897
    %v3076 = vpop.f32.mrf.mxu0
    %v3077 = vadd.f32 %v2944, %v3076
    %v3078 = vpop.f32.mrf.mxu0
    %v3079 = vpop.f32.mrf.mxu0
    %v3080 = vadd.f32 %v2944, %v3079
    %v3081 = vpop.f32.mrf.mxu0
    %3082 = vmatprep.mubr.bf16.mxu0 0
    %3083 = vmatmul.mubr.bf16.gmra.mxu0 %v2898
    %v3084 = vpop.f32.mrf.mxu0
    %v3085 = vadd.f32 %v2944, %v3084
    %v3086 = vpop.f32.mrf.mxu0
    %v3087 = vpop.f32.mrf.mxu0
    %v3088 = vadd.f32 %v2944, %v3087
    %v3089 = vpop.f32.mrf.mxu0
    %3090 = vmatprep.mubr.bf16.mxu0 0
    %3091 = vmatmul.mubr.bf16.gmra.mxu0 %v2899
    %v3092 = vpop.f32.mrf.mxu0
    %v3093 = vadd.f32 %v2944, %v3092
    %v3094 = vpop.f32.mrf.mxu0
    %v3095 = vpop.f32.mrf.mxu0
    %v3096 = vadd.f32 %v2944, %v3095
    %v3097 = vpop.f32.mrf.mxu0
    %3098 = vmatprep.mubr.bf16.mxu0 0
    %3099 = vmatmul.mubr.bf16.gmra.mxu0 %v2900
    %v3100 = vpop.f32.mrf.mxu0
    %v3101 = vadd.f32 %v2944, %v3100
    %v3102 = vpop.f32.mrf.mxu0
    %v3103 = vpop.f32.mrf.mxu0
    %v3104 = vadd.f32 %v2944, %v3103
    %v3105 = vpop.f32.mrf.mxu0
    %3106 = vmatprep.mubr.bf16.mxu0 0
    %3107 = vmatmul.mubr.bf16.gmra.mxu0 %v2901
    %v3108 = vpop.f32.mrf.mxu0
    %v3109 = vadd.f32 %v2944, %v3108
    %v3110 = vpop.f32.mrf.mxu0
    %v3111 = vpop.f32.mrf.mxu0
    %v3112 = vadd.f32 %v2944, %v3111
    %v3113 = vpop.f32.mrf.mxu0
    %3114 = vmatprep.mubr.bf16.mxu0 0
    %3115 = vmatmul.mubr.bf16.gmra.mxu0 %v2902
    %v3116 = vpop.f32.mrf.mxu0
    %v3117 = vadd.f32 %v2944, %v3116
    %v3118 = vpop.f32.mrf.mxu0
    %v3119 = vpop.f32.mrf.mxu0
    %v3120 = vadd.f32 %v2944, %v3119
    %v3121 = vpop.f32.mrf.mxu0
    %3122 = vmatprep.mubr.bf16.mxu0 0
    %3123 = vmatmul.mubr.bf16.gmra.mxu0 %v2903
    %v3124 = vpop.f32.mrf.mxu0
    %v3125 = vadd.f32 %v2944, %v3124
    %v3126 = vpop.f32.mrf.mxu0
    %v3127 = vpop.f32.mrf.mxu0
    %v3128 = vadd.f32 %v2944, %v3127
    %v3129 = vpop.f32.mrf.mxu0
    %3130 = vmatprep.mubr.bf16.mxu0 0
    %3131 = vmatmul.mubr.bf16.gmra.mxu0 %v2904
    %v3132 = vpop.f32.mrf.mxu0
    %v3133 = vadd.f32 %v2944, %v3132
    %v3134 = vpop.f32.mrf.mxu0
    %v3135 = vpop.f32.mrf.mxu0
    %v3136 = vadd.f32 %v2944, %v3135
    %v3137 = vpop.f32.mrf.mxu0
    %3138 = vmatprep.mubr.bf16.mxu0 0
    %3139 = vmatmul.mubr.bf16.gmra.mxu0 %v2905
    %v3140 = vpop.f32.mrf.mxu0
    %v3141 = vadd.f32 %v2944, %v3140
    %v3142 = vpop.f32.mrf.mxu0
    %v3143 = vpop.f32.mrf.mxu0
    %v3144 = vadd.f32 %v2944, %v3143
    %v3145 = vpop.f32.mrf.mxu0
    %3146 = vmatprep.mubr.bf16.mxu0 0
    %3147 = vmatmul.mubr.bf16.gmra.mxu0 %v2906
    %v3148 = vpop.f32.mrf.mxu0
    %v3149 = vadd.f32 %v2944, %v3148
    %v3150 = vpop.f32.mrf.mxu0
    %v3151 = vpop.f32.mrf.mxu0
    %v3152 = vadd.f32 %v2944, %v3151
    %v3153 = vpop.f32.mrf.mxu0
    %3154 = vmatprep.mubr.bf16.mxu0 0
    %3155 = vmatmul.mubr.bf16.gmra.mxu0 %v2907
    %v3156 = vpop.f32.mrf.mxu0
    %v3157 = vadd.f32 %v2944, %v3156
    %v3158 = vpop.f32.mrf.mxu0
    %v3159 = vpop.f32.mrf.mxu0
    %v3160 = vadd.f32 %v2944, %v3159
    %v3161 = vpop.f32.mrf.mxu0
    %3162 = vmatprep.mubr.bf16.mxu0 0
    %3163 = vmatmul.mubr.bf16.gmra.mxu0 %v2908
    %v3164 = vpop.f32.mrf.mxu0
    %v3165 = vadd.f32 %v2944, %v3164
    %v3166 = vpop.f32.mrf.mxu0
    %v3167 = vpop.f32.mrf.mxu0
    %v3168 = vadd.f32 %v2944, %v3167
    %v3169 = vpop.f32.mrf.mxu0
    %3170 = vmatprep.mubr.bf16.mxu0 0
    %3171 = vmatmul.mubr.bf16.gmra.mxu0 %v2909
    %v3172 = vpop.f32.mrf.mxu0
    %v3173 = vadd.f32 %v2944, %v3172
    %v3174 = vpop.f32.mrf.mxu0
    %v3175 = vpop.f32.mrf.mxu0
    %v3176 = vadd.f32 %v2944, %v3175
    %v3177 = vpop.f32.mrf.mxu0
    %3178 = vmatprep.mubr.bf16.mxu0 0
    %3179 = vmatmul.mubr.bf16.gmra.mxu0 %v2910
    %v3180 = vpop.f32.mrf.mxu0
    %v3181 = vadd.f32 %v2944, %v3180
    %v3182 = vpop.f32.mrf.mxu0
    %v3183 = vpop.f32.mrf.mxu0
    %v3184 = vadd.f32 %v2944, %v3183
    %v3185 = vpop.f32.mrf.mxu0
    %3186 = vmatprep.mubr.bf16.mxu0 0
    %3187 = vmatmul.mubr.bf16.gmra.mxu0 %v2911
    %v3188 = vpop.f32.mrf.mxu0
    %v3189 = vadd.f32 %v2944, %v3188
    %v3190 = vpop.f32.mrf.mxu0
    %v3191 = vpop.f32.mrf.mxu0
    %v3192 = vadd.f32 %v2944, %v3191
    %v3193 = vpop.f32.mrf.mxu0
    %3194 = vmatprep.mubr.bf16.mxu0 0
    %3195 = vmatmul.mubr.bf16.gmra.mxu0 %v2912
    %v3196 = vpop.f32.mrf.mxu0
    %v3197 = vadd.f32 %v2944, %v3196
    %v3198 = vpop.f32.mrf.mxu0
    %v3199 = vpop.f32.mrf.mxu0
    %v3200 = vadd.f32 %v2944, %v3199
    %v3201 = vpop.f32.mrf.mxu0
    %3202 = vmatprep.mubr.bf16.mxu0 0
    %3203 = vmatmul.mubr.bf16.gmra.mxu0 %v2913
    %v3204 = vpop.f32.mrf.mxu0
    %v3205 = vadd.f32 %v2944, %v3204
    %v3206 = vpop.f32.mrf.mxu0
    %v3207 = vpop.f32.mrf.mxu0
    %v3208 = vadd.f32 %v2944, %v3207
    %v3209 = vpop.f32.mrf.mxu0
    %3210 = vmatprep.mubr.bf16.mxu0 0
    %3211 = vmatmul.mubr.bf16.gmra.mxu0 %v2914
    %v3212 = vpop.f32.mrf.mxu0
    %v3213 = vadd.f32 %v2944, %v3212
    %v3214 = vpop.f32.mrf.mxu0
    %v3215 = vpop.f32.mrf.mxu0
    %v3216 = vadd.f32 %v2944, %v3215
    %v3217 = vpop.f32.mrf.mxu0
    %3218 = vmatprep.mubr.bf16.mxu0 0
    %3219 = vmatmul.mubr.bf16.gmra.mxu0 %v2915
    %v3220 = vpop.f32.mrf.mxu0
    %v3221 = vadd.f32 %v2944, %v3220
    %v3222 = vpop.f32.mrf.mxu0
    %v3223 = vpop.f32.mrf.mxu0
    %v3224 = vadd.f32 %v2944, %v3223
    %v3225 = vpop.f32.mrf.mxu0
    %3226 = vmatprep.mubr.bf16.mxu0 0
    %3227 = vmatmul.mubr.bf16.gmra.mxu0 %v2916
    %v3228 = vpop.f32.mrf.mxu0
    %v3229 = vadd.f32 %v2944, %v3228
    %v3230 = vpop.f32.mrf.mxu0
    %v3231 = vpop.f32.mrf.mxu0
    %v3232 = vadd.f32 %v2944, %v3231
    %v3233 = vpop.f32.mrf.mxu0
    %3234 = vmatprep.mubr.bf16.mxu0 0
    %3235 = vmatmul.mubr.bf16.gmra.mxu0 %v2917
    %v3236 = vpop.f32.mrf.mxu0
    %v3237 = vadd.f32 %v2944, %v3236
    %v3238 = vpop.f32.mrf.mxu0
    %v3239 = vpop.f32.mrf.mxu0
    %v3240 = vadd.f32 %v2944, %v3239
    %v3241 = vpop.f32.mrf.mxu0
    %3242 = vmatprep.mubr.bf16.mxu0 0
    %3243 = vmatmul.mubr.bf16.gmra.mxu0 %v2918
    %v3244 = vpop.f32.mrf.mxu0
    %v3245 = vadd.f32 %v2944, %v3244
    %v3246 = vpop.f32.mrf.mxu0
    %v3247 = vpop.f32.mrf.mxu0
    %v3248 = vadd.f32 %v2944, %v3247
    %v3249 = vpop.f32.mrf.mxu0
    %3250 = vmatprep.mubr.bf16.mxu0 0
    %3251 = vmatmul.mubr.bf16.gmra.mxu0 %v2919
    %v3252 = vpop.f32.mrf.mxu0
    %v3253 = vadd.f32 %v2944, %v3252
    %v3254 = vpop.f32.mrf.mxu0
    %v3255 = vpop.f32.mrf.mxu0
    %v3256 = vadd.f32 %v2944, %v3255
    %v3257 = vpop.f32.mrf.mxu0
    %3258 = vmatprep.mubr.bf16.mxu0 0
    %3259 = vmatmul.mubr.bf16.gmra.mxu0 %v2920
    %v3260 = vpop.f32.mrf.mxu0
    %v3261 = vadd.f32 %v2944, %v3260
    %v3262 = vpop.f32.mrf.mxu0
    %v3263 = vpop.f32.mrf.mxu0
    %v3264 = vadd.f32 %v2944, %v3263
    %v3265 = vpop.f32.mrf.mxu0
    %3266 = vmatprep.mubr.bf16.mxu0 0
    %3267 = vmatmul.mubr.bf16.gmra.mxu0 %v2921
    %v3268 = vpop.f32.mrf.mxu0
    %v3269 = vadd.f32 %v2944, %v3268
    %v3270 = vpop.f32.mrf.mxu0
    %v3271 = vpop.f32.mrf.mxu0
    %v3272 = vadd.f32 %v2944, %v3271
    %v3273 = vpop.f32.mrf.mxu0
    %3274 = vmatprep.mubr.bf16.mxu0 0
    %3275 = vmatmul.mubr.bf16.gmra.mxu0 %v2922
    %v3276 = vpop.f32.mrf.mxu0
    %v3277 = vadd.f32 %v2944, %v3276
    %v3278 = vpop.f32.mrf.mxu0
    %v3279 = vpop.f32.mrf.mxu0
    %v3280 = vadd.f32 %v2944, %v3279
    %v3281 = vpop.f32.mrf.mxu0
    %3282 = vdwg.mxu0
    %v3283 = vpack.c.bf16 %v3032, %v3029
    %v3284 = vpack.c.bf16 %v3040, %v3037
    %v3285 = vpack.c.bf16 %v3048, %v3045
    %v3286 = vpack.c.bf16 %v3056, %v3053
    %v3287 = vpack.c.bf16 %v3064, %v3061
    %v3288 = vpack.c.bf16 %v3072, %v3069
    %v3289 = vpack.c.bf16 %v3080, %v3077
    %v3290 = vpack.c.bf16 %v3088, %v3085
    %v3291 = vpack.c.bf16 %v3096, %v3093
    %v3292 = vpack.c.bf16 %v3104, %v3101
    %v3293 = vpack.c.bf16 %v3112, %v3109
    %v3294 = vpack.c.bf16 %v3120, %v3117
    %v3295 = vpack.c.bf16 %v3128, %v3125
    %v3296 = vpack.c.bf16 %v3136, %v3133
    %v3297 = vpack.c.bf16 %v3144, %v3141
    %v3298 = vpack.c.bf16 %v3152, %v3149
    %v3299 = vpack.c.bf16 %v3160, %v3157
    %v3300 = vpack.c.bf16 %v3168, %v3165
    %v3301 = vpack.c.bf16 %v3176, %v3173
    %v3302 = vpack.c.bf16 %v3184, %v3181
    %v3303 = vpack.c.bf16 %v3192, %v3189
    %v3304 = vpack.c.bf16 %v3200, %v3197
    %v3305 = vpack.c.bf16 %v3208, %v3205
    %v3306 = vpack.c.bf16 %v3216, %v3213
    %v3307 = vpack.c.bf16 %v3224, %v3221
    %v3308 = vpack.c.bf16 %v3232, %v3229
    %v3309 = vpack.c.bf16 %v3240, %v3237
    %v3310 = vpack.c.bf16 %v3248, %v3245
    %v3311 = vpack.c.bf16 %v3256, %v3253
    %v3312 = vpack.c.bf16 %v3264, %v3261
    %v3313 = vpack.c.bf16 %v3272, %v3269
    %v3314 = vpack.c.bf16 %v3280, %v3277
    %v3347 = vunpack.c.l.b16 %v3283
    %v3348 = vunpack.c.h.b16 %v3283
    %v3349 = vunpack.c.l.b16 %v3284
    %v3350 = vunpack.c.h.b16 %v3284
    %v3351 = vunpack.c.l.b16 %v3285
    %v3352 = vunpack.c.h.b16 %v3285
    %v3353 = vunpack.c.l.b16 %v3286
    %v3354 = vunpack.c.h.b16 %v3286
    %v3355 = vunpack.c.l.b16 %v3287
    %v3356 = vunpack.c.h.b16 %v3287
    %v3357 = vunpack.c.l.b16 %v3288
    %v3358 = vunpack.c.h.b16 %v3288
    %v3359 = vunpack.c.l.b16 %v3289
    %v3360 = vunpack.c.h.b16 %v3289
    %v3361 = vunpack.c.l.b16 %v3290
    %v3362 = vunpack.c.h.b16 %v3290
    %v3363 = vunpack.c.l.b16 %v3291
    %v3364 = vunpack.c.h.b16 %v3291
    %v3365 = vunpack.c.l.b16 %v3292
    %v3366 = vunpack.c.h.b16 %v3292
    %v3367 = vunpack.c.l.b16 %v3293
    %v3368 = vunpack.c.h.b16 %v3293
    %v3369 = vunpack.c.l.b16 %v3294
    %v3370 = vunpack.c.h.b16 %v3294
    %v3371 = vunpack.c.l.b16 %v3295
    %v3372 = vunpack.c.h.b16 %v3295
    %v3373 = vunpack.c.l.b16 %v3296
    %v3374 = vunpack.c.h.b16 %v3296
    %v3375 = vunpack.c.l.b16 %v3297
    %v3376 = vunpack.c.h.b16 %v3297
    %v3377 = vunpack.c.l.b16 %v3298
    %v3378 = vunpack.c.h.b16 %v3298
    %v3379 = vunpack.c.l.b16 %v3299
    %v3380 = vunpack.c.h.b16 %v3299
    %v3381 = vunpack.c.l.b16 %v3300
    %v3382 = vunpack.c.h.b16 %v3300
    %v3383 = vunpack.c.l.b16 %v3301
    %v3384 = vunpack.c.h.b16 %v3301
    %v3385 = vunpack.c.l.b16 %v3302
    %v3386 = vunpack.c.h.b16 %v3302
    %v3387 = vunpack.c.l.b16 %v3303
    %v3388 = vunpack.c.h.b16 %v3303
    %v3389 = vunpack.c.l.b16 %v3304
    %v3390 = vunpack.c.h.b16 %v3304
    %v3391 = vunpack.c.l.b16 %v3305
    %v3392 = vunpack.c.h.b16 %v3305
    %v3393 = vunpack.c.l.b16 %v3306
    %v3394 = vunpack.c.h.b16 %v3306
    %v3395 = vunpack.c.l.b16 %v3307
    %v3396 = vunpack.c.h.b16 %v3307
    %v3397 = vunpack.c.l.b16 %v3308
    %v3398 = vunpack.c.h.b16 %v3308
    %v3399 = vunpack.c.l.b16 %v3309
    %v3400 = vunpack.c.h.b16 %v3309
    %v3401 = vunpack.c.l.b16 %v3310
    %v3402 = vunpack.c.h.b16 %v3310
    %v3403 = vunpack.c.l.b16 %v3311
    %v3404 = vunpack.c.h.b16 %v3311
    %v3405 = vunpack.c.l.b16 %v3312
    %v3406 = vunpack.c.h.b16 %v3312
    %v3407 = vunpack.c.l.b16 %v3313
    %v3408 = vunpack.c.h.b16 %v3313
    %v3409 = vunpack.c.l.b16 %v3314
    %v3410 = vunpack.c.h.b16 %v3314
    %v3411 = vpack.c.b16 %v3347, %v3347
    %v3412 = vpack.c.b16 %v3348, %v3348
    %v3413 = vpack.c.b16 %v3349, %v3349
    %v3414 = vpack.c.b16 %v3350, %v3350
    %v3415 = vpack.c.b16 %v3351, %v3351
    %v3416 = vpack.c.b16 %v3352, %v3352
    %v3417 = vpack.c.b16 %v3353, %v3353
    %v3418 = vpack.c.b16 %v3354, %v3354
    %v3419 = vpack.c.b16 %v3355, %v3355
    %v3420 = vpack.c.b16 %v3356, %v3356
    %v3421 = vpack.c.b16 %v3357, %v3357
    %v3422 = vpack.c.b16 %v3358, %v3358
    %v3423 = vpack.c.b16 %v3359, %v3359
    %v3424 = vpack.c.b16 %v3360, %v3360
    %v3425 = vpack.c.b16 %v3361, %v3361
    %v3426 = vpack.c.b16 %v3362, %v3362
    %v3427 = vpack.c.b16 %v3363, %v3363
    %v3428 = vpack.c.b16 %v3364, %v3364
    %v3429 = vpack.c.b16 %v3365, %v3365
    %v3430 = vpack.c.b16 %v3366, %v3366
    %v3431 = vpack.c.b16 %v3367, %v3367
    %v3432 = vpack.c.b16 %v3368, %v3368
    %v3433 = vpack.c.b16 %v3369, %v3369
    %v3434 = vpack.c.b16 %v3370, %v3370
    %v3435 = vpack.c.b16 %v3371, %v3371
    %v3436 = vpack.c.b16 %v3372, %v3372
    %v3437 = vpack.c.b16 %v3373, %v3373
    %v3438 = vpack.c.b16 %v3374, %v3374
    %v3439 = vpack.c.b16 %v3375, %v3375
    %v3440 = vpack.c.b16 %v3376, %v3376
    %v3441 = vpack.c.b16 %v3377, %v3377
    %v3442 = vpack.c.b16 %v3378, %v3378
    %v3443 = vpack.c.b16 %v3379, %v3379
    %v3444 = vpack.c.b16 %v3380, %v3380
    %v3445 = vpack.c.b16 %v3381, %v3381
    %v3446 = vpack.c.b16 %v3382, %v3382
    %v3447 = vpack.c.b16 %v3383, %v3383
    %v3448 = vpack.c.b16 %v3384, %v3384
    %v3449 = vpack.c.b16 %v3385, %v3385
    %v3450 = vpack.c.b16 %v3386, %v3386
    %v3451 = vpack.c.b16 %v3387, %v3387
    %v3452 = vpack.c.b16 %v3388, %v3388
    %v3453 = vpack.c.b16 %v3389, %v3389
    %v3454 = vpack.c.b16 %v3390, %v3390
    %v3455 = vpack.c.b16 %v3391, %v3391
    %v3456 = vpack.c.b16 %v3392, %v3392
    %v3457 = vpack.c.b16 %v3393, %v3393
    %v3458 = vpack.c.b16 %v3394, %v3394
    %v3459 = vpack.c.b16 %v3395, %v3395
    %v3460 = vpack.c.b16 %v3396, %v3396
    %v3461 = vpack.c.b16 %v3397, %v3397
    %v3462 = vpack.c.b16 %v3398, %v3398
    %v3463 = vpack.c.b16 %v3399, %v3399
    %v3464 = vpack.c.b16 %v3400, %v3400
    %v3465 = vpack.c.b16 %v3401, %v3401
    %v3466 = vpack.c.b16 %v3402, %v3402
    %v3467 = vpack.c.b16 %v3403, %v3403
    %v3468 = vpack.c.b16 %v3404, %v3404
    %v3469 = vpack.c.b16 %v3405, %v3405
    %v3470 = vpack.c.b16 %v3406, %v3406
    %v3471 = vpack.c.b16 %v3407, %v3407
    %v3472 = vpack.c.b16 %v3408, %v3408
    %v3473 = vpack.c.b16 %v3409, %v3409
    %v3474 = vpack.c.b16 %v3410, %v3410
    %3539 = vst [vmem:[#allocation11] sm:$0xf] %v3411
    %3540 = vst [vmem:[#allocation11 + $0x4] sm:$0xf] %v3412
    %3541 = vst [vmem:[#allocation11 + $0x8] sm:$0xf] %v3413
    %3542 = vst [vmem:[#allocation11 + $0xc] sm:$0xf] %v3414
    %3543 = vst [vmem:[#allocation11 + $0x10] sm:$0xf] %v3415
    %3544 = vst [vmem:[#allocation11 + $0x14] sm:$0xf] %v3416
    %3545 = vst [vmem:[#allocation11 + $0x18] sm:$0xf] %v3417
    %3546 = vst [vmem:[#allocation11 + $0x1c] sm:$0xf] %v3418
    %3547 = vst [vmem:[#allocation11 + $0x20] sm:$0xf] %v3419
    %3548 = vst [vmem:[#allocation11 + $0x24] sm:$0xf] %v3420
    %3549 = vst [vmem:[#allocation11 + $0x28] sm:$0xf] %v3421
    %3550 = vst [vmem:[#allocation11 + $0x2c] sm:$0xf] %v3422
    %3551 = vst [vmem:[#allocation11 + $0x30] sm:$0xf] %v3423
    %3552 = vst [vmem:[#allocation11 + $0x34] sm:$0xf] %v3424
    %3553 = vst [vmem:[#allocation11 + $0x38] sm:$0xf] %v3425
    %3554 = vst [vmem:[#allocation11 + $0x3c] sm:$0xf] %v3426
    %3555 = vst [vmem:[#allocation11 + $0x40] sm:$0xf] %v3427
    %3556 = vst [vmem:[#allocation11 + $0x44] sm:$0xf] %v3428
    %3557 = vst [vmem:[#allocation11 + $0x48] sm:$0xf] %v3429
    %3558 = vst [vmem:[#allocation11 + $0x4c] sm:$0xf] %v3430
    %3559 = vst [vmem:[#allocation11 + $0x50] sm:$0xf] %v3431
    %3560 = vst [vmem:[#allocation11 + $0x54] sm:$0xf] %v3432
    %3561 = vst [vmem:[#allocation11 + $0x58] sm:$0xf] %v3433
    %3562 = vst [vmem:[#allocation11 + $0x5c] sm:$0xf] %v3434
    %3563 = vst [vmem:[#allocation11 + $0x60] sm:$0xf] %v3435
    %3564 = vst [vmem:[#allocation11 + $0x64] sm:$0xf] %v3436
    %3565 = vst [vmem:[#allocation11 + $0x68] sm:$0xf] %v3437
    %3566 = vst [vmem:[#allocation11 + $0x6c] sm:$0xf] %v3438
    %3567 = vst [vmem:[#allocation11 + $0x70] sm:$0xf] %v3439
    %3568 = vst [vmem:[#allocation11 + $0x74] sm:$0xf] %v3440
    %3569 = vst [vmem:[#allocation11 + $0x78] sm:$0xf] %v3441
    %3570 = vst [vmem:[#allocation11 + $0x7c] sm:$0xf] %v3442
    %3571 = vst [vmem:[#allocation11 + $0x80] sm:$0xf] %v3443
    %3572 = vst [vmem:[#allocation11 + $0x84] sm:$0xf] %v3444
    %3573 = vst [vmem:[#allocation11 + $0x88] sm:$0xf] %v3445
    %3574 = vst [vmem:[#allocation11 + $0x8c] sm:$0xf] %v3446
    %3575 = vst [vmem:[#allocation11 + $0x90] sm:$0xf] %v3447
    %3576 = vst [vmem:[#allocation11 + $0x94] sm:$0xf] %v3448
    %3577 = vst [vmem:[#allocation11 + $0x98] sm:$0xf] %v3449
    %3578 = vst [vmem:[#allocation11 + $0x9c] sm:$0xf] %v3450
    %3579 = vst [vmem:[#allocation11 + $0xa0] sm:$0xf] %v3451
    %3580 = vst [vmem:[#allocation11 + $0xa4] sm:$0xf] %v3452
    %3581 = vst [vmem:[#allocation11 + $0xa8] sm:$0xf] %v3453
    %3582 = vst [vmem:[#allocation11 + $0xac] sm:$0xf] %v3454
    %3583 = vst [vmem:[#allocation11 + $0xb0] sm:$0xf] %v3455
    %3584 = vst [vmem:[#allocation11 + $0xb4] sm:$0xf] %v3456
    %3585 = vst [vmem:[#allocation11 + $0xb8] sm:$0xf] %v3457
    %3586 = vst [vmem:[#allocation11 + $0xbc] sm:$0xf] %v3458
    %3587 = vst [vmem:[#allocation11 + $0xc0] sm:$0xf] %v3459
    %3588 = vst [vmem:[#allocation11 + $0xc4] sm:$0xf] %v3460
    %3589 = vst [vmem:[#allocation11 + $0xc8] sm:$0xf] %v3461
    %3590 = vst [vmem:[#allocation11 + $0xcc] sm:$0xf] %v3462
    %3591 = vst [vmem:[#allocation11 + $0xd0] sm:$0xf] %v3463
    %3592 = vst [vmem:[#allocation11 + $0xd4] sm:$0xf] %v3464
    %3593 = vst [vmem:[#allocation11 + $0xd8] sm:$0xf] %v3465
    %3594 = vst [vmem:[#allocation11 + $0xdc] sm:$0xf] %v3466
    %3595 = vst [vmem:[#allocation11 + $0xe0] sm:$0xf] %v3467
    %3596 = vst [vmem:[#allocation11 + $0xe4] sm:$0xf] %v3468
    %3597 = vst [vmem:[#allocation11 + $0xe8] sm:$0xf] %v3469
    %3598 = vst [vmem:[#allocation11 + $0xec] sm:$0xf] %v3470
    %3599 = vst [vmem:[#allocation11 + $0xf0] sm:$0xf] %v3471
    %3600 = vst [vmem:[#allocation11 + $0xf4] sm:$0xf] %v3472
    %3601 = vst [vmem:[#allocation11 + $0xf8] sm:$0xf] %v3473
    %3602 = vst [vmem:[#allocation11 + $0xfc] sm:$0xf] %v3474
    // Predicated region
    $region46: #{tpu_custom_call.1} parent=1 // pred_check
      _
    $region47: #{tpu_custom_call.1} parent=1 // pred_check_branch
      %3604 = sbr.rel (0) target = $region49
    $region48: #{tpu_custom_call.1} parent=1 // pred_region
      %s3606 = ssub.s32 4096, 4096
      %3607 = vsyncadd [#allocation4], %s3606
      %s3608 = sshll.u32 [#allocation10], 4
      %s3609 = int_to_ptr.vmem [resolvable:$true] %s3608
      %3614 = dma.vmem_to_hbm [thread:$0]  %s3609, 4096, %s7, [#allocation4], 64, 64, 4
    $region49: #{tpu_custom_call.1} parent=1 // pred_fallthru
      _
    // Predicated region
    $region50: #{tpu_custom_call.1} parent=1 // pred_check
      _
    $region51: #{tpu_custom_call.1} parent=1 // pred_check_branch
      %3616 = sbr.rel (0) target = $region53
    $region52: #{tpu_custom_call.1} parent=1 // pred_region
      %s3618 = ssub.s32 4096, 4096
      %3619 = vsyncadd [#allocation12], %s3618
      %s3620 = sshll.u32 [#allocation11], 4
      %s3621 = int_to_ptr.vmem [resolvable:$true] %s3620
      %3626 = dma.vmem_to_hbm [thread:$0]  %s3621, 4096, %s8, [#allocation12], 64, 64, 4
    $region53: #{tpu_custom_call.1} parent=1 // pred_fallthru
      _
    // Predicated region
    $region54: #{tpu_custom_call.1} parent=1 // pred_check
      _
    $region55: #{tpu_custom_call.1} parent=1 // pred_check_branch
      %3628 = sbr.rel (0) target = $region57
    $region56: #{tpu_custom_call.1} parent=1 // pred_region
      %3629 = dma.done [#allocation4], 4096
    $region57: #{tpu_custom_call.1} parent=1 // pred_fallthru
      _
    // Predicated region
    $region58: #{tpu_custom_call.1} parent=1 // pred_check
      _
    $region59: #{tpu_custom_call.1} parent=1 // pred_check_branch
      %3631 = sbr.rel (0) target = $region61
    $region60: #{tpu_custom_call.1} parent=1 // pred_region
      %3632 = dma.done [#allocation12], 4096
    $region61: #{tpu_custom_call.1} parent=1 // pred_fallthru
      _
    %3633 = vsyncpa [#allocation3], 1
    %3634 = vsyncpa [#allocation6], 1
    %3635 = vsyncpa [#allocation9], 1
    %3636 = vsyncpa [#allocation4], 1
    %3637 = vsyncpa [#allocation12], 1

</llo_original>
